<compile_context>
chip_gen: v6e
topology: v6e:2x2x1
jax: 0.10.0
libtpu: 0.0.40
codegen_flags: <defaults>
</compile_context>

<pallas_src>
import jax
import jax.numpy as jnp
from jax import lax
from jax.experimental import pallas as pl
from jax.experimental.pallas import tpu as pltpu

BN_EPS = 1e-5
MXU_DTYPE = jnp.bfloat16  # MXU operand dtype (f32 accumulation everywhere)


def make_down_kernel(N, Hh, Wh, Cin, Cmid, Cout):
    """Fused maxpool(2) + [conv3x3 -> BN(train) -> ReLU] x 2 for static shapes."""
    P = N * Hh * Wh

    def build_slab(src, slab_ref, C):
        # src: (N, Hh, Wh, C) f32 value.  slab_ref: (N, Hh, Wh, 9*C) scratch.
        # Tap k = (dy, dx): slab block holds src[h+dy-1, w+dx-1] with zeros
        # outside the image; only the border strips are zero-filled.
        for k in range(9):
            dy, dx = divmod(k, 3)
            lo, hi = k * C, (k + 1) * C
            if dy == 0:
                slab_ref[:, 0:1, :, lo:hi] = jnp.zeros((N, 1, Wh, C), slab_ref.dtype)
            if dy == 2:
                slab_ref[:, Hh - 1:Hh, :, lo:hi] = jnp.zeros((N, 1, Wh, C), slab_ref.dtype)
            if dx == 0:
                slab_ref[:, :, 0:1, lo:hi] = jnp.zeros((N, Hh, 1, C), slab_ref.dtype)
            if dx == 2:
                slab_ref[:, :, Wh - 1:Wh, lo:hi] = jnp.zeros((N, Hh, 1, C), slab_ref.dtype)
            h_lo, h_hi = max(0, 1 - dy), min(Hh, Hh + 1 - dy)
            w_lo, w_hi = max(0, 1 - dx), min(Wh, Wh + 1 - dx)
            slab_ref[:, h_lo:h_hi, w_lo:w_hi, lo:hi] = (
                src[:, h_lo + dy - 1:h_hi + dy - 1,
                    w_lo + dx - 1:w_hi + dx - 1, :].astype(slab_ref.dtype))

    def bn_relu(acc, gamma, beta):
        # Training-mode BatchNorm2d (biased batch variance), single read pass.
        inv_p = 1.0 / float(P)
        s1 = jnp.sum(acc, axis=0, keepdims=True)
        s2 = jnp.sum(acc * acc, axis=0, keepdims=True)
        mean = s1 * inv_p
        var = s2 * inv_p - mean * mean
        scale = gamma * lax.rsqrt(var + BN_EPS)
        shift = beta - mean * scale
        return jnp.maximum(acc * scale + shift, 0.0)

    def conv_bn_relu(src, slab_ref, w_ref, g_ref, b_ref, C):
        build_slab(src, slab_ref, C)
        lhs = slab_ref[...].reshape(P, 9 * C).astype(MXU_DTYPE)
        acc = jnp.dot(lhs, w_ref[...], preferred_element_type=jnp.float32)
        return bn_relu(acc, g_ref[...], b_ref[...])           # (P, Cout) f32

    def kernel(x_ref, w1_ref, g1_ref, b1_ref, w2_ref, g2_ref, b2_ref,
               out_ref, slab1_ref, slab2_ref):
        # ---- MaxPool2d(2): x_ref is (N, Hh, 2, Wh, 2*Cin) -------------------
        a = x_ref[:, :, 0:1, :, :]
        b = x_ref[:, :, 1:2, :, :]
        v = jnp.maximum(a, b).reshape(N, Hh, Wh, 2 * Cin)      # vertical max
        pooled = jnp.maximum(v[..., :Cin], v[..., Cin:])       # horizontal max

        # ---- conv1 -> BN -> ReLU  (single wide-K matmul on the MXU) --------
        h1 = conv_bn_relu(pooled, slab1_ref, w1_ref, g1_ref, b1_ref, Cin)

        # ---- conv2 -> BN -> ReLU (h1 feeds slab2 directly, no round-trip) --
        h2 = conv_bn_relu(h1.reshape(N, Hh, Wh, Cmid), slab2_ref,
                          w2_ref, g2_ref, b2_ref, Cmid)

        out_ref[...] = h2.astype(out_ref.dtype)                # lane-dense store

    return kernel


@jax.jit
def down_forward(x_nchw, w1_oihw, g1, b1, w2_oihw, g2, b2):
    """Down.forward: x (N, Cin, H, W) -> (N, Cout, H/2, W/2)."""
    N, Cin, H, W = x_nchw.shape
    Hh, Wh = H // 2, W // 2
    Cmid = w1_oihw.shape[0]
    Cout = w2_oihw.shape[0]
    P = N * Hh * Wh

    # Layout glue only: NCHW -> NHWC (one transpose), then FREE reshape so the
    # 2x2 pool phases are plain slices inside the kernel.
    xh = jnp.transpose(x_nchw, (0, 2, 3, 1)).astype(jnp.float32)
    xk = xh.reshape(N, Hh, 2, Wh, 2 * Cin)

    # Weights: OIHW -> (ky, kx, Cin, Cout) -> (9*Cin, Cout), bf16 MXU operands.
    w1_k = jnp.transpose(w1_oihw, (2, 3, 1, 0)).reshape(9 * Cin, Cmid).astype(MXU_DTYPE)
    w2_k = jnp.transpose(w2_oihw, (2, 3, 1, 0)).reshape(9 * Cmid, Cout).astype(MXU_DTYPE)
    g1_k = g1.reshape(1, Cmid).astype(jnp.float32)
    b1_k = b1.reshape(1, Cmid).astype(jnp.float32)
    g2_k = g2.reshape(1, Cout).astype(jnp.float32)
    b2_k = b2.reshape(1, Cout).astype(jnp.float32)

    kernel = make_down_kernel(N, Hh, Wh, Cin, Cmid, Cout)
    vmem = pl.BlockSpec(memory_space=pltpu.MemorySpace.VMEM)

    out2d = pl.pallas_call(
        kernel,
        out_shape=jax.ShapeDtypeStruct((P, Cout), jnp.float32),
        in_specs=[vmem] * 7,
        out_specs=vmem,
        scratch_shapes=[
            pltpu.VMEM((N, Hh, Wh, 9 * Cin), jnp.float32),   # im2col slab, conv1
            pltpu.VMEM((N, Hh, Wh, 9 * Cmid), jnp.float32),  # im2col slab, conv2
        ],
        compiler_params=pltpu.CompilerParams(
            vmem_limit_bytes=32 * 1024 * 1024),
    )(xk, w1_k, g1_k, b1_k, w2_k, g2_k, b2_k)

    # (P, Cout) -> (N, Hh, Wh, Cout) -> NCHW (free reshape + one transpose).
    return jnp.transpose(out2d.reshape(N, Hh, Wh, Cout), (0, 3, 1, 2))


def reference_down(x_nchw, w1_oihw, g1, b1, w2_oihw, g2, b2):
    """Pure-JAX (XLA, f32) reference mirroring PyTorch training-mode semantics."""
    p = lax.reduce_window(x_nchw, -jnp.inf, lax.max,
                          (1, 1, 2, 2), (1, 1, 2, 2), "VALID")

    def cbr(h, w, g, b):
        y = lax.conv_general_dilated(
            h, w, window_strides=(1, 1), padding="SAME",
            dimension_numbers=("NCHW", "OIHW", "NCHW"))
        m = jnp.mean(y, axis=(0, 2, 3), keepdims=True)
        v = jnp.mean((y - m) ** 2, axis=(0, 2, 3), keepdims=True)
        yn = (y - m) * lax.rsqrt(v + BN_EPS)
        yn = yn * g.reshape(1, -1, 1, 1) + b.reshape(1, -1, 1, 1)
        return jnp.maximum(yn, 0.0)

    return cbr(cbr(p, w1_oihw, g1, b1), w2_oihw, g2, b2)


if __name__ == "__main__":
    # Down(128, 128): the down3 block of SegmentationNN (Down(128, 256 // 2)).
    # 128 channels keep every lane-axis offset 128-aligned and the VPU / store
    # lanes fully dense; spatial kept small for the demo.
    N, Cin, H, W = 2, 128, 16, 16
    Cmid, Cout = 128, 128

    key = jax.random.PRNGKey(0)
    kx, kw1, kw2, kg1, kb1, kg2, kb2 = jax.random.split(key, 7)

    x = jax.random.normal(kx, (N, Cin, H, W), jnp.float32)

    # Deterministic synthetic parameters (PyTorch shapes: OIHW conv weights).
    w_scale1 = 1.0 / (3.0 * (Cin ** 0.5))
    w_scale2 = 1.0 / (3.0 * (Cmid ** 0.5))
    w1 = jax.random.normal(kw1, (Cmid, Cin, 3, 3), jnp.float32) * w_scale1
    w2 = jax.random.normal(kw2, (Cout, Cmid, 3, 3), jnp.float32) * w_scale2
    g1 = 1.0 + 0.1 * jax.random.normal(kg1, (Cmid,), jnp.float32)
    b1 = 0.1 * jax.random.normal(kb1, (Cmid,), jnp.float32)
    g2 = 1.0 + 0.1 * jax.random.normal(kg2, (Cout,), jnp.float32)
    b2 = 0.1 * jax.random.normal(kb2, (Cout,), jnp.float32)

    out = jax.block_until_ready(down_forward(x, w1, g1, b1, w2, g2, b2))
    ref = jax.block_until_ready(reference_down(x, w1, g1, b1, w2, g2, b2))

    assert out.shape == (N, Cout, H // 2, W // 2), out.shape
    # bf16 MXU operands vs. f32 XLA reference -> slightly loosened tolerance.
    max_err = float(jnp.max(jnp.abs(out - ref)))
    assert jnp.allclose(out, ref, atol=5e-2, rtol=5e-2), max_err

    print("KERNEL_OK")
</pallas_src>

<mosaic_0001>
module attributes {stable_mosaic.version = 11 : i64} {
  func.func @kernel(%arg0: memref<2x8x2x8x256xf32, #tpu.memory_space<vmem>>, %arg1: memref<1152x128xbf16, #tpu.memory_space<vmem>>, %arg2: memref<1x128xf32, #tpu.memory_space<vmem>>, %arg3: memref<1x128xf32, #tpu.memory_space<vmem>>, %arg4: memref<1152x128xbf16, #tpu.memory_space<vmem>>, %arg5: memref<1x128xf32, #tpu.memory_space<vmem>>, %arg6: memref<1x128xf32, #tpu.memory_space<vmem>>, %arg7: memref<128x128xf32, #tpu.memory_space<vmem>>, %arg8: memref<2x8x8x1152xf32, #tpu.memory_space<vmem>>, %arg9: memref<2x8x8x1152xf32, #tpu.memory_space<vmem>>) attributes {dimension_semantics = [], scalar_prefetch = 0 : i64, scratch_operands = 2 : i64, tpu.core_type = #tpu.core_type<tc>} {
    %c0 = arith.constant 0 : index
    %c0_0 = arith.constant 0 : index
    %c0_1 = arith.constant 0 : index
    %c0_2 = arith.constant 0 : index
    %c0_3 = arith.constant 0 : index
    %0 = vector.load %arg0[%c0, %c0_0, %c0_1, %c0_2, %c0_3] : memref<2x8x2x8x256xf32, #tpu.memory_space<vmem>>, vector<2x8x1x8x256xf32>
    %c0_4 = arith.constant 0 : index
    %c0_5 = arith.constant 0 : index
    %c1 = arith.constant 1 : index
    %c0_6 = arith.constant 0 : index
    %c0_7 = arith.constant 0 : index
    %1 = vector.load %arg0[%c0_4, %c0_5, %c1, %c0_6, %c0_7] : memref<2x8x2x8x256xf32, #tpu.memory_space<vmem>>, vector<2x8x1x8x256xf32>
    %2 = arith.maximumf %0, %1 : vector<2x8x1x8x256xf32>
    %3 = vector.shape_cast %2 : vector<2x8x1x8x256xf32> to vector<2x8x8x256xf32>
    %4 = vector.extract_strided_slice %3 {offsets = [0, 0, 0, 0], sizes = [2, 8, 8, 128], strides = [1, 1, 1, 1]} : vector<2x8x8x256xf32> to vector<2x8x8x128xf32>
    %5 = vector.extract_strided_slice %3 {offsets = [0, 0, 0, 128], sizes = [2, 8, 8, 128], strides = [1, 1, 1, 1]} : vector<2x8x8x256xf32> to vector<2x8x8x128xf32>
    %6 = arith.maximumf %4, %5 : vector<2x8x8x128xf32>
    %cst = arith.constant 0.000000e+00 : f32
    %7 = vector.broadcast %cst : f32 to vector<2x1x8x128xf32>
    %c0_8 = arith.constant 0 : index
    %c0_9 = arith.constant 0 : index
    %c0_10 = arith.constant 0 : index
    %c0_11 = arith.constant 0 : index
    %8 = vector.load %arg8[%c0_8, %c0_9, %c0_10, %c0_11] : memref<2x8x8x1152xf32, #tpu.memory_space<vmem>>, vector<2x1x8x128xf32>
    tpu.vector_store %arg8[%c0_8, %c0_9, %c0_10, %c0_11], %7 {strides = array<i32>} : memref<2x8x8x1152xf32, #tpu.memory_space<vmem>>, vector<2x1x8x128xf32>,
    %cst_12 = arith.constant 0.000000e+00 : f32
    %9 = vector.broadcast %cst_12 : f32 to vector<2x8x1x128xf32>
    %c0_13 = arith.constant 0 : index
    %c0_14 = arith.constant 0 : index
    %c0_15 = arith.constant 0 : index
    %c0_16 = arith.constant 0 : index
    %10 = vector.load %arg8[%c0_13, %c0_14, %c0_15, %c0_16] : memref<2x8x8x1152xf32, #tpu.memory_space<vmem>>, vector<2x8x1x128xf32>
    tpu.vector_store %arg8[%c0_13, %c0_14, %c0_15, %c0_16], %9 {strides = array<i32>} : memref<2x8x8x1152xf32, #tpu.memory_space<vmem>>, vector<2x8x1x128xf32>,
    %11 = vector.extract_strided_slice %6 {offsets = [0, 0, 0, 0], sizes = [2, 7, 7, 128], strides = [1, 1, 1, 1]} : vector<2x8x8x128xf32> to vector<2x7x7x128xf32>
    %c0_17 = arith.constant 0 : index
    %c1_18 = arith.constant 1 : index
    %c1_19 = arith.constant 1 : index
    %c0_20 = arith.constant 0 : index
    %12 = vector.load %arg8[%c0_17, %c1_18, %c1_19, %c0_20] : memref<2x8x8x1152xf32, #tpu.memory_space<vmem>>, vector<2x7x7x128xf32>
    tpu.vector_store %arg8[%c0_17, %c1_18, %c1_19, %c0_20], %11 {strides = array<i32>} : memref<2x8x8x1152xf32, #tpu.memory_space<vmem>>, vector<2x7x7x128xf32>,
    %cst_21 = arith.constant 0.000000e+00 : f32
    %13 = vector.broadcast %cst_21 : f32 to vector<2x1x8x128xf32>
    %c0_22 = arith.constant 0 : index
    %c0_23 = arith.constant 0 : index
    %c0_24 = arith.constant 0 : index
    %c128 = arith.constant 128 : index
    %14 = vector.load %arg8[%c0_22, %c0_23, %c0_24, %c128] : memref<2x8x8x1152xf32, #tpu.memory_space<vmem>>, vector<2x1x8x128xf32>
    tpu.vector_store %arg8[%c0_22, %c0_23, %c0_24, %c128], %13 {strides = array<i32>} : memref<2x8x8x1152xf32, #tpu.memory_space<vmem>>, vector<2x1x8x128xf32>,
    %15 = vector.extract_strided_slice %6 {offsets = [0, 0, 0, 0], sizes = [2, 7, 8, 128], strides = [1, 1, 1, 1]} : vector<2x8x8x128xf32> to vector<2x7x8x128xf32>
    %c0_25 = arith.constant 0 : index
    %c1_26 = arith.constant 1 : index
    %c0_27 = arith.constant 0 : index
    %c128_28 = arith.constant 128 : index
    %16 = vector.load %arg8[%c0_25, %c1_26, %c0_27, %c128_28] : memref<2x8x8x1152xf32, #tpu.memory_space<vmem>>, vector<2x7x8x128xf32>
    tpu.vector_store %arg8[%c0_25, %c1_26, %c0_27, %c128_28], %15 {strides = array<i32>} : memref<2x8x8x1152xf32, #tpu.memory_space<vmem>>, vector<2x7x8x128xf32>,
    %cst_29 = arith.constant 0.000000e+00 : f32
    %17 = vector.broadcast %cst_29 : f32 to vector<2x1x8x128xf32>
    %c0_30 = arith.constant 0 : index
    %c0_31 = arith.constant 0 : index
    %c0_32 = arith.constant 0 : index
    %c256 = arith.constant 256 : index
    %18 = vector.load %arg8[%c0_30, %c0_31, %c0_32, %c256] : memref<2x8x8x1152xf32, #tpu.memory_space<vmem>>, vector<2x1x8x128xf32>
    tpu.vector_store %arg8[%c0_30, %c0_31, %c0_32, %c256], %17 {strides = array<i32>} : memref<2x8x8x1152xf32, #tpu.memory_space<vmem>>, vector<2x1x8x128xf32>,
    %cst_33 = arith.constant 0.000000e+00 : f32
    %19 = vector.broadcast %cst_33 : f32 to vector<2x8x1x128xf32>
    %c0_34 = arith.constant 0 : index
    %c0_35 = arith.constant 0 : index
    %c7 = arith.constant 7 : index
    %c256_36 = arith.constant 256 : index
    %20 = vector.load %arg8[%c0_34, %c0_35, %c7, %c256_36] : memref<2x8x8x1152xf32, #tpu.memory_space<vmem>>, vector<2x8x1x128xf32>
    tpu.vector_store %arg8[%c0_34, %c0_35, %c7, %c256_36], %19 {strides = array<i32>} : memref<2x8x8x1152xf32, #tpu.memory_space<vmem>>, vector<2x8x1x128xf32>,
    %21 = vector.extract_strided_slice %6 {offsets = [0, 0, 1, 0], sizes = [2, 7, 7, 128], strides = [1, 1, 1, 1]} : vector<2x8x8x128xf32> to vector<2x7x7x128xf32>
    %c0_37 = arith.constant 0 : index
    %c1_38 = arith.constant 1 : index
    %c0_39 = arith.constant 0 : index
    %c256_40 = arith.constant 256 : index
    %22 = vector.load %arg8[%c0_37, %c1_38, %c0_39, %c256_40] : memref<2x8x8x1152xf32, #tpu.memory_space<vmem>>, vector<2x7x7x128xf32>
    tpu.vector_store %arg8[%c0_37, %c1_38, %c0_39, %c256_40], %21 {strides = array<i32>} : memref<2x8x8x1152xf32, #tpu.memory_space<vmem>>, vector<2x7x7x128xf32>,
    %cst_41 = arith.constant 0.000000e+00 : f32
    %23 = vector.broadcast %cst_41 : f32 to vector<2x8x1x128xf32>
    %c0_42 = arith.constant 0 : index
    %c0_43 = arith.constant 0 : index
    %c0_44 = arith.constant 0 : index
    %c384 = arith.constant 384 : index
    %24 = vector.load %arg8[%c0_42, %c0_43, %c0_44, %c384] : memref<2x8x8x1152xf32, #tpu.memory_space<vmem>>, vector<2x8x1x128xf32>
    tpu.vector_store %arg8[%c0_42, %c0_43, %c0_44, %c384], %23 {strides = array<i32>} : memref<2x8x8x1152xf32, #tpu.memory_space<vmem>>, vector<2x8x1x128xf32>,
    %25 = vector.extract_strided_slice %6 {offsets = [0, 0, 0, 0], sizes = [2, 8, 7, 128], strides = [1, 1, 1, 1]} : vector<2x8x8x128xf32> to vector<2x8x7x128xf32>
    %c0_45 = arith.constant 0 : index
    %c0_46 = arith.constant 0 : index
    %c1_47 = arith.constant 1 : index
    %c384_48 = arith.constant 384 : index
    %26 = vector.load %arg8[%c0_45, %c0_46, %c1_47, %c384_48] : memref<2x8x8x1152xf32, #tpu.memory_space<vmem>>, vector<2x8x7x128xf32>
    tpu.vector_store %arg8[%c0_45, %c0_46, %c1_47, %c384_48], %25 {strides = array<i32>} : memref<2x8x8x1152xf32, #tpu.memory_space<vmem>>, vector<2x8x7x128xf32>,
    %c0_49 = arith.constant 0 : index
    %c0_50 = arith.constant 0 : index
    %c0_51 = arith.constant 0 : index
    %c512 = arith.constant 512 : index
    %27 = vector.load %arg8[%c0_49, %c0_50, %c0_51, %c512] : memref<2x8x8x1152xf32, #tpu.memory_space<vmem>>, vector<2x8x8x128xf32>
    tpu.vector_store %arg8[%c0_49, %c0_50, %c0_51, %c512], %6 {strides = array<i32>} : memref<2x8x8x1152xf32, #tpu.memory_space<vmem>>, vector<2x8x8x128xf32>,
    %cst_52 = arith.constant 0.000000e+00 : f32
    %28 = vector.broadcast %cst_52 : f32 to vector<2x8x1x128xf32>
    %c0_53 = arith.constant 0 : index
    %c0_54 = arith.constant 0 : index
    %c7_55 = arith.constant 7 : index
    %c640 = arith.constant 640 : index
    %29 = vector.load %arg8[%c0_53, %c0_54, %c7_55, %c640] : memref<2x8x8x1152xf32, #tpu.memory_space<vmem>>, vector<2x8x1x128xf32>
    tpu.vector_store %arg8[%c0_53, %c0_54, %c7_55, %c640], %28 {strides = array<i32>} : memref<2x8x8x1152xf32, #tpu.memory_space<vmem>>, vector<2x8x1x128xf32>,
    %30 = vector.extract_strided_slice %6 {offsets = [0, 0, 1, 0], sizes = [2, 8, 7, 128], strides = [1, 1, 1, 1]} : vector<2x8x8x128xf32> to vector<2x8x7x128xf32>
    %c0_56 = arith.constant 0 : index
    %c0_57 = arith.constant 0 : index
    %c0_58 = arith.constant 0 : index
    %c640_59 = arith.constant 640 : index
    %31 = vector.load %arg8[%c0_56, %c0_57, %c0_58, %c640_59] : memref<2x8x8x1152xf32, #tpu.memory_space<vmem>>, vector<2x8x7x128xf32>
    tpu.vector_store %arg8[%c0_56, %c0_57, %c0_58, %c640_59], %30 {strides = array<i32>} : memref<2x8x8x1152xf32, #tpu.memory_space<vmem>>, vector<2x8x7x128xf32>,
    %cst_60 = arith.constant 0.000000e+00 : f32
    %32 = vector.broadcast %cst_60 : f32 to vector<2x1x8x128xf32>
    %c0_61 = arith.constant 0 : index
    %c7_62 = arith.constant 7 : index
    %c0_63 = arith.constant 0 : index
    %c768 = arith.constant 768 : index
    %33 = vector.load %arg8[%c0_61, %c7_62, %c0_63, %c768] : memref<2x8x8x1152xf32, #tpu.memory_space<vmem>>, vector<2x1x8x128xf32>
    tpu.vector_store %arg8[%c0_61, %c7_62, %c0_63, %c768], %32 {strides = array<i32>} : memref<2x8x8x1152xf32, #tpu.memory_space<vmem>>, vector<2x1x8x128xf32>,
    %cst_64 = arith.constant 0.000000e+00 : f32
    %34 = vector.broadcast %cst_64 : f32 to vector<2x8x1x128xf32>
    %c0_65 = arith.constant 0 : index
    %c0_66 = arith.constant 0 : index
    %c0_67 = arith.constant 0 : index
    %c768_68 = arith.constant 768 : index
    %35 = vector.load %arg8[%c0_65, %c0_66, %c0_67, %c768_68] : memref<2x8x8x1152xf32, #tpu.memory_space<vmem>>, vector<2x8x1x128xf32>
    tpu.vector_store %arg8[%c0_65, %c0_66, %c0_67, %c768_68], %34 {strides = array<i32>} : memref<2x8x8x1152xf32, #tpu.memory_space<vmem>>, vector<2x8x1x128xf32>,
    %36 = vector.extract_strided_slice %6 {offsets = [0, 1, 0, 0], sizes = [2, 7, 7, 128], strides = [1, 1, 1, 1]} : vector<2x8x8x128xf32> to vector<2x7x7x128xf32>
    %c0_69 = arith.constant 0 : index
    %c0_70 = arith.constant 0 : index
    %c1_71 = arith.constant 1 : index
    %c768_72 = arith.constant 768 : index
    %37 = vector.load %arg8[%c0_69, %c0_70, %c1_71, %c768_72] : memref<2x8x8x1152xf32, #tpu.memory_space<vmem>>, vector<2x7x7x128xf32>
    tpu.vector_store %arg8[%c0_69, %c0_70, %c1_71, %c768_72], %36 {strides = array<i32>} : memref<2x8x8x1152xf32, #tpu.memory_space<vmem>>, vector<2x7x7x128xf32>,
    %cst_73 = arith.constant 0.000000e+00 : f32
    %38 = vector.broadcast %cst_73 : f32 to vector<2x1x8x128xf32>
    %c0_74 = arith.constant 0 : index
    %c7_75 = arith.constant 7 : index
    %c0_76 = arith.constant 0 : index
    %c896 = arith.constant 896 : index
    %39 = vector.load %arg8[%c0_74, %c7_75, %c0_76, %c896] : memref<2x8x8x1152xf32, #tpu.memory_space<vmem>>, vector<2x1x8x128xf32>
    tpu.vector_store %arg8[%c0_74, %c7_75, %c0_76, %c896], %38 {strides = array<i32>} : memref<2x8x8x1152xf32, #tpu.memory_space<vmem>>, vector<2x1x8x128xf32>,
    %40 = vector.extract_strided_slice %6 {offsets = [0, 1, 0, 0], sizes = [2, 7, 8, 128], strides = [1, 1, 1, 1]} : vector<2x8x8x128xf32> to vector<2x7x8x128xf32>
    %c0_77 = arith.constant 0 : index
    %c0_78 = arith.constant 0 : index
    %c0_79 = arith.constant 0 : index
    %c896_80 = arith.constant 896 : index
    %41 = vector.load %arg8[%c0_77, %c0_78, %c0_79, %c896_80] : memref<2x8x8x1152xf32, #tpu.memory_space<vmem>>, vector<2x7x8x128xf32>
    tpu.vector_store %arg8[%c0_77, %c0_78, %c0_79, %c896_80], %40 {strides = array<i32>} : memref<2x8x8x1152xf32, #tpu.memory_space<vmem>>, vector<2x7x8x128xf32>,
    %cst_81 = arith.constant 0.000000e+00 : f32
    %42 = vector.broadcast %cst_81 : f32 to vector<2x1x8x128xf32>
    %c0_82 = arith.constant 0 : index
    %c7_83 = arith.constant 7 : index
    %c0_84 = arith.constant 0 : index
    %c1024 = arith.constant 1024 : index
    %43 = vector.load %arg8[%c0_82, %c7_83, %c0_84, %c1024] : memref<2x8x8x1152xf32, #tpu.memory_space<vmem>>, vector<2x1x8x128xf32>
    tpu.vector_store %arg8[%c0_82, %c7_83, %c0_84, %c1024], %42 {strides = array<i32>} : memref<2x8x8x1152xf32, #tpu.memory_space<vmem>>, vector<2x1x8x128xf32>,
    %cst_85 = arith.constant 0.000000e+00 : f32
    %44 = vector.broadcast %cst_85 : f32 to vector<2x8x1x128xf32>
    %c0_86 = arith.constant 0 : index
    %c0_87 = arith.constant 0 : index
    %c7_88 = arith.constant 7 : index
    %c1024_89 = arith.constant 1024 : index
    %45 = vector.load %arg8[%c0_86, %c0_87, %c7_88, %c1024_89] : memref<2x8x8x1152xf32, #tpu.memory_space<vmem>>, vector<2x8x1x128xf32>
    tpu.vector_store %arg8[%c0_86, %c0_87, %c7_88, %c1024_89], %44 {strides = array<i32>} : memref<2x8x8x1152xf32, #tpu.memory_space<vmem>>, vector<2x8x1x128xf32>,
    %46 = vector.extract_strided_slice %6 {offsets = [0, 1, 1, 0], sizes = [2, 7, 7, 128], strides = [1, 1, 1, 1]} : vector<2x8x8x128xf32> to vector<2x7x7x128xf32>
    %c0_90 = arith.constant 0 : index
    %c0_91 = arith.constant 0 : index
    %c0_92 = arith.constant 0 : index
    %c1024_93 = arith.constant 1024 : index
    %47 = vector.load %arg8[%c0_90, %c0_91, %c0_92, %c1024_93] : memref<2x8x8x1152xf32, #tpu.memory_space<vmem>>, vector<2x7x7x128xf32>
    tpu.vector_store %arg8[%c0_90, %c0_91, %c0_92, %c1024_93], %46 {strides = array<i32>} : memref<2x8x8x1152xf32, #tpu.memory_space<vmem>>, vector<2x7x7x128xf32>,
    %c0_94 = arith.constant 0 : index
    %c0_95 = arith.constant 0 : index
    %c0_96 = arith.constant 0 : index
    %c0_97 = arith.constant 0 : index
    %48 = vector.load %arg8[%c0_94, %c0_95, %c0_96, %c0_97] : memref<2x8x8x1152xf32, #tpu.memory_space<vmem>>, vector<2x8x8x1152xf32>
    %49 = vector.shape_cast %48 : vector<2x8x8x1152xf32> to vector<128x1152xf32>
    %50 = arith.truncf %49 : vector<128x1152xf32> to vector<128x1152xbf16>
    %c0_98 = arith.constant 0 : index
    %c0_99 = arith.constant 0 : index
    %51 = vector.load %arg1[%c0_98, %c0_99] : memref<1152x128xbf16, #tpu.memory_space<vmem>>, vector<1152x128xbf16>
    %cst_100 = arith.constant dense<0.000000e+00> : vector<128x128xf32>
    %52 = tpu.matmul %50, %51, %cst_100 {dimension_numbers = #tpu.dot_dimension_numbers<[1], [0], [0], [1], [0, 0, 1, 1], [], []>} : vector<128x1152xbf16>, vector<1152x128xbf16>, vector<128x128xf32> -> vector<128x128xf32>
    %c0_101 = arith.constant 0 : index
    %c0_102 = arith.constant 0 : index
    %53 = vector.load %arg2[%c0_101, %c0_102] : memref<1x128xf32, #tpu.memory_space<vmem>>, vector<1x128xf32>
    %c0_103 = arith.constant 0 : index
    %c0_104 = arith.constant 0 : index
    %54 = vector.load %arg3[%c0_103, %c0_104] : memref<1x128xf32, #tpu.memory_space<vmem>>, vector<1x128xf32>
    %cst_105 = arith.constant dense<0.000000e+00> : vector<128xf32>
    %55 = vector.multi_reduction <add>, %52, %cst_105 [0] : vector<128x128xf32> to vector<128xf32>
    %56 = vector.shape_cast %55 : vector<128xf32> to vector<1x128xf32>
    %57 = arith.mulf %52, %52 : vector<128x128xf32>
    %cst_106 = arith.constant dense<0.000000e+00> : vector<128xf32>
    %58 = vector.multi_reduction <add>, %57, %cst_106 [0] : vector<128x128xf32> to vector<128xf32>
    %59 = vector.shape_cast %58 : vector<128xf32> to vector<1x128xf32>
    %cst_107 = arith.constant 7.812500e-03 : f32
    %60 = vector.broadcast %cst_107 : f32 to vector<1x128xf32>
    %61 = arith.mulf %56, %60 : vector<1x128xf32>
    %cst_108 = arith.constant 7.812500e-03 : f32
    %62 = vector.broadcast %cst_108 : f32 to vector<1x128xf32>
    %63 = arith.mulf %59, %62 : vector<1x128xf32>
    %64 = arith.mulf %61, %61 : vector<1x128xf32>
    %65 = arith.subf %63, %64 : vector<1x128xf32>
    %cst_109 = arith.constant 9.99999974E-6 : f32
    %66 = vector.broadcast %cst_109 : f32 to vector<1x128xf32>
    %67 = arith.addf %65, %66 : vector<1x128xf32>
    %68 = math.rsqrt %67 : vector<1x128xf32>
    %69 = arith.mulf %53, %68 : vector<1x128xf32>
    %70 = arith.mulf %61, %69 : vector<1x128xf32>
    %71 = arith.subf %54, %70 : vector<1x128xf32>
    %72 = vector.broadcast %69 : vector<1x128xf32> to vector<128x128xf32>
    %73 = arith.mulf %52, %72 : vector<128x128xf32>
    %74 = vector.broadcast %71 : vector<1x128xf32> to vector<128x128xf32>
    %75 = arith.addf %73, %74 : vector<128x128xf32>
    %cst_110 = arith.constant 0.000000e+00 : f32
    %76 = vector.broadcast %cst_110 : f32 to vector<128x128xf32>
    %77 = arith.maximumf %75, %76 : vector<128x128xf32>
    %78 = vector.shape_cast %77 : vector<128x128xf32> to vector<2x8x8x128xf32>
    %cst_111 = arith.constant 0.000000e+00 : f32
    %79 = vector.broadcast %cst_111 : f32 to vector<2x1x8x128xf32>
    %c0_112 = arith.constant 0 : index
    %c0_113 = arith.constant 0 : index
    %c0_114 = arith.constant 0 : index
    %c0_115 = arith.constant 0 : index
    %80 = vector.load %arg9[%c0_112, %c0_113, %c0_114, %c0_115] : memref<2x8x8x1152xf32, #tpu.memory_space<vmem>>, vector<2x1x8x128xf32>
    tpu.vector_store %arg9[%c0_112, %c0_113, %c0_114, %c0_115], %79 {strides = array<i32>} : memref<2x8x8x1152xf32, #tpu.memory_space<vmem>>, vector<2x1x8x128xf32>,
    %cst_116 = arith.constant 0.000000e+00 : f32
    %81 = vector.broadcast %cst_116 : f32 to vector<2x8x1x128xf32>
    %c0_117 = arith.constant 0 : index
    %c0_118 = arith.constant 0 : index
    %c0_119 = arith.constant 0 : index
    %c0_120 = arith.constant 0 : index
    %82 = vector.load %arg9[%c0_117, %c0_118, %c0_119, %c0_120] : memref<2x8x8x1152xf32, #tpu.memory_space<vmem>>, vector<2x8x1x128xf32>
    tpu.vector_store %arg9[%c0_117, %c0_118, %c0_119, %c0_120], %81 {strides = array<i32>} : memref<2x8x8x1152xf32, #tpu.memory_space<vmem>>, vector<2x8x1x128xf32>,
    %83 = vector.extract_strided_slice %78 {offsets = [0, 0, 0, 0], sizes = [2, 7, 7, 128], strides = [1, 1, 1, 1]} : vector<2x8x8x128xf32> to vector<2x7x7x128xf32>
    %c0_121 = arith.constant 0 : index
    %c1_122 = arith.constant 1 : index
    %c1_123 = arith.constant 1 : index
    %c0_124 = arith.constant 0 : index
    %84 = vector.load %arg9[%c0_121, %c1_122, %c1_123, %c0_124] : memref<2x8x8x1152xf32, #tpu.memory_space<vmem>>, vector<2x7x7x128xf32>
    tpu.vector_store %arg9[%c0_121, %c1_122, %c1_123, %c0_124], %83 {strides = array<i32>} : memref<2x8x8x1152xf32, #tpu.memory_space<vmem>>, vector<2x7x7x128xf32>,
    %cst_125 = arith.constant 0.000000e+00 : f32
    %85 = vector.broadcast %cst_125 : f32 to vector<2x1x8x128xf32>
    %c0_126 = arith.constant 0 : index
    %c0_127 = arith.constant 0 : index
    %c0_128 = arith.constant 0 : index
    %c128_129 = arith.constant 128 : index
    %86 = vector.load %arg9[%c0_126, %c0_127, %c0_128, %c128_129] : memref<2x8x8x1152xf32, #tpu.memory_space<vmem>>, vector<2x1x8x128xf32>
    tpu.vector_store %arg9[%c0_126, %c0_127, %c0_128, %c128_129], %85 {strides = array<i32>} : memref<2x8x8x1152xf32, #tpu.memory_space<vmem>>, vector<2x1x8x128xf32>,
    %87 = vector.extract_strided_slice %78 {offsets = [0, 0, 0, 0], sizes = [2, 7, 8, 128], strides = [1, 1, 1, 1]} : vector<2x8x8x128xf32> to vector<2x7x8x128xf32>
    %c0_130 = arith.constant 0 : index
    %c1_131 = arith.constant 1 : index
    %c0_132 = arith.constant 0 : index
    %c128_133 = arith.constant 128 : index
    %88 = vector.load %arg9[%c0_130, %c1_131, %c0_132, %c128_133] : memref<2x8x8x1152xf32, #tpu.memory_space<vmem>>, vector<2x7x8x128xf32>
    tpu.vector_store %arg9[%c0_130, %c1_131, %c0_132, %c128_133], %87 {strides = array<i32>} : memref<2x8x8x1152xf32, #tpu.memory_space<vmem>>, vector<2x7x8x128xf32>,
    %cst_134 = arith.constant 0.000000e+00 : f32
    %89 = vector.broadcast %cst_134 : f32 to vector<2x1x8x128xf32>
    %c0_135 = arith.constant 0 : index
    %c0_136 = arith.constant 0 : index
    %c0_137 = arith.constant 0 : index
    %c256_138 = arith.constant 256 : index
    %90 = vector.load %arg9[%c0_135, %c0_136, %c0_137, %c256_138] : memref<2x8x8x1152xf32, #tpu.memory_space<vmem>>, vector<2x1x8x128xf32>
    tpu.vector_store %arg9[%c0_135, %c0_136, %c0_137, %c256_138], %89 {strides = array<i32>} : memref<2x8x8x1152xf32, #tpu.memory_space<vmem>>, vector<2x1x8x128xf32>,
    %cst_139 = arith.constant 0.000000e+00 : f32
    %91 = vector.broadcast %cst_139 : f32 to vector<2x8x1x128xf32>
    %c0_140 = arith.constant 0 : index
    %c0_141 = arith.constant 0 : index
    %c7_142 = arith.constant 7 : index
    %c256_143 = arith.constant 256 : index
    %92 = vector.load %arg9[%c0_140, %c0_141, %c7_142, %c256_143] : memref<2x8x8x1152xf32, #tpu.memory_space<vmem>>, vector<2x8x1x128xf32>
    tpu.vector_store %arg9[%c0_140, %c0_141, %c7_142, %c256_143], %91 {strides = array<i32>} : memref<2x8x8x1152xf32, #tpu.memory_space<vmem>>, vector<2x8x1x128xf32>,
    %93 = vector.extract_strided_slice %78 {offsets = [0, 0, 1, 0], sizes = [2, 7, 7, 128], strides = [1, 1, 1, 1]} : vector<2x8x8x128xf32> to vector<2x7x7x128xf32>
    %c0_144 = arith.constant 0 : index
    %c1_145 = arith.constant 1 : index
    %c0_146 = arith.constant 0 : index
    %c256_147 = arith.constant 256 : index
    %94 = vector.load %arg9[%c0_144, %c1_145, %c0_146, %c256_147] : memref<2x8x8x1152xf32, #tpu.memory_space<vmem>>, vector<2x7x7x128xf32>
    tpu.vector_store %arg9[%c0_144, %c1_145, %c0_146, %c256_147], %93 {strides = array<i32>} : memref<2x8x8x1152xf32, #tpu.memory_space<vmem>>, vector<2x7x7x128xf32>,
    %cst_148 = arith.constant 0.000000e+00 : f32
    %95 = vector.broadcast %cst_148 : f32 to vector<2x8x1x128xf32>
    %c0_149 = arith.constant 0 : index
    %c0_150 = arith.constant 0 : index
    %c0_151 = arith.constant 0 : index
    %c384_152 = arith.constant 384 : index
    %96 = vector.load %arg9[%c0_149, %c0_150, %c0_151, %c384_152] : memref<2x8x8x1152xf32, #tpu.memory_space<vmem>>, vector<2x8x1x128xf32>
    tpu.vector_store %arg9[%c0_149, %c0_150, %c0_151, %c384_152], %95 {strides = array<i32>} : memref<2x8x8x1152xf32, #tpu.memory_space<vmem>>, vector<2x8x1x128xf32>,
    %97 = vector.extract_strided_slice %78 {offsets = [0, 0, 0, 0], sizes = [2, 8, 7, 128], strides = [1, 1, 1, 1]} : vector<2x8x8x128xf32> to vector<2x8x7x128xf32>
    %c0_153 = arith.constant 0 : index
    %c0_154 = arith.constant 0 : index
    %c1_155 = arith.constant 1 : index
    %c384_156 = arith.constant 384 : index
    %98 = vector.load %arg9[%c0_153, %c0_154, %c1_155, %c384_156] : memref<2x8x8x1152xf32, #tpu.memory_space<vmem>>, vector<2x8x7x128xf32>
    tpu.vector_store %arg9[%c0_153, %c0_154, %c1_155, %c384_156], %97 {strides = array<i32>} : memref<2x8x8x1152xf32, #tpu.memory_space<vmem>>, vector<2x8x7x128xf32>,
    %c0_157 = arith.constant 0 : index
    %c0_158 = arith.constant 0 : index
    %c0_159 = arith.constant 0 : index
    %c512_160 = arith.constant 512 : index
    %99 = vector.load %arg9[%c0_157, %c0_158, %c0_159, %c512_160] : memref<2x8x8x1152xf32, #tpu.memory_space<vmem>>, vector<2x8x8x128xf32>
    tpu.vector_store %arg9[%c0_157, %c0_158, %c0_159, %c512_160], %78 {strides = array<i32>} : memref<2x8x8x1152xf32, #tpu.memory_space<vmem>>, vector<2x8x8x128xf32>,
    %cst_161 = arith.constant 0.000000e+00 : f32
    %100 = vector.broadcast %cst_161 : f32 to vector<2x8x1x128xf32>
    %c0_162 = arith.constant 0 : index
    %c0_163 = arith.constant 0 : index
    %c7_164 = arith.constant 7 : index
    %c640_165 = arith.constant 640 : index
    %101 = vector.load %arg9[%c0_162, %c0_163, %c7_164, %c640_165] : memref<2x8x8x1152xf32, #tpu.memory_space<vmem>>, vector<2x8x1x128xf32>
    tpu.vector_store %arg9[%c0_162, %c0_163, %c7_164, %c640_165], %100 {strides = array<i32>} : memref<2x8x8x1152xf32, #tpu.memory_space<vmem>>, vector<2x8x1x128xf32>,
    %102 = vector.extract_strided_slice %78 {offsets = [0, 0, 1, 0], sizes = [2, 8, 7, 128], strides = [1, 1, 1, 1]} : vector<2x8x8x128xf32> to vector<2x8x7x128xf32>
    %c0_166 = arith.constant 0 : index
    %c0_167 = arith.constant 0 : index
    %c0_168 = arith.constant 0 : index
    %c640_169 = arith.constant 640 : index
    %103 = vector.load %arg9[%c0_166, %c0_167, %c0_168, %c640_169] : memref<2x8x8x1152xf32, #tpu.memory_space<vmem>>, vector<2x8x7x128xf32>
    tpu.vector_store %arg9[%c0_166, %c0_167, %c0_168, %c640_169], %102 {strides = array<i32>} : memref<2x8x8x1152xf32, #tpu.memory_space<vmem>>, vector<2x8x7x128xf32>,
    %cst_170 = arith.constant 0.000000e+00 : f32
    %104 = vector.broadcast %cst_170 : f32 to vector<2x1x8x128xf32>
    %c0_171 = arith.constant 0 : index
    %c7_172 = arith.constant 7 : index
    %c0_173 = arith.constant 0 : index
    %c768_174 = arith.constant 768 : index
    %105 = vector.load %arg9[%c0_171, %c7_172, %c0_173, %c768_174] : memref<2x8x8x1152xf32, #tpu.memory_space<vmem>>, vector<2x1x8x128xf32>
    tpu.vector_store %arg9[%c0_171, %c7_172, %c0_173, %c768_174], %104 {strides = array<i32>} : memref<2x8x8x1152xf32, #tpu.memory_space<vmem>>, vector<2x1x8x128xf32>,
    %cst_175 = arith.constant 0.000000e+00 : f32
    %106 = vector.broadcast %cst_175 : f32 to vector<2x8x1x128xf32>
    %c0_176 = arith.constant 0 : index
    %c0_177 = arith.constant 0 : index
    %c0_178 = arith.constant 0 : index
    %c768_179 = arith.constant 768 : index
    %107 = vector.load %arg9[%c0_176, %c0_177, %c0_178, %c768_179] : memref<2x8x8x1152xf32, #tpu.memory_space<vmem>>, vector<2x8x1x128xf32>
    tpu.vector_store %arg9[%c0_176, %c0_177, %c0_178, %c768_179], %106 {strides = array<i32>} : memref<2x8x8x1152xf32, #tpu.memory_space<vmem>>, vector<2x8x1x128xf32>,
    %108 = vector.extract_strided_slice %78 {offsets = [0, 1, 0, 0], sizes = [2, 7, 7, 128], strides = [1, 1, 1, 1]} : vector<2x8x8x128xf32> to vector<2x7x7x128xf32>
    %c0_180 = arith.constant 0 : index
    %c0_181 = arith.constant 0 : index
    %c1_182 = arith.constant 1 : index
    %c768_183 = arith.constant 768 : index
    %109 = vector.load %arg9[%c0_180, %c0_181, %c1_182, %c768_183] : memref<2x8x8x1152xf32, #tpu.memory_space<vmem>>, vector<2x7x7x128xf32>
    tpu.vector_store %arg9[%c0_180, %c0_181, %c1_182, %c768_183], %108 {strides = array<i32>} : memref<2x8x8x1152xf32, #tpu.memory_space<vmem>>, vector<2x7x7x128xf32>,
    %cst_184 = arith.constant 0.000000e+00 : f32
    %110 = vector.broadcast %cst_184 : f32 to vector<2x1x8x128xf32>
    %c0_185 = arith.constant 0 : index
    %c7_186 = arith.constant 7 : index
    %c0_187 = arith.constant 0 : index
    %c896_188 = arith.constant 896 : index
    %111 = vector.load %arg9[%c0_185, %c7_186, %c0_187, %c896_188] : memref<2x8x8x1152xf32, #tpu.memory_space<vmem>>, vector<2x1x8x128xf32>
    tpu.vector_store %arg9[%c0_185, %c7_186, %c0_187, %c896_188], %110 {strides = array<i32>} : memref<2x8x8x1152xf32, #tpu.memory_space<vmem>>, vector<2x1x8x128xf32>,
    %112 = vector.extract_strided_slice %78 {offsets = [0, 1, 0, 0], sizes = [2, 7, 8, 128], strides = [1, 1, 1, 1]} : vector<2x8x8x128xf32> to vector<2x7x8x128xf32>
    %c0_189 = arith.constant 0 : index
    %c0_190 = arith.constant 0 : index
    %c0_191 = arith.constant 0 : index
    %c896_192 = arith.constant 896 : index
    %113 = vector.load %arg9[%c0_189, %c0_190, %c0_191, %c896_192] : memref<2x8x8x1152xf32, #tpu.memory_space<vmem>>, vector<2x7x8x128xf32>
    tpu.vector_store %arg9[%c0_189, %c0_190, %c0_191, %c896_192], %112 {strides = array<i32>} : memref<2x8x8x1152xf32, #tpu.memory_space<vmem>>, vector<2x7x8x128xf32>,
    %cst_193 = arith.constant 0.000000e+00 : f32
    %114 = vector.broadcast %cst_193 : f32 to vector<2x1x8x128xf32>
    %c0_194 = arith.constant 0 : index
    %c7_195 = arith.constant 7 : index
    %c0_196 = arith.constant 0 : index
    %c1024_197 = arith.constant 1024 : index
    %115 = vector.load %arg9[%c0_194, %c7_195, %c0_196, %c1024_197] : memref<2x8x8x1152xf32, #tpu.memory_space<vmem>>, vector<2x1x8x128xf32>
    tpu.vector_store %arg9[%c0_194, %c7_195, %c0_196, %c1024_197], %114 {strides = array<i32>} : memref<2x8x8x1152xf32, #tpu.memory_space<vmem>>, vector<2x1x8x128xf32>,
    %cst_198 = arith.constant 0.000000e+00 : f32
    %116 = vector.broadcast %cst_198 : f32 to vector<2x8x1x128xf32>
    %c0_199 = arith.constant 0 : index
    %c0_200 = arith.constant 0 : index
    %c7_201 = arith.constant 7 : index
    %c1024_202 = arith.constant 1024 : index
    %117 = vector.load %arg9[%c0_199, %c0_200, %c7_201, %c1024_202] : memref<2x8x8x1152xf32, #tpu.memory_space<vmem>>, vector<2x8x1x128xf32>
    tpu.vector_store %arg9[%c0_199, %c0_200, %c7_201, %c1024_202], %116 {strides = array<i32>} : memref<2x8x8x1152xf32, #tpu.memory_space<vmem>>, vector<2x8x1x128xf32>,
    %118 = vector.extract_strided_slice %78 {offsets = [0, 1, 1, 0], sizes = [2, 7, 7, 128], strides = [1, 1, 1, 1]} : vector<2x8x8x128xf32> to vector<2x7x7x128xf32>
    %c0_203 = arith.constant 0 : index
    %c0_204 = arith.constant 0 : index
    %c0_205 = arith.constant 0 : index
    %c1024_206 = arith.constant 1024 : index
    %119 = vector.load %arg9[%c0_203, %c0_204, %c0_205, %c1024_206] : memref<2x8x8x1152xf32, #tpu.memory_space<vmem>>, vector<2x7x7x128xf32>
    tpu.vector_store %arg9[%c0_203, %c0_204, %c0_205, %c1024_206], %118 {strides = array<i32>} : memref<2x8x8x1152xf32, #tpu.memory_space<vmem>>, vector<2x7x7x128xf32>,
    %c0_207 = arith.constant 0 : index
    %c0_208 = arith.constant 0 : index
    %c0_209 = arith.constant 0 : index
    %c0_210 = arith.constant 0 : index
    %120 = vector.load %arg9[%c0_207, %c0_208, %c0_209, %c0_210] : memref<2x8x8x1152xf32, #tpu.memory_space<vmem>>, vector<2x8x8x1152xf32>
    %121 = vector.shape_cast %120 : vector<2x8x8x1152xf32> to vector<128x1152xf32>
    %122 = arith.truncf %121 : vector<128x1152xf32> to vector<128x1152xbf16>
    %c0_211 = arith.constant 0 : index
    %c0_212 = arith.constant 0 : index
    %123 = vector.load %arg4[%c0_211, %c0_212] : memref<1152x128xbf16, #tpu.memory_space<vmem>>, vector<1152x128xbf16>
    %cst_213 = arith.constant dense<0.000000e+00> : vector<128x128xf32>
    %124 = tpu.matmul %122, %123, %cst_213 {dimension_numbers = #tpu.dot_dimension_numbers<[1], [0], [0], [1], [0, 0, 1, 1], [], []>} : vector<128x1152xbf16>, vector<1152x128xbf16>, vector<128x128xf32> -> vector<128x128xf32>
    %c0_214 = arith.constant 0 : index
    %c0_215 = arith.constant 0 : index
    %125 = vector.load %arg5[%c0_214, %c0_215] : memref<1x128xf32, #tpu.memory_space<vmem>>, vector<1x128xf32>
    %c0_216 = arith.constant 0 : index
    %c0_217 = arith.constant 0 : index
    %126 = vector.load %arg6[%c0_216, %c0_217] : memref<1x128xf32, #tpu.memory_space<vmem>>, vector<1x128xf32>
    %cst_218 = arith.constant dense<0.000000e+00> : vector<128xf32>
    %127 = vector.multi_reduction <add>, %124, %cst_218 [0] : vector<128x128xf32> to vector<128xf32>
    %128 = vector.shape_cast %127 : vector<128xf32> to vector<1x128xf32>
    %129 = arith.mulf %124, %124 : vector<128x128xf32>
    %cst_219 = arith.constant dense<0.000000e+00> : vector<128xf32>
    %130 = vector.multi_reduction <add>, %129, %cst_219 [0] : vector<128x128xf32> to vector<128xf32>
    %131 = vector.shape_cast %130 : vector<128xf32> to vector<1x128xf32>
    %cst_220 = arith.constant 7.812500e-03 : f32
    %132 = vector.broadcast %cst_220 : f32 to vector<1x128xf32>
    %133 = arith.mulf %128, %132 : vector<1x128xf32>
    %cst_221 = arith.constant 7.812500e-03 : f32
    %134 = vector.broadcast %cst_221 : f32 to vector<1x128xf32>
    %135 = arith.mulf %131, %134 : vector<1x128xf32>
    %136 = arith.mulf %133, %133 : vector<1x128xf32>
    %137 = arith.subf %135, %136 : vector<1x128xf32>
    %cst_222 = arith.constant 9.99999974E-6 : f32
    %138 = vector.broadcast %cst_222 : f32 to vector<1x128xf32>
    %139 = arith.addf %137, %138 : vector<1x128xf32>
    %140 = math.rsqrt %139 : vector<1x128xf32>
    %141 = arith.mulf %125, %140 : vector<1x128xf32>
    %142 = arith.mulf %133, %141 : vector<1x128xf32>
    %143 = arith.subf %126, %142 : vector<1x128xf32>
    %144 = vector.broadcast %141 : vector<1x128xf32> to vector<128x128xf32>
    %145 = arith.mulf %124, %144 : vector<128x128xf32>
    %146 = vector.broadcast %143 : vector<1x128xf32> to vector<128x128xf32>
    %147 = arith.addf %145, %146 : vector<128x128xf32>
    %cst_223 = arith.constant 0.000000e+00 : f32
    %148 = vector.broadcast %cst_223 : f32 to vector<128x128xf32>
    %149 = arith.maximumf %147, %148 : vector<128x128xf32>
    %c0_224 = arith.constant 0 : index
    %c0_225 = arith.constant 0 : index
    %150 = vector.load %arg7[%c0_224, %c0_225] : memref<128x128xf32, #tpu.memory_space<vmem>>, vector<128x128xf32>
    tpu.vector_store %arg7[%c0_224, %c0_225], %149 {strides = array<i32>} : memref<128x128xf32, #tpu.memory_space<vmem>>, vector<128x128xf32>,
    return
  }
}

</mosaic_0001>

<llo_original>
// kernel: down_forward.1
$region0: #{down_forward.1}
  #allocation0 [shape = 'u32[]', space=smem, size = 0x4, offset = 0x4, fixed_abs, tag = 'smem constant byte address 0x4 - core index']
  #allocation1 [shape = 'u32[144,128]{1,0:T(1,128)}', space=vmem, size = 0x12000, scoped, tag = 'internal scratch']
  #allocation2 [shape = 'f32[2,8,8,1152]{3,2,1,0:T(8,128)}', space=vmem, size = 0x90000, scoped, tag = 'scratch operand']
  #allocation3 [shape = 'f32[2,8,8,1152]{3,2,1,0:T(8,128)}', space=vmem, size = 0x90000, scoped, tag = 'scratch operand']
  %s0 = inlined_call_operand.vmem [shape: f32[2,8,2,8,256], index: 0, kind: input, shape index: {}]
  %s1 = inlined_call_operand.vmem [shape: bf16[1152,128], index: 1, kind: input, shape index: {}]
  %s2 = inlined_call_operand.vmem [shape: f32[1,128], index: 2, kind: input, shape index: {}]
  %s3 = inlined_call_operand.vmem [shape: f32[1,128], index: 3, kind: input, shape index: {}]
  %s4 = inlined_call_operand.vmem [shape: bf16[1152,128], index: 4, kind: input, shape index: {}]
  %s5 = inlined_call_operand.vmem [shape: f32[1,128], index: 5, kind: input, shape index: {}]
  %s6 = inlined_call_operand.vmem [shape: f32[1,128], index: 6, kind: input, shape index: {}]
  %s7 = inlined_call_operand.hbm [shape: f32[128,128], index: 7, kind: output, shape index: {}]
  %s8 = sld [smem:[#allocation0]]
  $region38: #{down_forward.1} parent=0
    _
  %s10 = ssub.s32 1, %s8
  %s11 = scalar_select 0, %s10, %s8
  $region1: #{down_forward.1} parent=0
    #allocation4 [shape = 'u8[65536]{0}', space=vmem, size = 0x10000, scoped, tag = 'output window, operand 0, single buffered']
    #allocation5 [shape = 's32[1]{0}', space=sflag, size = 0x4, scoped, tag = 'scoped memory for down_forward.1']
    %12 = vsyncpa [#allocation5], 0
    // Predicated region
    $region2: #{down_forward.1} parent=1 // pred_check
      _
    $region3: #{down_forward.1} parent=1 // pred_check_branch
      %14 = sbr.rel (0) target = $region5
    $region4: #{down_forward.1} parent=1 // pred_region
      _
    $region5: #{down_forward.1} parent=1 // pred_fallthru
      _
    // Predicated region
    $region6: #{down_forward.1} parent=1 // pred_check
      _
    $region7: #{down_forward.1} parent=1 // pred_check_branch
      %16 = sbr.rel (0) target = $region9
    $region8: #{down_forward.1} parent=1 // pred_region
      _
    $region9: #{down_forward.1} parent=1 // pred_fallthru
      _
    // Predicated region
    $region10: #{down_forward.1} parent=1 // pred_check
      _
    $region11: #{down_forward.1} parent=1 // pred_check_branch
      %18 = sbr.rel (0) target = $region13
    $region12: #{down_forward.1} parent=1 // pred_region
      _
    $region13: #{down_forward.1} parent=1 // pred_fallthru
      _
    // Predicated region
    $region14: #{down_forward.1} parent=1 // pred_check
      _
    $region15: #{down_forward.1} parent=1 // pred_check_branch
      %20 = sbr.rel (0) target = $region17
    $region16: #{down_forward.1} parent=1 // pred_region
      _
    $region17: #{down_forward.1} parent=1 // pred_fallthru
      _
    // Predicated region
    $region18: #{down_forward.1} parent=1 // pred_check
      _
    $region19: #{down_forward.1} parent=1 // pred_check_branch
      %22 = sbr.rel (0) target = $region21
    $region20: #{down_forward.1} parent=1 // pred_region
      _
    $region21: #{down_forward.1} parent=1 // pred_fallthru
      _
    // Predicated region
    $region22: #{down_forward.1} parent=1 // pred_check
      _
    $region23: #{down_forward.1} parent=1 // pred_check_branch
      %24 = sbr.rel (0) target = $region25
    $region24: #{down_forward.1} parent=1 // pred_region
      _
    $region25: #{down_forward.1} parent=1 // pred_fallthru
      _
    // Predicated region
    $region26: #{down_forward.1} parent=1 // pred_check
      _
    $region27: #{down_forward.1} parent=1 // pred_check_branch
      %26 = sbr.rel (0) target = $region29
    $region28: #{down_forward.1} parent=1 // pred_region
      _
    $region29: #{down_forward.1} parent=1 // pred_fallthru
      _
    %v28 = vld [vmem:[%s0] sm:$0xff]
    %v29 = vld [vmem:[%s0 + $0x8] sm:$0xff]
    %v30 = vld [vmem:[%s0 + $0x20] sm:$0xff]
    %v31 = vld [vmem:[%s0 + $0x28] sm:$0xff]
    %v32 = vld [vmem:[%s0 + $0x40] sm:$0xff]
    %v33 = vld [vmem:[%s0 + $0x48] sm:$0xff]
    %v34 = vld [vmem:[%s0 + $0x60] sm:$0xff]
    %v35 = vld [vmem:[%s0 + $0x68] sm:$0xff]
    %v36 = vld [vmem:[%s0 + $0x80] sm:$0xff]
    %v37 = vld [vmem:[%s0 + $0x88] sm:$0xff]
    %v38 = vld [vmem:[%s0 + $0xa0] sm:$0xff]
    %v39 = vld [vmem:[%s0 + $0xa8] sm:$0xff]
    %v40 = vld [vmem:[%s0 + $0xc0] sm:$0xff]
    %v41 = vld [vmem:[%s0 + $0xc8] sm:$0xff]
    %v42 = vld [vmem:[%s0 + $0xe0] sm:$0xff]
    %v43 = vld [vmem:[%s0 + $0xe8] sm:$0xff]
    %v44 = vld [vmem:[%s0 + $0x100] sm:$0xff]
    %v45 = vld [vmem:[%s0 + $0x108] sm:$0xff]
    %v46 = vld [vmem:[%s0 + $0x120] sm:$0xff]
    %v47 = vld [vmem:[%s0 + $0x128] sm:$0xff]
    %v48 = vld [vmem:[%s0 + $0x140] sm:$0xff]
    %v49 = vld [vmem:[%s0 + $0x148] sm:$0xff]
    %v50 = vld [vmem:[%s0 + $0x160] sm:$0xff]
    %v51 = vld [vmem:[%s0 + $0x168] sm:$0xff]
    %v52 = vld [vmem:[%s0 + $0x180] sm:$0xff]
    %v53 = vld [vmem:[%s0 + $0x188] sm:$0xff]
    %v54 = vld [vmem:[%s0 + $0x1a0] sm:$0xff]
    %v55 = vld [vmem:[%s0 + $0x1a8] sm:$0xff]
    %v56 = vld [vmem:[%s0 + $0x1c0] sm:$0xff]
    %v57 = vld [vmem:[%s0 + $0x1c8] sm:$0xff]
    %v58 = vld [vmem:[%s0 + $0x1e0] sm:$0xff]
    %v59 = vld [vmem:[%s0 + $0x1e8] sm:$0xff]
    %s60 = scalar_lea.vmem %s0, 16
    %v61 = vld [vmem:[%s60] sm:$0xff]
    %v62 = vld [vmem:[%s60 + $0x8] sm:$0xff]
    %v63 = vld [vmem:[%s60 + $0x20] sm:$0xff]
    %v64 = vld [vmem:[%s60 + $0x28] sm:$0xff]
    %v65 = vld [vmem:[%s60 + $0x40] sm:$0xff]
    %v66 = vld [vmem:[%s60 + $0x48] sm:$0xff]
    %v67 = vld [vmem:[%s60 + $0x60] sm:$0xff]
    %v68 = vld [vmem:[%s60 + $0x68] sm:$0xff]
    %v69 = vld [vmem:[%s60 + $0x80] sm:$0xff]
    %v70 = vld [vmem:[%s60 + $0x88] sm:$0xff]
    %v71 = vld [vmem:[%s60 + $0xa0] sm:$0xff]
    %v72 = vld [vmem:[%s60 + $0xa8] sm:$0xff]
    %v73 = vld [vmem:[%s60 + $0xc0] sm:$0xff]
    %v74 = vld [vmem:[%s60 + $0xc8] sm:$0xff]
    %v75 = vld [vmem:[%s60 + $0xe0] sm:$0xff]
    %v76 = vld [vmem:[%s60 + $0xe8] sm:$0xff]
    %v77 = vld [vmem:[%s60 + $0x100] sm:$0xff]
    %v78 = vld [vmem:[%s60 + $0x108] sm:$0xff]
    %v79 = vld [vmem:[%s60 + $0x120] sm:$0xff]
    %v80 = vld [vmem:[%s60 + $0x128] sm:$0xff]
    %v81 = vld [vmem:[%s60 + $0x140] sm:$0xff]
    %v82 = vld [vmem:[%s60 + $0x148] sm:$0xff]
    %v83 = vld [vmem:[%s60 + $0x160] sm:$0xff]
    %v84 = vld [vmem:[%s60 + $0x168] sm:$0xff]
    %v85 = vld [vmem:[%s60 + $0x180] sm:$0xff]
    %v86 = vld [vmem:[%s60 + $0x188] sm:$0xff]
    %v87 = vld [vmem:[%s60 + $0x1a0] sm:$0xff]
    %v88 = vld [vmem:[%s60 + $0x1a8] sm:$0xff]
    %v89 = vld [vmem:[%s60 + $0x1c0] sm:$0xff]
    %v90 = vld [vmem:[%s60 + $0x1c8] sm:$0xff]
    %v91 = vld [vmem:[%s60 + $0x1e0] sm:$0xff]
    %v92 = vld [vmem:[%s60 + $0x1e8] sm:$0xff]
    %v93 = vmax.f32 %v28, %v61
    %v94 = vmax.f32 %v29, %v62
    %v95 = vmax.f32 %v30, %v63
    %v96 = vmax.f32 %v31, %v64
    %v97 = vmax.f32 %v32, %v65
    %v98 = vmax.f32 %v33, %v66
    %v99 = vmax.f32 %v34, %v67
    %v100 = vmax.f32 %v35, %v68
    %v101 = vmax.f32 %v36, %v69
    %v102 = vmax.f32 %v37, %v70
    %v103 = vmax.f32 %v38, %v71
    %v104 = vmax.f32 %v39, %v72
    %v105 = vmax.f32 %v40, %v73
    %v106 = vmax.f32 %v41, %v74
    %v107 = vmax.f32 %v42, %v75
    %v108 = vmax.f32 %v43, %v76
    %v109 = vmax.f32 %v44, %v77
    %v110 = vmax.f32 %v45, %v78
    %v111 = vmax.f32 %v46, %v79
    %v112 = vmax.f32 %v47, %v80
    %v113 = vmax.f32 %v48, %v81
    %v114 = vmax.f32 %v49, %v82
    %v115 = vmax.f32 %v50, %v83
    %v116 = vmax.f32 %v51, %v84
    %v117 = vmax.f32 %v52, %v85
    %v118 = vmax.f32 %v53, %v86
    %v119 = vmax.f32 %v54, %v87
    %v120 = vmax.f32 %v55, %v88
    %v121 = vmax.f32 %v56, %v89
    %v122 = vmax.f32 %v57, %v90
    %v123 = vmax.f32 %v58, %v91
    %v124 = vmax.f32 %v59, %v92
    %v125 = vmax.f32 %v93, %v94
    %v126 = vmax.f32 %v95, %v96
    %v127 = vmax.f32 %v97, %v98
    %v128 = vmax.f32 %v99, %v100
    %v129 = vmax.f32 %v101, %v102
    %v130 = vmax.f32 %v103, %v104
    %v131 = vmax.f32 %v105, %v106
    %v132 = vmax.f32 %v107, %v108
    %v133 = vmax.f32 %v109, %v110
    %v134 = vmax.f32 %v111, %v112
    %v135 = vmax.f32 %v113, %v114
    %v136 = vmax.f32 %v115, %v116
    %v137 = vmax.f32 %v117, %v118
    %v138 = vmax.f32 %v119, %v120
    %v139 = vmax.f32 %v121, %v122
    %v140 = vmax.f32 %v123, %v124
    %141 = vst [vmem:[#allocation2] sm:$0xff] 0.0
    %142 = vst [vmem:[#allocation2 + $0x240] sm:$0xff] 0.0
    %143 = vst [vmem:[#allocation2] sm:$0x1] 0.0
    %144 = vst [vmem:[#allocation2 + $0x48] sm:$0x1] 0.0
    %145 = vst [vmem:[#allocation2 + $0x90] sm:$0x1] 0.0
    %146 = vst [vmem:[#allocation2 + $0xd8] sm:$0x1] 0.0
    %147 = vst [vmem:[#allocation2 + $0x120] sm:$0x1] 0.0
    %148 = vst [vmem:[#allocation2 + $0x168] sm:$0x1] 0.0
    %149 = vst [vmem:[#allocation2 + $0x1b0] sm:$0x1] 0.0
    %150 = vst [vmem:[#allocation2 + $0x1f8] sm:$0x1] 0.0
    %151 = vst [vmem:[#allocation2 + $0x240] sm:$0x1] 0.0
    %152 = vst [vmem:[#allocation2 + $0x288] sm:$0x1] 0.0
    %153 = vst [vmem:[#allocation2 + $0x2d0] sm:$0x1] 0.0
    %154 = vst [vmem:[#allocation2 + $0x318] sm:$0x1] 0.0
    %155 = vst [vmem:[#allocation2 + $0x360] sm:$0x1] 0.0
    %156 = vst [vmem:[#allocation2 + $0x3a8] sm:$0x1] 0.0
    %157 = vst [vmem:[#allocation2 + $0x3f0] sm:$0x1] 0.0
    %158 = vst [vmem:[#allocation2 + $0x438] sm:$0x1] 0.0
    %v173 = vrot.slane %v125, 7
    %v174 = vrot.slane %v126, 7
    %v175 = vrot.slane %v127, 7
    %v176 = vrot.slane %v128, 7
    %v177 = vrot.slane %v129, 7
    %v178 = vrot.slane %v130, 7
    %v179 = vrot.slane %v131, 7
    %v180 = vrot.slane %v133, 7
    %v181 = vrot.slane %v134, 7
    %v182 = vrot.slane %v135, 7
    %v183 = vrot.slane %v136, 7
    %v184 = vrot.slane %v137, 7
    %v185 = vrot.slane %v138, 7
    %v186 = vrot.slane %v139, 7
    %s201 = scalar_lea.vmem [#allocation2], 72
    %202 = vst [vmem:[%s201] sm:$0xfe] %v173
    %203 = vst [vmem:[%s201 + $0x48] sm:$0xfe] %v174
    %204 = vst [vmem:[%s201 + $0x90] sm:$0xfe] %v175
    %205 = vst [vmem:[%s201 + $0xd8] sm:$0xfe] %v176
    %206 = vst [vmem:[%s201 + $0x120] sm:$0xfe] %v177
    %207 = vst [vmem:[%s201 + $0x168] sm:$0xfe] %v178
    %208 = vst [vmem:[%s201 + $0x1b0] sm:$0xfe] %v179
    %209 = vst [vmem:[%s201 + $0x240] sm:$0xfe] %v180
    %210 = vst [vmem:[%s201 + $0x288] sm:$0xfe] %v181
    %211 = vst [vmem:[%s201 + $0x2d0] sm:$0xfe] %v182
    %212 = vst [vmem:[%s201 + $0x318] sm:$0xfe] %v183
    %213 = vst [vmem:[%s201 + $0x360] sm:$0xfe] %v184
    %214 = vst [vmem:[%s201 + $0x3a8] sm:$0xfe] %v185
    %215 = vst [vmem:[%s201 + $0x3f0] sm:$0xfe] %v186
    %216 = vst [vmem:[#allocation2 + $0x8] sm:$0xff] 0.0
    %217 = vst [vmem:[#allocation2 + $0x248] sm:$0xff] 0.0
    %218 = vst [vmem:[%s201 + $0x8] sm:$0xff] %v125
    %219 = vst [vmem:[%s201 + $0x50] sm:$0xff] %v126
    %220 = vst [vmem:[%s201 + $0x98] sm:$0xff] %v127
    %221 = vst [vmem:[%s201 + $0xe0] sm:$0xff] %v128
    %222 = vst [vmem:[%s201 + $0x128] sm:$0xff] %v129
    %223 = vst [vmem:[%s201 + $0x170] sm:$0xff] %v130
    %224 = vst [vmem:[%s201 + $0x1b8] sm:$0xff] %v131
    %225 = vst [vmem:[%s201 + $0x248] sm:$0xff] %v133
    %226 = vst [vmem:[%s201 + $0x290] sm:$0xff] %v134
    %227 = vst [vmem:[%s201 + $0x2d8] sm:$0xff] %v135
    %228 = vst [vmem:[%s201 + $0x320] sm:$0xff] %v136
    %229 = vst [vmem:[%s201 + $0x368] sm:$0xff] %v137
    %230 = vst [vmem:[%s201 + $0x3b0] sm:$0xff] %v138
    %231 = vst [vmem:[%s201 + $0x3f8] sm:$0xff] %v139
    %232 = vst [vmem:[#allocation2 + $0x10] sm:$0xff] 0.0
    %233 = vst [vmem:[#allocation2 + $0x250] sm:$0xff] 0.0
    %234 = vst [vmem:[#allocation2 + $0x17] sm:$0x1] 0.0
    %235 = vst [vmem:[#allocation2 + $0x5f] sm:$0x1] 0.0
    %236 = vst [vmem:[#allocation2 + $0xa7] sm:$0x1] 0.0
    %237 = vst [vmem:[#allocation2 + $0xef] sm:$0x1] 0.0
    %238 = vst [vmem:[#allocation2 + $0x137] sm:$0x1] 0.0
    %239 = vst [vmem:[#allocation2 + $0x17f] sm:$0x1] 0.0
    %240 = vst [vmem:[#allocation2 + $0x1c7] sm:$0x1] 0.0
    %241 = vst [vmem:[#allocation2 + $0x20f] sm:$0x1] 0.0
    %242 = vst [vmem:[#allocation2 + $0x257] sm:$0x1] 0.0
    %243 = vst [vmem:[#allocation2 + $0x29f] sm:$0x1] 0.0
    %244 = vst [vmem:[#allocation2 + $0x2e7] sm:$0x1] 0.0
    %245 = vst [vmem:[#allocation2 + $0x32f] sm:$0x1] 0.0
    %246 = vst [vmem:[#allocation2 + $0x377] sm:$0x1] 0.0
    %247 = vst [vmem:[#allocation2 + $0x3bf] sm:$0x1] 0.0
    %248 = vst [vmem:[#allocation2 + $0x407] sm:$0x1] 0.0
    %249 = vst [vmem:[#allocation2 + $0x44f] sm:$0x1] 0.0
    %v250 = vrot.slane %v125, 1
    %v251 = vrot.slane %v126, 1
    %v252 = vrot.slane %v127, 1
    %v253 = vrot.slane %v128, 1
    %v254 = vrot.slane %v129, 1
    %v255 = vrot.slane %v130, 1
    %v256 = vrot.slane %v131, 1
    %v257 = vrot.slane %v133, 1
    %v258 = vrot.slane %v134, 1
    %v259 = vrot.slane %v135, 1
    %v260 = vrot.slane %v136, 1
    %v261 = vrot.slane %v137, 1
    %v262 = vrot.slane %v138, 1
    %v263 = vrot.slane %v139, 1
    %278 = vst [vmem:[%s201 + $0x10] sm:$0x7f] %v250
    %279 = vst [vmem:[%s201 + $0x58] sm:$0x7f] %v251
    %280 = vst [vmem:[%s201 + $0xa0] sm:$0x7f] %v252
    %281 = vst [vmem:[%s201 + $0xe8] sm:$0x7f] %v253
    %282 = vst [vmem:[%s201 + $0x130] sm:$0x7f] %v254
    %283 = vst [vmem:[%s201 + $0x178] sm:$0x7f] %v255
    %284 = vst [vmem:[%s201 + $0x1c0] sm:$0x7f] %v256
    %285 = vst [vmem:[%s201 + $0x250] sm:$0x7f] %v257
    %286 = vst [vmem:[%s201 + $0x298] sm:$0x7f] %v258
    %287 = vst [vmem:[%s201 + $0x2e0] sm:$0x7f] %v259
    %288 = vst [vmem:[%s201 + $0x328] sm:$0x7f] %v260
    %289 = vst [vmem:[%s201 + $0x370] sm:$0x7f] %v261
    %290 = vst [vmem:[%s201 + $0x3b8] sm:$0x7f] %v262
    %291 = vst [vmem:[%s201 + $0x400] sm:$0x7f] %v263
    %292 = vst [vmem:[#allocation2 + $0x18] sm:$0x1] 0.0
    %293 = vst [vmem:[#allocation2 + $0x60] sm:$0x1] 0.0
    %294 = vst [vmem:[#allocation2 + $0xa8] sm:$0x1] 0.0
    %295 = vst [vmem:[#allocation2 + $0xf0] sm:$0x1] 0.0
    %296 = vst [vmem:[#allocation2 + $0x138] sm:$0x1] 0.0
    %297 = vst [vmem:[#allocation2 + $0x180] sm:$0x1] 0.0
    %298 = vst [vmem:[#allocation2 + $0x1c8] sm:$0x1] 0.0
    %299 = vst [vmem:[#allocation2 + $0x210] sm:$0x1] 0.0
    %300 = vst [vmem:[#allocation2 + $0x258] sm:$0x1] 0.0
    %301 = vst [vmem:[#allocation2 + $0x2a0] sm:$0x1] 0.0
    %302 = vst [vmem:[#allocation2 + $0x2e8] sm:$0x1] 0.0
    %303 = vst [vmem:[#allocation2 + $0x330] sm:$0x1] 0.0
    %304 = vst [vmem:[#allocation2 + $0x378] sm:$0x1] 0.0
    %305 = vst [vmem:[#allocation2 + $0x3c0] sm:$0x1] 0.0
    %306 = vst [vmem:[#allocation2 + $0x408] sm:$0x1] 0.0
    %307 = vst [vmem:[#allocation2 + $0x450] sm:$0x1] 0.0
    %v310 = vrot.slane %v132, 7
    %v311 = vrot.slane %v140, 7
    %314 = vst [vmem:[#allocation2 + $0x18] sm:$0xfe] %v173
    %315 = vst [vmem:[#allocation2 + $0x60] sm:$0xfe] %v174
    %316 = vst [vmem:[#allocation2 + $0xa8] sm:$0xfe] %v175
    %317 = vst [vmem:[#allocation2 + $0xf0] sm:$0xfe] %v176
    %318 = vst [vmem:[#allocation2 + $0x138] sm:$0xfe] %v177
    %319 = vst [vmem:[#allocation2 + $0x180] sm:$0xfe] %v178
    %320 = vst [vmem:[#allocation2 + $0x1c8] sm:$0xfe] %v179
    %321 = vst [vmem:[#allocation2 + $0x210] sm:$0xfe] %v310
    %322 = vst [vmem:[#allocation2 + $0x258] sm:$0xfe] %v180
    %323 = vst [vmem:[#allocation2 + $0x2a0] sm:$0xfe] %v181
    %324 = vst [vmem:[#allocation2 + $0x2e8] sm:$0xfe] %v182
    %325 = vst [vmem:[#allocation2 + $0x330] sm:$0xfe] %v183
    %326 = vst [vmem:[#allocation2 + $0x378] sm:$0xfe] %v184
    %327 = vst [vmem:[#allocation2 + $0x3c0] sm:$0xfe] %v185
    %328 = vst [vmem:[#allocation2 + $0x408] sm:$0xfe] %v186
    %329 = vst [vmem:[#allocation2 + $0x450] sm:$0xfe] %v311
    %330 = vst [vmem:[#allocation2 + $0x20] sm:$0xff] %v125
    %331 = vst [vmem:[#allocation2 + $0x68] sm:$0xff] %v126
    %332 = vst [vmem:[#allocation2 + $0xb0] sm:$0xff] %v127
    %333 = vst [vmem:[#allocation2 + $0xf8] sm:$0xff] %v128
    %334 = vst [vmem:[#allocation2 + $0x140] sm:$0xff] %v129
    %335 = vst [vmem:[#allocation2 + $0x188] sm:$0xff] %v130
    %336 = vst [vmem:[#allocation2 + $0x1d0] sm:$0xff] %v131
    %337 = vst [vmem:[#allocation2 + $0x218] sm:$0xff] %v132
    %338 = vst [vmem:[#allocation2 + $0x260] sm:$0xff] %v133
    %339 = vst [vmem:[#allocation2 + $0x2a8] sm:$0xff] %v134
    %340 = vst [vmem:[#allocation2 + $0x2f0] sm:$0xff] %v135
    %341 = vst [vmem:[#allocation2 + $0x338] sm:$0xff] %v136
    %342 = vst [vmem:[#allocation2 + $0x380] sm:$0xff] %v137
    %343 = vst [vmem:[#allocation2 + $0x3c8] sm:$0xff] %v138
    %344 = vst [vmem:[#allocation2 + $0x410] sm:$0xff] %v139
    %345 = vst [vmem:[#allocation2 + $0x458] sm:$0xff] %v140
    %346 = vst [vmem:[#allocation2 + $0x2f] sm:$0x1] 0.0
    %347 = vst [vmem:[#allocation2 + $0x77] sm:$0x1] 0.0
    %348 = vst [vmem:[#allocation2 + $0xbf] sm:$0x1] 0.0
    %349 = vst [vmem:[#allocation2 + $0x107] sm:$0x1] 0.0
    %350 = vst [vmem:[#allocation2 + $0x14f] sm:$0x1] 0.0
    %351 = vst [vmem:[#allocation2 + $0x197] sm:$0x1] 0.0
    %352 = vst [vmem:[#allocation2 + $0x1df] sm:$0x1] 0.0
    %353 = vst [vmem:[#allocation2 + $0x227] sm:$0x1] 0.0
    %354 = vst [vmem:[#allocation2 + $0x26f] sm:$0x1] 0.0
    %355 = vst [vmem:[#allocation2 + $0x2b7] sm:$0x1] 0.0
    %356 = vst [vmem:[#allocation2 + $0x2ff] sm:$0x1] 0.0
    %357 = vst [vmem:[#allocation2 + $0x347] sm:$0x1] 0.0
    %358 = vst [vmem:[#allocation2 + $0x38f] sm:$0x1] 0.0
    %359 = vst [vmem:[#allocation2 + $0x3d7] sm:$0x1] 0.0
    %360 = vst [vmem:[#allocation2 + $0x41f] sm:$0x1] 0.0
    %361 = vst [vmem:[#allocation2 + $0x467] sm:$0x1] 0.0
    %v362 = vrot.slane %v132, 1
    %v363 = vrot.slane %v140, 1
    %366 = vst [vmem:[#allocation2 + $0x28] sm:$0x7f] %v250
    %367 = vst [vmem:[#allocation2 + $0x70] sm:$0x7f] %v251
    %368 = vst [vmem:[#allocation2 + $0xb8] sm:$0x7f] %v252
    %369 = vst [vmem:[#allocation2 + $0x100] sm:$0x7f] %v253
    %370 = vst [vmem:[#allocation2 + $0x148] sm:$0x7f] %v254
    %371 = vst [vmem:[#allocation2 + $0x190] sm:$0x7f] %v255
    %372 = vst [vmem:[#allocation2 + $0x1d8] sm:$0x7f] %v256
    %373 = vst [vmem:[#allocation2 + $0x220] sm:$0x7f] %v362
    %374 = vst [vmem:[#allocation2 + $0x268] sm:$0x7f] %v257
    %375 = vst [vmem:[#allocation2 + $0x2b0] sm:$0x7f] %v258
    %376 = vst [vmem:[#allocation2 + $0x2f8] sm:$0x7f] %v259
    %377 = vst [vmem:[#allocation2 + $0x340] sm:$0x7f] %v260
    %378 = vst [vmem:[#allocation2 + $0x388] sm:$0x7f] %v261
    %379 = vst [vmem:[#allocation2 + $0x3d0] sm:$0x7f] %v262
    %380 = vst [vmem:[#allocation2 + $0x418] sm:$0x7f] %v263
    %381 = vst [vmem:[#allocation2 + $0x460] sm:$0x7f] %v363
    %s382 = scalar_lea.vmem [#allocation2], 504
    %383 = vst [vmem:[%s382 + $0x30] sm:$0xff] 0.0
    %384 = vst [vmem:[%s382 + $0x270] sm:$0xff] 0.0
    %385 = vst [vmem:[#allocation2 + $0x30] sm:$0x1] 0.0
    %386 = vst [vmem:[#allocation2 + $0x78] sm:$0x1] 0.0
    %387 = vst [vmem:[#allocation2 + $0xc0] sm:$0x1] 0.0
    %388 = vst [vmem:[#allocation2 + $0x108] sm:$0x1] 0.0
    %389 = vst [vmem:[#allocation2 + $0x150] sm:$0x1] 0.0
    %390 = vst [vmem:[#allocation2 + $0x198] sm:$0x1] 0.0
    %391 = vst [vmem:[#allocation2 + $0x1e0] sm:$0x1] 0.0
    %392 = vst [vmem:[#allocation2 + $0x228] sm:$0x1] 0.0
    %393 = vst [vmem:[#allocation2 + $0x270] sm:$0x1] 0.0
    %394 = vst [vmem:[#allocation2 + $0x2b8] sm:$0x1] 0.0
    %395 = vst [vmem:[#allocation2 + $0x300] sm:$0x1] 0.0
    %396 = vst [vmem:[#allocation2 + $0x348] sm:$0x1] 0.0
    %397 = vst [vmem:[#allocation2 + $0x390] sm:$0x1] 0.0
    %398 = vst [vmem:[#allocation2 + $0x3d8] sm:$0x1] 0.0
    %399 = vst [vmem:[#allocation2 + $0x420] sm:$0x1] 0.0
    %400 = vst [vmem:[#allocation2 + $0x468] sm:$0x1] 0.0
    %401 = vst [vmem:[#allocation2 + $0x30] sm:$0xfe] %v174
    %402 = vst [vmem:[#allocation2 + $0x78] sm:$0xfe] %v175
    %403 = vst [vmem:[#allocation2 + $0xc0] sm:$0xfe] %v176
    %404 = vst [vmem:[#allocation2 + $0x108] sm:$0xfe] %v177
    %405 = vst [vmem:[#allocation2 + $0x150] sm:$0xfe] %v178
    %406 = vst [vmem:[#allocation2 + $0x198] sm:$0xfe] %v179
    %407 = vst [vmem:[#allocation2 + $0x1e0] sm:$0xfe] %v310
    %408 = vst [vmem:[#allocation2 + $0x270] sm:$0xfe] %v181
    %409 = vst [vmem:[#allocation2 + $0x2b8] sm:$0xfe] %v182
    %410 = vst [vmem:[#allocation2 + $0x300] sm:$0xfe] %v183
    %411 = vst [vmem:[#allocation2 + $0x348] sm:$0xfe] %v184
    %412 = vst [vmem:[#allocation2 + $0x390] sm:$0xfe] %v185
    %413 = vst [vmem:[#allocation2 + $0x3d8] sm:$0xfe] %v186
    %414 = vst [vmem:[#allocation2 + $0x420] sm:$0xfe] %v311
    %415 = vst [vmem:[%s382 + $0x38] sm:$0xff] 0.0
    %416 = vst [vmem:[%s382 + $0x278] sm:$0xff] 0.0
    %417 = vst [vmem:[#allocation2 + $0x38] sm:$0xff] %v126
    %418 = vst [vmem:[#allocation2 + $0x80] sm:$0xff] %v127
    %419 = vst [vmem:[#allocation2 + $0xc8] sm:$0xff] %v128
    %420 = vst [vmem:[#allocation2 + $0x110] sm:$0xff] %v129
    %421 = vst [vmem:[#allocation2 + $0x158] sm:$0xff] %v130
    %422 = vst [vmem:[#allocation2 + $0x1a0] sm:$0xff] %v131
    %423 = vst [vmem:[#allocation2 + $0x1e8] sm:$0xff] %v132
    %424 = vst [vmem:[#allocation2 + $0x278] sm:$0xff] %v134
    %425 = vst [vmem:[#allocation2 + $0x2c0] sm:$0xff] %v135
    %426 = vst [vmem:[#allocation2 + $0x308] sm:$0xff] %v136
    %427 = vst [vmem:[#allocation2 + $0x350] sm:$0xff] %v137
    %428 = vst [vmem:[#allocation2 + $0x398] sm:$0xff] %v138
    %429 = vst [vmem:[#allocation2 + $0x3e0] sm:$0xff] %v139
    %430 = vst [vmem:[#allocation2 + $0x428] sm:$0xff] %v140
    %431 = vst [vmem:[%s382 + $0x40] sm:$0xff] 0.0
    %432 = vst [vmem:[%s382 + $0x280] sm:$0xff] 0.0
    %433 = vst [vmem:[#allocation2 + $0x47] sm:$0x1] 0.0
    %434 = vst [vmem:[#allocation2 + $0x8f] sm:$0x1] 0.0
    %435 = vst [vmem:[#allocation2 + $0xd7] sm:$0x1] 0.0
    %436 = vst [vmem:[#allocation2 + $0x11f] sm:$0x1] 0.0
    %437 = vst [vmem:[#allocation2 + $0x167] sm:$0x1] 0.0
    %438 = vst [vmem:[#allocation2 + $0x1af] sm:$0x1] 0.0
    %439 = vst [vmem:[#allocation2 + $0x1f7] sm:$0x1] 0.0
    %440 = vst [vmem:[#allocation2 + $0x23f] sm:$0x1] 0.0
    %441 = vst [vmem:[#allocation2 + $0x287] sm:$0x1] 0.0
    %442 = vst [vmem:[#allocation2 + $0x2cf] sm:$0x1] 0.0
    %443 = vst [vmem:[#allocation2 + $0x317] sm:$0x1] 0.0
    %444 = vst [vmem:[#allocation2 + $0x35f] sm:$0x1] 0.0
    %445 = vst [vmem:[#allocation2 + $0x3a7] sm:$0x1] 0.0
    %446 = vst [vmem:[#allocation2 + $0x3ef] sm:$0x1] 0.0
    %447 = vst [vmem:[#allocation2 + $0x437] sm:$0x1] 0.0
    %448 = vst [vmem:[#allocation2 + $0x47f] sm:$0x1] 0.0
    %449 = vst [vmem:[#allocation2 + $0x40] sm:$0x7f] %v251
    %450 = vst [vmem:[#allocation2 + $0x88] sm:$0x7f] %v252
    %451 = vst [vmem:[#allocation2 + $0xd0] sm:$0x7f] %v253
    %452 = vst [vmem:[#allocation2 + $0x118] sm:$0x7f] %v254
    %453 = vst [vmem:[#allocation2 + $0x160] sm:$0x7f] %v255
    %454 = vst [vmem:[#allocation2 + $0x1a8] sm:$0x7f] %v256
    %455 = vst [vmem:[#allocation2 + $0x1f0] sm:$0x7f] %v362
    %456 = vst [vmem:[#allocation2 + $0x280] sm:$0x7f] %v258
    %457 = vst [vmem:[#allocation2 + $0x2c8] sm:$0x7f] %v259
    %458 = vst [vmem:[#allocation2 + $0x310] sm:$0x7f] %v260
    %459 = vst [vmem:[#allocation2 + $0x358] sm:$0x7f] %v261
    %460 = vst [vmem:[#allocation2 + $0x3a0] sm:$0x7f] %v262
    %461 = vst [vmem:[#allocation2 + $0x3e8] sm:$0x7f] %v263
    %462 = vst [vmem:[#allocation2 + $0x430] sm:$0x7f] %v363
    %v463 = vld [vmem:[#allocation2] sm:$0xff]
    %v464 = vld [vmem:[#allocation2 + $0x8] sm:$0xff]
    %v465 = vld [vmem:[#allocation2 + $0x10] sm:$0xff]
    %v466 = vld [vmem:[#allocation2 + $0x18] sm:$0xff]
    %v467 = vld [vmem:[#allocation2 + $0x20] sm:$0xff]
    %v468 = vld [vmem:[#allocation2 + $0x28] sm:$0xff]
    %v469 = vld [vmem:[#allocation2 + $0x30] sm:$0xff]
    %v470 = vld [vmem:[#allocation2 + $0x38] sm:$0xff]
    %v471 = vld [vmem:[#allocation2 + $0x40] sm:$0xff]
    %v472 = vld [vmem:[#allocation2 + $0x48] sm:$0xff]
    %v473 = vld [vmem:[#allocation2 + $0x50] sm:$0xff]
    %v474 = vld [vmem:[#allocation2 + $0x58] sm:$0xff]
    %v475 = vld [vmem:[#allocation2 + $0x60] sm:$0xff]
    %v476 = vld [vmem:[#allocation2 + $0x68] sm:$0xff]
    %v477 = vld [vmem:[#allocation2 + $0x70] sm:$0xff]
    %v478 = vld [vmem:[#allocation2 + $0x78] sm:$0xff]
    %v479 = vld [vmem:[#allocation2 + $0x80] sm:$0xff]
    %v480 = vld [vmem:[#allocation2 + $0x88] sm:$0xff]
    %v481 = vld [vmem:[#allocation2 + $0x90] sm:$0xff]
    %v482 = vld [vmem:[#allocation2 + $0x98] sm:$0xff]
    %v483 = vld [vmem:[#allocation2 + $0xa0] sm:$0xff]
    %v484 = vld [vmem:[#allocation2 + $0xa8] sm:$0xff]
    %v485 = vld [vmem:[#allocation2 + $0xb0] sm:$0xff]
    %v486 = vld [vmem:[#allocation2 + $0xb8] sm:$0xff]
    %v487 = vld [vmem:[#allocation2 + $0xc0] sm:$0xff]
    %v488 = vld [vmem:[#allocation2 + $0xc8] sm:$0xff]
    %v489 = vld [vmem:[#allocation2 + $0xd0] sm:$0xff]
    %v490 = vld [vmem:[#allocation2 + $0xd8] sm:$0xff]
    %v491 = vld [vmem:[#allocation2 + $0xe0] sm:$0xff]
    %v492 = vld [vmem:[#allocation2 + $0xe8] sm:$0xff]
    %v493 = vld [vmem:[#allocation2 + $0xf0] sm:$0xff]
    %v494 = vld [vmem:[#allocation2 + $0xf8] sm:$0xff]
    %v495 = vld [vmem:[#allocation2 + $0x100] sm:$0xff]
    %v496 = vld [vmem:[#allocation2 + $0x108] sm:$0xff]
    %v497 = vld [vmem:[#allocation2 + $0x110] sm:$0xff]
    %v498 = vld [vmem:[#allocation2 + $0x118] sm:$0xff]
    %v499 = vld [vmem:[#allocation2 + $0x120] sm:$0xff]
    %v500 = vld [vmem:[#allocation2 + $0x128] sm:$0xff]
    %v501 = vld [vmem:[#allocation2 + $0x130] sm:$0xff]
    %v502 = vld [vmem:[#allocation2 + $0x138] sm:$0xff]
    %v503 = vld [vmem:[#allocation2 + $0x140] sm:$0xff]
    %v504 = vld [vmem:[#allocation2 + $0x148] sm:$0xff]
    %v505 = vld [vmem:[#allocation2 + $0x150] sm:$0xff]
    %v506 = vld [vmem:[#allocation2 + $0x158] sm:$0xff]
    %v507 = vld [vmem:[#allocation2 + $0x160] sm:$0xff]
    %v508 = vld [vmem:[#allocation2 + $0x168] sm:$0xff]
    %v509 = vld [vmem:[#allocation2 + $0x170] sm:$0xff]
    %v510 = vld [vmem:[#allocation2 + $0x178] sm:$0xff]
    %v511 = vld [vmem:[#allocation2 + $0x180] sm:$0xff]
    %v512 = vld [vmem:[#allocation2 + $0x188] sm:$0xff]
    %v513 = vld [vmem:[#allocation2 + $0x190] sm:$0xff]
    %v514 = vld [vmem:[#allocation2 + $0x198] sm:$0xff]
    %v515 = vld [vmem:[#allocation2 + $0x1a0] sm:$0xff]
    %v516 = vld [vmem:[#allocation2 + $0x1a8] sm:$0xff]
    %v517 = vld [vmem:[#allocation2 + $0x1b0] sm:$0xff]
    %v518 = vld [vmem:[#allocation2 + $0x1b8] sm:$0xff]
    %v519 = vld [vmem:[#allocation2 + $0x1c0] sm:$0xff]
    %v520 = vld [vmem:[#allocation2 + $0x1c8] sm:$0xff]
    %v521 = vld [vmem:[#allocation2 + $0x1d0] sm:$0xff]
    %v522 = vld [vmem:[#allocation2 + $0x1d8] sm:$0xff]
    %v523 = vld [vmem:[#allocation2 + $0x1e0] sm:$0xff]
    %v524 = vld [vmem:[#allocation2 + $0x1e8] sm:$0xff]
    %v525 = vld [vmem:[#allocation2 + $0x1f0] sm:$0xff]
    %v526 = vld [vmem:[#allocation2 + $0x1f8] sm:$0xff]
    %v527 = vld [vmem:[#allocation2 + $0x200] sm:$0xff]
    %v528 = vld [vmem:[#allocation2 + $0x208] sm:$0xff]
    %v529 = vld [vmem:[#allocation2 + $0x210] sm:$0xff]
    %v530 = vld [vmem:[#allocation2 + $0x218] sm:$0xff]
    %v531 = vld [vmem:[#allocation2 + $0x220] sm:$0xff]
    %v532 = vld [vmem:[#allocation2 + $0x228] sm:$0xff]
    %v533 = vld [vmem:[#allocation2 + $0x230] sm:$0xff]
    %v534 = vld [vmem:[#allocation2 + $0x238] sm:$0xff]
    %v535 = vld [vmem:[#allocation2 + $0x240] sm:$0xff]
    %v536 = vld [vmem:[#allocation2 + $0x248] sm:$0xff]
    %v537 = vld [vmem:[#allocation2 + $0x250] sm:$0xff]
    %v538 = vld [vmem:[#allocation2 + $0x258] sm:$0xff]
    %v539 = vld [vmem:[#allocation2 + $0x260] sm:$0xff]
    %v540 = vld [vmem:[#allocation2 + $0x268] sm:$0xff]
    %v541 = vld [vmem:[#allocation2 + $0x270] sm:$0xff]
    %v542 = vld [vmem:[#allocation2 + $0x278] sm:$0xff]
    %v543 = vld [vmem:[#allocation2 + $0x280] sm:$0xff]
    %v544 = vld [vmem:[#allocation2 + $0x288] sm:$0xff]
    %v545 = vld [vmem:[#allocation2 + $0x290] sm:$0xff]
    %v546 = vld [vmem:[#allocation2 + $0x298] sm:$0xff]
    %v547 = vld [vmem:[#allocation2 + $0x2a0] sm:$0xff]
    %v548 = vld [vmem:[#allocation2 + $0x2a8] sm:$0xff]
    %v549 = vld [vmem:[#allocation2 + $0x2b0] sm:$0xff]
    %v550 = vld [vmem:[#allocation2 + $0x2b8] sm:$0xff]
    %v551 = vld [vmem:[#allocation2 + $0x2c0] sm:$0xff]
    %v552 = vld [vmem:[#allocation2 + $0x2c8] sm:$0xff]
    %v553 = vld [vmem:[#allocation2 + $0x2d0] sm:$0xff]
    %v554 = vld [vmem:[#allocation2 + $0x2d8] sm:$0xff]
    %v555 = vld [vmem:[#allocation2 + $0x2e0] sm:$0xff]
    %v556 = vld [vmem:[#allocation2 + $0x2e8] sm:$0xff]
    %v557 = vld [vmem:[#allocation2 + $0x2f0] sm:$0xff]
    %v558 = vld [vmem:[#allocation2 + $0x2f8] sm:$0xff]
    %v559 = vld [vmem:[#allocation2 + $0x300] sm:$0xff]
    %v560 = vld [vmem:[#allocation2 + $0x308] sm:$0xff]
    %v561 = vld [vmem:[#allocation2 + $0x310] sm:$0xff]
    %v562 = vld [vmem:[#allocation2 + $0x318] sm:$0xff]
    %v563 = vld [vmem:[#allocation2 + $0x320] sm:$0xff]
    %v564 = vld [vmem:[#allocation2 + $0x328] sm:$0xff]
    %v565 = vld [vmem:[#allocation2 + $0x330] sm:$0xff]
    %v566 = vld [vmem:[#allocation2 + $0x338] sm:$0xff]
    %v567 = vld [vmem:[#allocation2 + $0x340] sm:$0xff]
    %v568 = vld [vmem:[#allocation2 + $0x348] sm:$0xff]
    %v569 = vld [vmem:[#allocation2 + $0x350] sm:$0xff]
    %v570 = vld [vmem:[#allocation2 + $0x358] sm:$0xff]
    %v571 = vld [vmem:[#allocation2 + $0x360] sm:$0xff]
    %v572 = vld [vmem:[#allocation2 + $0x368] sm:$0xff]
    %v573 = vld [vmem:[#allocation2 + $0x370] sm:$0xff]
    %v574 = vld [vmem:[#allocation2 + $0x378] sm:$0xff]
    %v575 = vld [vmem:[#allocation2 + $0x380] sm:$0xff]
    %v576 = vld [vmem:[#allocation2 + $0x388] sm:$0xff]
    %v577 = vld [vmem:[#allocation2 + $0x390] sm:$0xff]
    %v578 = vld [vmem:[#allocation2 + $0x398] sm:$0xff]
    %v579 = vld [vmem:[#allocation2 + $0x3a0] sm:$0xff]
    %v580 = vld [vmem:[#allocation2 + $0x3a8] sm:$0xff]
    %v581 = vld [vmem:[#allocation2 + $0x3b0] sm:$0xff]
    %v582 = vld [vmem:[#allocation2 + $0x3b8] sm:$0xff]
    %v583 = vld [vmem:[#allocation2 + $0x3c0] sm:$0xff]
    %v584 = vld [vmem:[#allocation2 + $0x3c8] sm:$0xff]
    %v585 = vld [vmem:[#allocation2 + $0x3d0] sm:$0xff]
    %v586 = vld [vmem:[#allocation2 + $0x3d8] sm:$0xff]
    %v587 = vld [vmem:[#allocation2 + $0x3e0] sm:$0xff]
    %v588 = vld [vmem:[#allocation2 + $0x3e8] sm:$0xff]
    %v589 = vld [vmem:[#allocation2 + $0x3f0] sm:$0xff]
    %v590 = vld [vmem:[#allocation2 + $0x3f8] sm:$0xff]
    %v591 = vld [vmem:[#allocation2 + $0x400] sm:$0xff]
    %v592 = vld [vmem:[#allocation2 + $0x408] sm:$0xff]
    %v593 = vld [vmem:[#allocation2 + $0x410] sm:$0xff]
    %v594 = vld [vmem:[#allocation2 + $0x418] sm:$0xff]
    %v595 = vld [vmem:[#allocation2 + $0x420] sm:$0xff]
    %v596 = vld [vmem:[#allocation2 + $0x428] sm:$0xff]
    %v597 = vld [vmem:[#allocation2 + $0x430] sm:$0xff]
    %v598 = vld [vmem:[#allocation2 + $0x438] sm:$0xff]
    %v599 = vld [vmem:[#allocation2 + $0x440] sm:$0xff]
    %v600 = vld [vmem:[#allocation2 + $0x448] sm:$0xff]
    %v601 = vld [vmem:[#allocation2 + $0x450] sm:$0xff]
    %v602 = vld [vmem:[#allocation2 + $0x458] sm:$0xff]
    %v603 = vld [vmem:[#allocation2 + $0x460] sm:$0xff]
    %v604 = vld [vmem:[#allocation2 + $0x468] sm:$0xff]
    %v605 = vld [vmem:[#allocation2 + $0x470] sm:$0xff]
    %v606 = vld [vmem:[#allocation2 + $0x478] sm:$0xff]
    %v607 = vpack.c.bf16 %v472, %v463
    %v608 = vpack.c.bf16 %v473, %v464
    %v609 = vpack.c.bf16 %v474, %v465
    %v610 = vpack.c.bf16 %v475, %v466
    %v611 = vpack.c.bf16 %v476, %v467
    %v612 = vpack.c.bf16 %v477, %v468
    %v613 = vpack.c.bf16 %v478, %v469
    %v614 = vpack.c.bf16 %v479, %v470
    %v615 = vpack.c.bf16 %v480, %v471
    %v616 = vpack.c.bf16 %v490, %v481
    %v617 = vpack.c.bf16 %v491, %v482
    %v618 = vpack.c.bf16 %v492, %v483
    %v619 = vpack.c.bf16 %v493, %v484
    %v620 = vpack.c.bf16 %v494, %v485
    %v621 = vpack.c.bf16 %v495, %v486
    %v622 = vpack.c.bf16 %v496, %v487
    %v623 = vpack.c.bf16 %v497, %v488
    %v624 = vpack.c.bf16 %v498, %v489
    %v625 = vpack.c.bf16 %v508, %v499
    %v626 = vpack.c.bf16 %v509, %v500
    %v627 = vpack.c.bf16 %v510, %v501
    %v628 = vpack.c.bf16 %v511, %v502
    %v629 = vpack.c.bf16 %v512, %v503
    %v630 = vpack.c.bf16 %v513, %v504
    %v631 = vpack.c.bf16 %v514, %v505
    %v632 = vpack.c.bf16 %v515, %v506
    %v633 = vpack.c.bf16 %v516, %v507
    %v634 = vpack.c.bf16 %v526, %v517
    %v635 = vpack.c.bf16 %v527, %v518
    %v636 = vpack.c.bf16 %v528, %v519
    %v637 = vpack.c.bf16 %v529, %v520
    %v638 = vpack.c.bf16 %v530, %v521
    %v639 = vpack.c.bf16 %v531, %v522
    %v640 = vpack.c.bf16 %v532, %v523
    %v641 = vpack.c.bf16 %v533, %v524
    %v642 = vpack.c.bf16 %v534, %v525
    %v643 = vpack.c.bf16 %v544, %v535
    %v644 = vpack.c.bf16 %v545, %v536
    %v645 = vpack.c.bf16 %v546, %v537
    %v646 = vpack.c.bf16 %v547, %v538
    %v647 = vpack.c.bf16 %v548, %v539
    %v648 = vpack.c.bf16 %v549, %v540
    %v649 = vpack.c.bf16 %v550, %v541
    %v650 = vpack.c.bf16 %v551, %v542
    %v651 = vpack.c.bf16 %v552, %v543
    %v652 = vpack.c.bf16 %v562, %v553
    %v653 = vpack.c.bf16 %v563, %v554
    %v654 = vpack.c.bf16 %v564, %v555
    %v655 = vpack.c.bf16 %v565, %v556
    %v656 = vpack.c.bf16 %v566, %v557
    %v657 = vpack.c.bf16 %v567, %v558
    %v658 = vpack.c.bf16 %v568, %v559
    %v659 = vpack.c.bf16 %v569, %v560
    %v660 = vpack.c.bf16 %v570, %v561
    %v661 = vpack.c.bf16 %v580, %v571
    %v662 = vpack.c.bf16 %v581, %v572
    %v663 = vpack.c.bf16 %v582, %v573
    %v664 = vpack.c.bf16 %v583, %v574
    %v665 = vpack.c.bf16 %v584, %v575
    %v666 = vpack.c.bf16 %v585, %v576
    %v667 = vpack.c.bf16 %v586, %v577
    %v668 = vpack.c.bf16 %v587, %v578
    %v669 = vpack.c.bf16 %v588, %v579
    %v670 = vpack.c.bf16 %v598, %v589
    %v671 = vpack.c.bf16 %v599, %v590
    %v672 = vpack.c.bf16 %v600, %v591
    %v673 = vpack.c.bf16 %v601, %v592
    %v674 = vpack.c.bf16 %v602, %v593
    %v675 = vpack.c.bf16 %v603, %v594
    %v676 = vpack.c.bf16 %v604, %v595
    %v677 = vpack.c.bf16 %v605, %v596
    %v678 = vpack.c.bf16 %v606, %v597
    %v679 = vld [vmem:[%s1] sm:$0xf]
    %v680 = vld [vmem:[%s1 + $0x4] sm:$0xf]
    %v681 = vld [vmem:[%s1 + $0x8] sm:$0xf]
    %v682 = vld [vmem:[%s1 + $0xc] sm:$0xf]
    %v683 = vld [vmem:[%s1 + $0x10] sm:$0xf]
    %v684 = vld [vmem:[%s1 + $0x14] sm:$0xf]
    %v685 = vld [vmem:[%s1 + $0x18] sm:$0xf]
    %v686 = vld [vmem:[%s1 + $0x1c] sm:$0xf]
    %v687 = vld [vmem:[%s1 + $0x20] sm:$0xf]
    %v688 = vld [vmem:[%s1 + $0x24] sm:$0xf]
    %v689 = vld [vmem:[%s1 + $0x28] sm:$0xf]
    %v690 = vld [vmem:[%s1 + $0x2c] sm:$0xf]
    %v691 = vld [vmem:[%s1 + $0x30] sm:$0xf]
    %v692 = vld [vmem:[%s1 + $0x34] sm:$0xf]
    %v693 = vld [vmem:[%s1 + $0x38] sm:$0xf]
    %v694 = vld [vmem:[%s1 + $0x3c] sm:$0xf]
    %v695 = vld [vmem:[%s1 + $0x40] sm:$0xf]
    %v696 = vld [vmem:[%s1 + $0x44] sm:$0xf]
    %v697 = vld [vmem:[%s1 + $0x48] sm:$0xf]
    %v698 = vld [vmem:[%s1 + $0x4c] sm:$0xf]
    %v699 = vld [vmem:[%s1 + $0x50] sm:$0xf]
    %v700 = vld [vmem:[%s1 + $0x54] sm:$0xf]
    %v701 = vld [vmem:[%s1 + $0x58] sm:$0xf]
    %v702 = vld [vmem:[%s1 + $0x5c] sm:$0xf]
    %v703 = vld [vmem:[%s1 + $0x60] sm:$0xf]
    %v704 = vld [vmem:[%s1 + $0x64] sm:$0xf]
    %v705 = vld [vmem:[%s1 + $0x68] sm:$0xf]
    %v706 = vld [vmem:[%s1 + $0x6c] sm:$0xf]
    %v707 = vld [vmem:[%s1 + $0x70] sm:$0xf]
    %v708 = vld [vmem:[%s1 + $0x74] sm:$0xf]
    %v709 = vld [vmem:[%s1 + $0x78] sm:$0xf]
    %v710 = vld [vmem:[%s1 + $0x7c] sm:$0xf]
    %v711 = vld [vmem:[%s1 + $0x80] sm:$0xf]
    %v712 = vld [vmem:[%s1 + $0x84] sm:$0xf]
    %v713 = vld [vmem:[%s1 + $0x88] sm:$0xf]
    %v714 = vld [vmem:[%s1 + $0x8c] sm:$0xf]
    %v715 = vld [vmem:[%s1 + $0x90] sm:$0xf]
    %v716 = vld [vmem:[%s1 + $0x94] sm:$0xf]
    %v717 = vld [vmem:[%s1 + $0x98] sm:$0xf]
    %v718 = vld [vmem:[%s1 + $0x9c] sm:$0xf]
    %v719 = vld [vmem:[%s1 + $0xa0] sm:$0xf]
    %v720 = vld [vmem:[%s1 + $0xa4] sm:$0xf]
    %v721 = vld [vmem:[%s1 + $0xa8] sm:$0xf]
    %v722 = vld [vmem:[%s1 + $0xac] sm:$0xf]
    %v723 = vld [vmem:[%s1 + $0xb0] sm:$0xf]
    %v724 = vld [vmem:[%s1 + $0xb4] sm:$0xf]
    %v725 = vld [vmem:[%s1 + $0xb8] sm:$0xf]
    %v726 = vld [vmem:[%s1 + $0xbc] sm:$0xf]
    %v727 = vld [vmem:[%s1 + $0xc0] sm:$0xf]
    %v728 = vld [vmem:[%s1 + $0xc4] sm:$0xf]
    %v729 = vld [vmem:[%s1 + $0xc8] sm:$0xf]
    %v730 = vld [vmem:[%s1 + $0xcc] sm:$0xf]
    %v731 = vld [vmem:[%s1 + $0xd0] sm:$0xf]
    %v732 = vld [vmem:[%s1 + $0xd4] sm:$0xf]
    %v733 = vld [vmem:[%s1 + $0xd8] sm:$0xf]
    %v734 = vld [vmem:[%s1 + $0xdc] sm:$0xf]
    %v735 = vld [vmem:[%s1 + $0xe0] sm:$0xf]
    %v736 = vld [vmem:[%s1 + $0xe4] sm:$0xf]
    %v737 = vld [vmem:[%s1 + $0xe8] sm:$0xf]
    %v738 = vld [vmem:[%s1 + $0xec] sm:$0xf]
    %v739 = vld [vmem:[%s1 + $0xf0] sm:$0xf]
    %v740 = vld [vmem:[%s1 + $0xf4] sm:$0xf]
    %v741 = vld [vmem:[%s1 + $0xf8] sm:$0xf]
    %v742 = vld [vmem:[%s1 + $0xfc] sm:$0xf]
    %v743 = vld [vmem:[%s1 + $0x100] sm:$0xf]
    %v744 = vld [vmem:[%s1 + $0x104] sm:$0xf]
    %v745 = vld [vmem:[%s1 + $0x108] sm:$0xf]
    %v746 = vld [vmem:[%s1 + $0x10c] sm:$0xf]
    %v747 = vld [vmem:[%s1 + $0x110] sm:$0xf]
    %v748 = vld [vmem:[%s1 + $0x114] sm:$0xf]
    %v749 = vld [vmem:[%s1 + $0x118] sm:$0xf]
    %v750 = vld [vmem:[%s1 + $0x11c] sm:$0xf]
    %v751 = vld [vmem:[%s1 + $0x120] sm:$0xf]
    %v752 = vld [vmem:[%s1 + $0x124] sm:$0xf]
    %v753 = vld [vmem:[%s1 + $0x128] sm:$0xf]
    %v754 = vld [vmem:[%s1 + $0x12c] sm:$0xf]
    %v755 = vld [vmem:[%s1 + $0x130] sm:$0xf]
    %v756 = vld [vmem:[%s1 + $0x134] sm:$0xf]
    %v757 = vld [vmem:[%s1 + $0x138] sm:$0xf]
    %v758 = vld [vmem:[%s1 + $0x13c] sm:$0xf]
    %v759 = vld [vmem:[%s1 + $0x140] sm:$0xf]
    %v760 = vld [vmem:[%s1 + $0x144] sm:$0xf]
    %v761 = vld [vmem:[%s1 + $0x148] sm:$0xf]
    %v762 = vld [vmem:[%s1 + $0x14c] sm:$0xf]
    %v763 = vld [vmem:[%s1 + $0x150] sm:$0xf]
    %v764 = vld [vmem:[%s1 + $0x154] sm:$0xf]
    %v765 = vld [vmem:[%s1 + $0x158] sm:$0xf]
    %v766 = vld [vmem:[%s1 + $0x15c] sm:$0xf]
    %v767 = vld [vmem:[%s1 + $0x160] sm:$0xf]
    %v768 = vld [vmem:[%s1 + $0x164] sm:$0xf]
    %v769 = vld [vmem:[%s1 + $0x168] sm:$0xf]
    %v770 = vld [vmem:[%s1 + $0x16c] sm:$0xf]
    %v771 = vld [vmem:[%s1 + $0x170] sm:$0xf]
    %v772 = vld [vmem:[%s1 + $0x174] sm:$0xf]
    %v773 = vld [vmem:[%s1 + $0x178] sm:$0xf]
    %v774 = vld [vmem:[%s1 + $0x17c] sm:$0xf]
    %v775 = vld [vmem:[%s1 + $0x180] sm:$0xf]
    %v776 = vld [vmem:[%s1 + $0x184] sm:$0xf]
    %v777 = vld [vmem:[%s1 + $0x188] sm:$0xf]
    %v778 = vld [vmem:[%s1 + $0x18c] sm:$0xf]
    %v779 = vld [vmem:[%s1 + $0x190] sm:$0xf]
    %v780 = vld [vmem:[%s1 + $0x194] sm:$0xf]
    %v781 = vld [vmem:[%s1 + $0x198] sm:$0xf]
    %v782 = vld [vmem:[%s1 + $0x19c] sm:$0xf]
    %v783 = vld [vmem:[%s1 + $0x1a0] sm:$0xf]
    %v784 = vld [vmem:[%s1 + $0x1a4] sm:$0xf]
    %v785 = vld [vmem:[%s1 + $0x1a8] sm:$0xf]
    %v786 = vld [vmem:[%s1 + $0x1ac] sm:$0xf]
    %v787 = vld [vmem:[%s1 + $0x1b0] sm:$0xf]
    %v788 = vld [vmem:[%s1 + $0x1b4] sm:$0xf]
    %v789 = vld [vmem:[%s1 + $0x1b8] sm:$0xf]
    %v790 = vld [vmem:[%s1 + $0x1bc] sm:$0xf]
    %v791 = vld [vmem:[%s1 + $0x1c0] sm:$0xf]
    %v792 = vld [vmem:[%s1 + $0x1c4] sm:$0xf]
    %v793 = vld [vmem:[%s1 + $0x1c8] sm:$0xf]
    %v794 = vld [vmem:[%s1 + $0x1cc] sm:$0xf]
    %v795 = vld [vmem:[%s1 + $0x1d0] sm:$0xf]
    %v796 = vld [vmem:[%s1 + $0x1d4] sm:$0xf]
    %v797 = vld [vmem:[%s1 + $0x1d8] sm:$0xf]
    %v798 = vld [vmem:[%s1 + $0x1dc] sm:$0xf]
    %v799 = vld [vmem:[%s1 + $0x1e0] sm:$0xf]
    %v800 = vld [vmem:[%s1 + $0x1e4] sm:$0xf]
    %v801 = vld [vmem:[%s1 + $0x1e8] sm:$0xf]
    %v802 = vld [vmem:[%s1 + $0x1ec] sm:$0xf]
    %v803 = vld [vmem:[%s1 + $0x1f0] sm:$0xf]
    %v804 = vld [vmem:[%s1 + $0x1f4] sm:$0xf]
    %v805 = vld [vmem:[%s1 + $0x1f8] sm:$0xf]
    %v806 = vld [vmem:[%s1 + $0x1fc] sm:$0xf]
    %v807 = vld [vmem:[%s1 + $0x200] sm:$0xf]
    %v808 = vld [vmem:[%s1 + $0x204] sm:$0xf]
    %v809 = vld [vmem:[%s1 + $0x208] sm:$0xf]
    %v810 = vld [vmem:[%s1 + $0x20c] sm:$0xf]
    %v811 = vld [vmem:[%s1 + $0x210] sm:$0xf]
    %v812 = vld [vmem:[%s1 + $0x214] sm:$0xf]
    %v813 = vld [vmem:[%s1 + $0x218] sm:$0xf]
    %v814 = vld [vmem:[%s1 + $0x21c] sm:$0xf]
    %v815 = vld [vmem:[%s1 + $0x220] sm:$0xf]
    %v816 = vld [vmem:[%s1 + $0x224] sm:$0xf]
    %v817 = vld [vmem:[%s1 + $0x228] sm:$0xf]
    %v818 = vld [vmem:[%s1 + $0x22c] sm:$0xf]
    %v819 = vld [vmem:[%s1 + $0x230] sm:$0xf]
    %v820 = vld [vmem:[%s1 + $0x234] sm:$0xf]
    %v821 = vld [vmem:[%s1 + $0x238] sm:$0xf]
    %v822 = vld [vmem:[%s1 + $0x23c] sm:$0xf]
    %v967 = vunpack.c.l.b16 %v679
    %v968 = vunpack.c.l.b16 %v680
    %v969 = vunpack.c.l.b16 %v681
    %v970 = vunpack.c.l.b16 %v682
    %v971 = vunpack.c.l.b16 %v683
    %v972 = vunpack.c.l.b16 %v684
    %v973 = vunpack.c.l.b16 %v685
    %v974 = vunpack.c.l.b16 %v686
    %v975 = vunpack.c.l.b16 %v687
    %v976 = vunpack.c.l.b16 %v688
    %v977 = vunpack.c.l.b16 %v689
    %v978 = vunpack.c.l.b16 %v690
    %v979 = vunpack.c.l.b16 %v691
    %v980 = vunpack.c.l.b16 %v692
    %v981 = vunpack.c.l.b16 %v693
    %v982 = vunpack.c.l.b16 %v694
    %v983 = vunpack.c.l.b16 %v695
    %v984 = vunpack.c.l.b16 %v696
    %v985 = vunpack.c.l.b16 %v697
    %v986 = vunpack.c.l.b16 %v698
    %v987 = vunpack.c.l.b16 %v699
    %v988 = vunpack.c.l.b16 %v700
    %v989 = vunpack.c.l.b16 %v701
    %v990 = vunpack.c.l.b16 %v702
    %v991 = vunpack.c.l.b16 %v703
    %v992 = vunpack.c.l.b16 %v704
    %v993 = vunpack.c.l.b16 %v705
    %v994 = vunpack.c.l.b16 %v706
    %v995 = vunpack.c.l.b16 %v707
    %v996 = vunpack.c.l.b16 %v708
    %v997 = vunpack.c.l.b16 %v709
    %v998 = vunpack.c.l.b16 %v710
    %v999 = vunpack.c.l.b16 %v711
    %v1000 = vunpack.c.l.b16 %v712
    %v1001 = vunpack.c.l.b16 %v713
    %v1002 = vunpack.c.l.b16 %v714
    %v1003 = vunpack.c.l.b16 %v715
    %v1004 = vunpack.c.l.b16 %v716
    %v1005 = vunpack.c.l.b16 %v717
    %v1006 = vunpack.c.l.b16 %v718
    %v1007 = vunpack.c.l.b16 %v719
    %v1008 = vunpack.c.l.b16 %v720
    %v1009 = vunpack.c.l.b16 %v721
    %v1010 = vunpack.c.l.b16 %v722
    %v1011 = vunpack.c.l.b16 %v723
    %v1012 = vunpack.c.l.b16 %v724
    %v1013 = vunpack.c.l.b16 %v725
    %v1014 = vunpack.c.l.b16 %v726
    %v1015 = vunpack.c.l.b16 %v727
    %v1016 = vunpack.c.l.b16 %v728
    %v1017 = vunpack.c.l.b16 %v729
    %v1018 = vunpack.c.l.b16 %v730
    %v1019 = vunpack.c.l.b16 %v731
    %v1020 = vunpack.c.l.b16 %v732
    %v1021 = vunpack.c.l.b16 %v733
    %v1022 = vunpack.c.l.b16 %v734
    %v1023 = vunpack.c.l.b16 %v735
    %v1024 = vunpack.c.l.b16 %v736
    %v1025 = vunpack.c.l.b16 %v737
    %v1026 = vunpack.c.l.b16 %v738
    %v1027 = vunpack.c.l.b16 %v739
    %v1028 = vunpack.c.l.b16 %v740
    %v1029 = vunpack.c.l.b16 %v741
    %v1030 = vunpack.c.l.b16 %v742
    %v1031 = vunpack.c.l.b16 %v743
    %v1032 = vunpack.c.l.b16 %v744
    %v1033 = vunpack.c.l.b16 %v745
    %v1034 = vunpack.c.l.b16 %v746
    %v1035 = vunpack.c.l.b16 %v747
    %v1036 = vunpack.c.l.b16 %v748
    %v1037 = vunpack.c.l.b16 %v749
    %v1038 = vunpack.c.l.b16 %v750
    %v1039 = vunpack.c.l.b16 %v751
    %v1040 = vunpack.c.l.b16 %v752
    %v1041 = vunpack.c.l.b16 %v753
    %v1042 = vunpack.c.l.b16 %v754
    %v1043 = vunpack.c.l.b16 %v755
    %v1044 = vunpack.c.l.b16 %v756
    %v1045 = vunpack.c.l.b16 %v757
    %v1046 = vunpack.c.l.b16 %v758
    %v1047 = vunpack.c.l.b16 %v759
    %v1048 = vunpack.c.l.b16 %v760
    %v1049 = vunpack.c.l.b16 %v761
    %v1050 = vunpack.c.l.b16 %v762
    %v1051 = vunpack.c.l.b16 %v763
    %v1052 = vunpack.c.l.b16 %v764
    %v1053 = vunpack.c.l.b16 %v765
    %v1054 = vunpack.c.l.b16 %v766
    %v1055 = vunpack.c.l.b16 %v767
    %v1056 = vunpack.c.l.b16 %v768
    %v1057 = vunpack.c.l.b16 %v769
    %v1058 = vunpack.c.l.b16 %v770
    %v1059 = vunpack.c.l.b16 %v771
    %v1060 = vunpack.c.l.b16 %v772
    %v1061 = vunpack.c.l.b16 %v773
    %v1062 = vunpack.c.l.b16 %v774
    %v1063 = vunpack.c.l.b16 %v775
    %v1064 = vunpack.c.l.b16 %v776
    %v1065 = vunpack.c.l.b16 %v777
    %v1066 = vunpack.c.l.b16 %v778
    %v1067 = vunpack.c.l.b16 %v779
    %v1068 = vunpack.c.l.b16 %v780
    %v1069 = vunpack.c.l.b16 %v781
    %v1070 = vunpack.c.l.b16 %v782
    %v1071 = vunpack.c.l.b16 %v783
    %v1072 = vunpack.c.l.b16 %v784
    %v1073 = vunpack.c.l.b16 %v785
    %v1074 = vunpack.c.l.b16 %v786
    %v1075 = vunpack.c.l.b16 %v787
    %v1076 = vunpack.c.l.b16 %v788
    %v1077 = vunpack.c.l.b16 %v789
    %v1078 = vunpack.c.l.b16 %v790
    %v1079 = vunpack.c.l.b16 %v791
    %v1080 = vunpack.c.l.b16 %v792
    %v1081 = vunpack.c.l.b16 %v793
    %v1082 = vunpack.c.l.b16 %v794
    %v1083 = vunpack.c.l.b16 %v795
    %v1084 = vunpack.c.l.b16 %v796
    %v1085 = vunpack.c.l.b16 %v797
    %v1086 = vunpack.c.l.b16 %v798
    %v1087 = vunpack.c.l.b16 %v799
    %v1088 = vunpack.c.l.b16 %v800
    %v1089 = vunpack.c.l.b16 %v801
    %v1090 = vunpack.c.l.b16 %v802
    %v1091 = vunpack.c.l.b16 %v803
    %v1092 = vunpack.c.l.b16 %v804
    %v1093 = vunpack.c.l.b16 %v805
    %v1094 = vunpack.c.l.b16 %v806
    %v1095 = vunpack.c.l.b16 %v807
    %v1096 = vunpack.c.l.b16 %v808
    %v1097 = vunpack.c.l.b16 %v809
    %v1098 = vunpack.c.l.b16 %v810
    %v1099 = vunpack.c.l.b16 %v811
    %v1100 = vunpack.c.l.b16 %v812
    %v1101 = vunpack.c.l.b16 %v813
    %v1102 = vunpack.c.l.b16 %v814
    %v1103 = vunpack.c.l.b16 %v815
    %v1104 = vunpack.c.l.b16 %v816
    %v1105 = vunpack.c.l.b16 %v817
    %v1106 = vunpack.c.l.b16 %v818
    %v1107 = vunpack.c.l.b16 %v819
    %v1108 = vunpack.c.l.b16 %v820
    %v1109 = vunpack.c.l.b16 %v821
    %v1110 = vunpack.c.l.b16 %v822
    %v1111 = vpack.c.b16 %v968, %v967
    %v1112 = vpack.c.b16 %v970, %v969
    %v1113 = vpack.c.b16 %v972, %v971
    %v1114 = vpack.c.b16 %v974, %v973
    %v1115 = vpack.c.b16 %v976, %v975
    %v1116 = vpack.c.b16 %v978, %v977
    %v1117 = vpack.c.b16 %v980, %v979
    %v1118 = vpack.c.b16 %v982, %v981
    %v1119 = vpack.c.b16 %v984, %v983
    %v1120 = vpack.c.b16 %v986, %v985
    %v1121 = vpack.c.b16 %v988, %v987
    %v1122 = vpack.c.b16 %v990, %v989
    %v1123 = vpack.c.b16 %v992, %v991
    %v1124 = vpack.c.b16 %v994, %v993
    %v1125 = vpack.c.b16 %v996, %v995
    %v1126 = vpack.c.b16 %v998, %v997
    %v1127 = vpack.c.b16 %v1000, %v999
    %v1128 = vpack.c.b16 %v1002, %v1001
    %v1129 = vpack.c.b16 %v1004, %v1003
    %v1130 = vpack.c.b16 %v1006, %v1005
    %v1131 = vpack.c.b16 %v1008, %v1007
    %v1132 = vpack.c.b16 %v1010, %v1009
    %v1133 = vpack.c.b16 %v1012, %v1011
    %v1134 = vpack.c.b16 %v1014, %v1013
    %v1135 = vpack.c.b16 %v1016, %v1015
    %v1136 = vpack.c.b16 %v1018, %v1017
    %v1137 = vpack.c.b16 %v1020, %v1019
    %v1138 = vpack.c.b16 %v1022, %v1021
    %v1139 = vpack.c.b16 %v1024, %v1023
    %v1140 = vpack.c.b16 %v1026, %v1025
    %v1141 = vpack.c.b16 %v1028, %v1027
    %v1142 = vpack.c.b16 %v1030, %v1029
    %v1143 = vpack.c.b16 %v1032, %v1031
    %v1144 = vpack.c.b16 %v1034, %v1033
    %v1145 = vpack.c.b16 %v1036, %v1035
    %v1146 = vpack.c.b16 %v1038, %v1037
    %v1147 = vpack.c.b16 %v1040, %v1039
    %v1148 = vpack.c.b16 %v1042, %v1041
    %v1149 = vpack.c.b16 %v1044, %v1043
    %v1150 = vpack.c.b16 %v1046, %v1045
    %v1151 = vpack.c.b16 %v1048, %v1047
    %v1152 = vpack.c.b16 %v1050, %v1049
    %v1153 = vpack.c.b16 %v1052, %v1051
    %v1154 = vpack.c.b16 %v1054, %v1053
    %v1155 = vpack.c.b16 %v1056, %v1055
    %v1156 = vpack.c.b16 %v1058, %v1057
    %v1157 = vpack.c.b16 %v1060, %v1059
    %v1158 = vpack.c.b16 %v1062, %v1061
    %v1159 = vpack.c.b16 %v1064, %v1063
    %v1160 = vpack.c.b16 %v1066, %v1065
    %v1161 = vpack.c.b16 %v1068, %v1067
    %v1162 = vpack.c.b16 %v1070, %v1069
    %v1163 = vpack.c.b16 %v1072, %v1071
    %v1164 = vpack.c.b16 %v1074, %v1073
    %v1165 = vpack.c.b16 %v1076, %v1075
    %v1166 = vpack.c.b16 %v1078, %v1077
    %v1167 = vpack.c.b16 %v1080, %v1079
    %v1168 = vpack.c.b16 %v1082, %v1081
    %v1169 = vpack.c.b16 %v1084, %v1083
    %v1170 = vpack.c.b16 %v1086, %v1085
    %v1171 = vpack.c.b16 %v1088, %v1087
    %v1172 = vpack.c.b16 %v1090, %v1089
    %v1173 = vpack.c.b16 %v1092, %v1091
    %v1174 = vpack.c.b16 %v1094, %v1093
    %v1175 = vpack.c.b16 %v1096, %v1095
    %v1176 = vpack.c.b16 %v1098, %v1097
    %v1177 = vpack.c.b16 %v1100, %v1099
    %v1178 = vpack.c.b16 %v1102, %v1101
    %v1179 = vpack.c.b16 %v1104, %v1103
    %v1180 = vpack.c.b16 %v1106, %v1105
    %v1181 = vpack.c.b16 %v1108, %v1107
    %v1182 = vpack.c.b16 %v1110, %v1109
    %1255 = vmatprep.subr.bf16.mxu0 0
    %1256 = vmatpush1.bf16.msra.mxu0 %v1118
    %1257 = vmatprep.subr.bf16.mxu0 0
    %1258 = vmatpush1.bf16.msra.mxu0 %v1117
    %1259 = vmatprep.subr.bf16.mxu0 0
    %1260 = vmatpush1.bf16.msra.mxu0 %v1116
    %1261 = vmatprep.subr.bf16.mxu0 0
    %1262 = vmatpush1.bf16.msra.mxu0 %v1115
    %1263 = vmatprep.subr.bf16.mxu0 0
    %1264 = vmatpush1.bf16.msra.mxu0 %v1114
    %1265 = vmatprep.subr.bf16.mxu0 0
    %1266 = vmatpush1.bf16.msra.mxu0 %v1113
    %1267 = vmatprep.subr.bf16.mxu0 0
    %1268 = vmatpush1.bf16.msra.mxu0 %v1112
    %1269 = vmatprep.subr.bf16.mxu0 0
    %1270 = vmatpush1.bf16.msra.mxu0 %v1111
    %1271 = vmatprep.subr.bf16.mxu0 0
    %1272 = vmatpush2.bf16.msra.mxu0 %v1126
    %1273 = vmatprep.subr.bf16.mxu0 0
    %1274 = vmatpush2.bf16.msra.mxu0 %v1125
    %1275 = vmatprep.subr.bf16.mxu0 0
    %1276 = vmatpush2.bf16.msra.mxu0 %v1124
    %1277 = vmatprep.subr.bf16.mxu0 0
    %1278 = vmatpush2.bf16.msra.mxu0 %v1123
    %1279 = vmatprep.subr.bf16.mxu0 0
    %1280 = vmatpush2.bf16.msra.mxu0 %v1122
    %1281 = vmatprep.subr.bf16.mxu0 0
    %1282 = vmatpush2.bf16.msra.mxu0 %v1121
    %1283 = vmatprep.subr.bf16.mxu0 0
    %1284 = vmatpush2.bf16.msra.mxu0 %v1120
    %1285 = vmatprep.subr.bf16.mxu0 0
    %1286 = vmatpush2.bf16.msra.mxu0 %v1119
    %1287 = vmatprep.mubr.bf16.mxu0 %v608
    %1288 = vmatmul.mubr.bf16.gmra.mxu0 %v607
    %v1289 = vpop.f32.mrf.mxu0
    %v1290 = vadd.f32 0.0, %v1289
    %v1291 = vpop.f32.mrf.mxu0
    %v1292 = vpop.f32.mrf.mxu0
    %v1293 = vadd.f32 0.0, %v1292
    %v1294 = vpop.f32.mrf.mxu0
    %1295 = vmatprep.mubr.bf16.mxu0 %v617
    %1296 = vmatmul.mubr.bf16.gmra.mxu0 %v616
    %v1297 = vpop.f32.mrf.mxu0
    %v1298 = vadd.f32 0.0, %v1297
    %v1299 = vpop.f32.mrf.mxu0
    %v1300 = vpop.f32.mrf.mxu0
    %v1301 = vadd.f32 0.0, %v1300
    %v1302 = vpop.f32.mrf.mxu0
    %1303 = vmatprep.mubr.bf16.mxu0 %v626
    %1304 = vmatmul.mubr.bf16.gmra.mxu0 %v625
    %v1305 = vpop.f32.mrf.mxu0
    %v1306 = vadd.f32 0.0, %v1305
    %v1307 = vpop.f32.mrf.mxu0
    %v1308 = vpop.f32.mrf.mxu0
    %v1309 = vadd.f32 0.0, %v1308
    %v1310 = vpop.f32.mrf.mxu0
    %1311 = vmatprep.mubr.bf16.mxu0 %v635
    %1312 = vmatmul.mubr.bf16.gmra.mxu0 %v634
    %v1313 = vpop.f32.mrf.mxu0
    %v1314 = vadd.f32 0.0, %v1313
    %v1315 = vpop.f32.mrf.mxu0
    %v1316 = vpop.f32.mrf.mxu0
    %v1317 = vadd.f32 0.0, %v1316
    %v1318 = vpop.f32.mrf.mxu0
    %1319 = vmatprep.mubr.bf16.mxu0 %v644
    %1320 = vmatmul.mubr.bf16.gmra.mxu0 %v643
    %v1321 = vpop.f32.mrf.mxu0
    %v1322 = vadd.f32 0.0, %v1321
    %v1323 = vpop.f32.mrf.mxu0
    %v1324 = vpop.f32.mrf.mxu0
    %v1325 = vadd.f32 0.0, %v1324
    %v1326 = vpop.f32.mrf.mxu0
    %1327 = vmatprep.mubr.bf16.mxu0 %v653
    %1328 = vmatmul.mubr.bf16.gmra.mxu0 %v652
    %v1329 = vpop.f32.mrf.mxu0
    %v1330 = vadd.f32 0.0, %v1329
    %v1331 = vpop.f32.mrf.mxu0
    %v1332 = vpop.f32.mrf.mxu0
    %v1333 = vadd.f32 0.0, %v1332
    %v1334 = vpop.f32.mrf.mxu0
    %1335 = vmatprep.mubr.bf16.mxu0 %v662
    %1336 = vmatmul.mubr.bf16.gmra.mxu0 %v661
    %v1337 = vpop.f32.mrf.mxu0
    %v1338 = vadd.f32 0.0, %v1337
    %v1339 = vpop.f32.mrf.mxu0
    %v1340 = vpop.f32.mrf.mxu0
    %v1341 = vadd.f32 0.0, %v1340
    %v1342 = vpop.f32.mrf.mxu0
    %1343 = vmatprep.mubr.bf16.mxu0 %v671
    %1344 = vmatmul.mubr.bf16.gmra.mxu0 %v670
    %v1345 = vpop.f32.mrf.mxu0
    %v1346 = vadd.f32 0.0, %v1345
    %v1347 = vpop.f32.mrf.mxu0
    %v1348 = vpop.f32.mrf.mxu0
    %v1349 = vadd.f32 0.0, %v1348
    %v1350 = vpop.f32.mrf.mxu0
    %1351 = vdwg.mxu0
    %1352 = vmatprep.subr.bf16.mxu0 0
    %1353 = vmatpush1.bf16.msra.mxu0 %v1134
    %1354 = vmatprep.subr.bf16.mxu0 0
    %1355 = vmatpush1.bf16.msra.mxu0 %v1133
    %1356 = vmatprep.subr.bf16.mxu0 0
    %1357 = vmatpush1.bf16.msra.mxu0 %v1132
    %1358 = vmatprep.subr.bf16.mxu0 0
    %1359 = vmatpush1.bf16.msra.mxu0 %v1131
    %1360 = vmatprep.subr.bf16.mxu0 0
    %1361 = vmatpush1.bf16.msra.mxu0 %v1130
    %1362 = vmatprep.subr.bf16.mxu0 0
    %1363 = vmatpush1.bf16.msra.mxu0 %v1129
    %1364 = vmatprep.subr.bf16.mxu0 0
    %1365 = vmatpush1.bf16.msra.mxu0 %v1128
    %1366 = vmatprep.subr.bf16.mxu0 0
    %1367 = vmatpush1.bf16.msra.mxu0 %v1127
    %1368 = vmatprep.subr.bf16.mxu0 0
    %1369 = vmatpush2.bf16.msra.mxu0 %v1142
    %1370 = vmatprep.subr.bf16.mxu0 0
    %1371 = vmatpush2.bf16.msra.mxu0 %v1141
    %1372 = vmatprep.subr.bf16.mxu0 0
    %1373 = vmatpush2.bf16.msra.mxu0 %v1140
    %1374 = vmatprep.subr.bf16.mxu0 0
    %1375 = vmatpush2.bf16.msra.mxu0 %v1139
    %1376 = vmatprep.subr.bf16.mxu0 0
    %1377 = vmatpush2.bf16.msra.mxu0 %v1138
    %1378 = vmatprep.subr.bf16.mxu0 0
    %1379 = vmatpush2.bf16.msra.mxu0 %v1137
    %1380 = vmatprep.subr.bf16.mxu0 0
    %1381 = vmatpush2.bf16.msra.mxu0 %v1136
    %1382 = vmatprep.subr.bf16.mxu0 0
    %1383 = vmatpush2.bf16.msra.mxu0 %v1135
    %1384 = vmatprep.mubr.bf16.mxu0 %v610
    %1385 = vmatmul.mubr.bf16.gmra.mxu0 %v609
    %v1386 = vpop.f32.mrf.mxu0
    %v1387 = vadd.f32 %v1290, %v1386
    %v1388 = vpop.f32.mrf.mxu0
    %v1389 = vpop.f32.mrf.mxu0
    %v1390 = vadd.f32 %v1293, %v1389
    %v1391 = vpop.f32.mrf.mxu0
    %1392 = vmatprep.mubr.bf16.mxu0 %v619
    %1393 = vmatmul.mubr.bf16.gmra.mxu0 %v618
    %v1394 = vpop.f32.mrf.mxu0
    %v1395 = vadd.f32 %v1298, %v1394
    %v1396 = vpop.f32.mrf.mxu0
    %v1397 = vpop.f32.mrf.mxu0
    %v1398 = vadd.f32 %v1301, %v1397
    %v1399 = vpop.f32.mrf.mxu0
    %1400 = vmatprep.mubr.bf16.mxu0 %v628
    %1401 = vmatmul.mubr.bf16.gmra.mxu0 %v627
    %v1402 = vpop.f32.mrf.mxu0
    %v1403 = vadd.f32 %v1306, %v1402
    %v1404 = vpop.f32.mrf.mxu0
    %v1405 = vpop.f32.mrf.mxu0
    %v1406 = vadd.f32 %v1309, %v1405
    %v1407 = vpop.f32.mrf.mxu0
    %1408 = vmatprep.mubr.bf16.mxu0 %v637
    %1409 = vmatmul.mubr.bf16.gmra.mxu0 %v636
    %v1410 = vpop.f32.mrf.mxu0
    %v1411 = vadd.f32 %v1314, %v1410
    %v1412 = vpop.f32.mrf.mxu0
    %v1413 = vpop.f32.mrf.mxu0
    %v1414 = vadd.f32 %v1317, %v1413
    %v1415 = vpop.f32.mrf.mxu0
    %1416 = vmatprep.mubr.bf16.mxu0 %v646
    %1417 = vmatmul.mubr.bf16.gmra.mxu0 %v645
    %v1418 = vpop.f32.mrf.mxu0
    %v1419 = vadd.f32 %v1322, %v1418
    %v1420 = vpop.f32.mrf.mxu0
    %v1421 = vpop.f32.mrf.mxu0
    %v1422 = vadd.f32 %v1325, %v1421
    %v1423 = vpop.f32.mrf.mxu0
    %1424 = vmatprep.mubr.bf16.mxu0 %v655
    %1425 = vmatmul.mubr.bf16.gmra.mxu0 %v654
    %v1426 = vpop.f32.mrf.mxu0
    %v1427 = vadd.f32 %v1330, %v1426
    %v1428 = vpop.f32.mrf.mxu0
    %v1429 = vpop.f32.mrf.mxu0
    %v1430 = vadd.f32 %v1333, %v1429
    %v1431 = vpop.f32.mrf.mxu0
    %1432 = vmatprep.mubr.bf16.mxu0 %v664
    %1433 = vmatmul.mubr.bf16.gmra.mxu0 %v663
    %v1434 = vpop.f32.mrf.mxu0
    %v1435 = vadd.f32 %v1338, %v1434
    %v1436 = vpop.f32.mrf.mxu0
    %v1437 = vpop.f32.mrf.mxu0
    %v1438 = vadd.f32 %v1341, %v1437
    %v1439 = vpop.f32.mrf.mxu0
    %1440 = vmatprep.mubr.bf16.mxu0 %v673
    %1441 = vmatmul.mubr.bf16.gmra.mxu0 %v672
    %v1442 = vpop.f32.mrf.mxu0
    %v1443 = vadd.f32 %v1346, %v1442
    %v1444 = vpop.f32.mrf.mxu0
    %v1445 = vpop.f32.mrf.mxu0
    %v1446 = vadd.f32 %v1349, %v1445
    %v1447 = vpop.f32.mrf.mxu0
    %1448 = vdwg.mxu0
    %1449 = vmatprep.subr.bf16.mxu0 0
    %1450 = vmatpush1.bf16.msra.mxu0 %v1150
    %1451 = vmatprep.subr.bf16.mxu0 0
    %1452 = vmatpush1.bf16.msra.mxu0 %v1149
    %1453 = vmatprep.subr.bf16.mxu0 0
    %1454 = vmatpush1.bf16.msra.mxu0 %v1148
    %1455 = vmatprep.subr.bf16.mxu0 0
    %1456 = vmatpush1.bf16.msra.mxu0 %v1147
    %1457 = vmatprep.subr.bf16.mxu0 0
    %1458 = vmatpush1.bf16.msra.mxu0 %v1146
    %1459 = vmatprep.subr.bf16.mxu0 0
    %1460 = vmatpush1.bf16.msra.mxu0 %v1145
    %1461 = vmatprep.subr.bf16.mxu0 0
    %1462 = vmatpush1.bf16.msra.mxu0 %v1144
    %1463 = vmatprep.subr.bf16.mxu0 0
    %1464 = vmatpush1.bf16.msra.mxu0 %v1143
    %1465 = vmatprep.subr.bf16.mxu0 0
    %1466 = vmatpush2.bf16.msra.mxu0 %v1158
    %1467 = vmatprep.subr.bf16.mxu0 0
    %1468 = vmatpush2.bf16.msra.mxu0 %v1157
    %1469 = vmatprep.subr.bf16.mxu0 0
    %1470 = vmatpush2.bf16.msra.mxu0 %v1156
    %1471 = vmatprep.subr.bf16.mxu0 0
    %1472 = vmatpush2.bf16.msra.mxu0 %v1155
    %1473 = vmatprep.subr.bf16.mxu0 0
    %1474 = vmatpush2.bf16.msra.mxu0 %v1154
    %1475 = vmatprep.subr.bf16.mxu0 0
    %1476 = vmatpush2.bf16.msra.mxu0 %v1153
    %1477 = vmatprep.subr.bf16.mxu0 0
    %1478 = vmatpush2.bf16.msra.mxu0 %v1152
    %1479 = vmatprep.subr.bf16.mxu0 0
    %1480 = vmatpush2.bf16.msra.mxu0 %v1151
    %1481 = vmatprep.mubr.bf16.mxu0 %v612
    %1482 = vmatmul.mubr.bf16.gmra.mxu0 %v611
    %v1483 = vpop.f32.mrf.mxu0
    %v1484 = vadd.f32 %v1387, %v1483
    %v1485 = vpop.f32.mrf.mxu0
    %v1486 = vpop.f32.mrf.mxu0
    %v1487 = vadd.f32 %v1390, %v1486
    %v1488 = vpop.f32.mrf.mxu0
    %1489 = vmatprep.mubr.bf16.mxu0 %v621
    %1490 = vmatmul.mubr.bf16.gmra.mxu0 %v620
    %v1491 = vpop.f32.mrf.mxu0
    %v1492 = vadd.f32 %v1395, %v1491
    %v1493 = vpop.f32.mrf.mxu0
    %v1494 = vpop.f32.mrf.mxu0
    %v1495 = vadd.f32 %v1398, %v1494
    %v1496 = vpop.f32.mrf.mxu0
    %1497 = vmatprep.mubr.bf16.mxu0 %v630
    %1498 = vmatmul.mubr.bf16.gmra.mxu0 %v629
    %v1499 = vpop.f32.mrf.mxu0
    %v1500 = vadd.f32 %v1403, %v1499
    %v1501 = vpop.f32.mrf.mxu0
    %v1502 = vpop.f32.mrf.mxu0
    %v1503 = vadd.f32 %v1406, %v1502
    %v1504 = vpop.f32.mrf.mxu0
    %1505 = vmatprep.mubr.bf16.mxu0 %v639
    %1506 = vmatmul.mubr.bf16.gmra.mxu0 %v638
    %v1507 = vpop.f32.mrf.mxu0
    %v1508 = vadd.f32 %v1411, %v1507
    %v1509 = vpop.f32.mrf.mxu0
    %v1510 = vpop.f32.mrf.mxu0
    %v1511 = vadd.f32 %v1414, %v1510
    %v1512 = vpop.f32.mrf.mxu0
    %1513 = vmatprep.mubr.bf16.mxu0 %v648
    %1514 = vmatmul.mubr.bf16.gmra.mxu0 %v647
    %v1515 = vpop.f32.mrf.mxu0
    %v1516 = vadd.f32 %v1419, %v1515
    %v1517 = vpop.f32.mrf.mxu0
    %v1518 = vpop.f32.mrf.mxu0
    %v1519 = vadd.f32 %v1422, %v1518
    %v1520 = vpop.f32.mrf.mxu0
    %1521 = vmatprep.mubr.bf16.mxu0 %v657
    %1522 = vmatmul.mubr.bf16.gmra.mxu0 %v656
    %v1523 = vpop.f32.mrf.mxu0
    %v1524 = vadd.f32 %v1427, %v1523
    %v1525 = vpop.f32.mrf.mxu0
    %v1526 = vpop.f32.mrf.mxu0
    %v1527 = vadd.f32 %v1430, %v1526
    %v1528 = vpop.f32.mrf.mxu0
    %1529 = vmatprep.mubr.bf16.mxu0 %v666
    %1530 = vmatmul.mubr.bf16.gmra.mxu0 %v665
    %v1531 = vpop.f32.mrf.mxu0
    %v1532 = vadd.f32 %v1435, %v1531
    %v1533 = vpop.f32.mrf.mxu0
    %v1534 = vpop.f32.mrf.mxu0
    %v1535 = vadd.f32 %v1438, %v1534
    %v1536 = vpop.f32.mrf.mxu0
    %1537 = vmatprep.mubr.bf16.mxu0 %v675
    %1538 = vmatmul.mubr.bf16.gmra.mxu0 %v674
    %v1539 = vpop.f32.mrf.mxu0
    %v1540 = vadd.f32 %v1443, %v1539
    %v1541 = vpop.f32.mrf.mxu0
    %v1542 = vpop.f32.mrf.mxu0
    %v1543 = vadd.f32 %v1446, %v1542
    %v1544 = vpop.f32.mrf.mxu0
    %1545 = vdwg.mxu0
    %1546 = vmatprep.subr.bf16.mxu0 0
    %1547 = vmatpush1.bf16.msra.mxu0 %v1166
    %1548 = vmatprep.subr.bf16.mxu0 0
    %1549 = vmatpush1.bf16.msra.mxu0 %v1165
    %1550 = vmatprep.subr.bf16.mxu0 0
    %1551 = vmatpush1.bf16.msra.mxu0 %v1164
    %1552 = vmatprep.subr.bf16.mxu0 0
    %1553 = vmatpush1.bf16.msra.mxu0 %v1163
    %1554 = vmatprep.subr.bf16.mxu0 0
    %1555 = vmatpush1.bf16.msra.mxu0 %v1162
    %1556 = vmatprep.subr.bf16.mxu0 0
    %1557 = vmatpush1.bf16.msra.mxu0 %v1161
    %1558 = vmatprep.subr.bf16.mxu0 0
    %1559 = vmatpush1.bf16.msra.mxu0 %v1160
    %1560 = vmatprep.subr.bf16.mxu0 0
    %1561 = vmatpush1.bf16.msra.mxu0 %v1159
    %1562 = vmatprep.subr.bf16.mxu0 0
    %1563 = vmatpush2.bf16.msra.mxu0 %v1174
    %1564 = vmatprep.subr.bf16.mxu0 0
    %1565 = vmatpush2.bf16.msra.mxu0 %v1173
    %1566 = vmatprep.subr.bf16.mxu0 0
    %1567 = vmatpush2.bf16.msra.mxu0 %v1172
    %1568 = vmatprep.subr.bf16.mxu0 0
    %1569 = vmatpush2.bf16.msra.mxu0 %v1171
    %1570 = vmatprep.subr.bf16.mxu0 0
    %1571 = vmatpush2.bf16.msra.mxu0 %v1170
    %1572 = vmatprep.subr.bf16.mxu0 0
    %1573 = vmatpush2.bf16.msra.mxu0 %v1169
    %1574 = vmatprep.subr.bf16.mxu0 0
    %1575 = vmatpush2.bf16.msra.mxu0 %v1168
    %1576 = vmatprep.subr.bf16.mxu0 0
    %1577 = vmatpush2.bf16.msra.mxu0 %v1167
    %1578 = vmatprep.mubr.bf16.mxu0 %v614
    %1579 = vmatmul.mubr.bf16.gmra.mxu0 %v613
    %v1580 = vpop.f32.mrf.mxu0
    %v1581 = vadd.f32 %v1484, %v1580
    %v1582 = vpop.f32.mrf.mxu0
    %v1583 = vpop.f32.mrf.mxu0
    %v1584 = vadd.f32 %v1487, %v1583
    %v1585 = vpop.f32.mrf.mxu0
    %1586 = vmatprep.mubr.bf16.mxu0 %v623
    %1587 = vmatmul.mubr.bf16.gmra.mxu0 %v622
    %v1588 = vpop.f32.mrf.mxu0
    %v1589 = vadd.f32 %v1492, %v1588
    %v1590 = vpop.f32.mrf.mxu0
    %v1591 = vpop.f32.mrf.mxu0
    %v1592 = vadd.f32 %v1495, %v1591
    %v1593 = vpop.f32.mrf.mxu0
    %1594 = vmatprep.mubr.bf16.mxu0 %v632
    %1595 = vmatmul.mubr.bf16.gmra.mxu0 %v631
    %v1596 = vpop.f32.mrf.mxu0
    %v1597 = vadd.f32 %v1500, %v1596
    %v1598 = vpop.f32.mrf.mxu0
    %v1599 = vpop.f32.mrf.mxu0
    %v1600 = vadd.f32 %v1503, %v1599
    %v1601 = vpop.f32.mrf.mxu0
    %1602 = vmatprep.mubr.bf16.mxu0 %v641
    %1603 = vmatmul.mubr.bf16.gmra.mxu0 %v640
    %v1604 = vpop.f32.mrf.mxu0
    %v1605 = vadd.f32 %v1508, %v1604
    %v1606 = vpop.f32.mrf.mxu0
    %v1607 = vpop.f32.mrf.mxu0
    %v1608 = vadd.f32 %v1511, %v1607
    %v1609 = vpop.f32.mrf.mxu0
    %1610 = vmatprep.mubr.bf16.mxu0 %v650
    %1611 = vmatmul.mubr.bf16.gmra.mxu0 %v649
    %v1612 = vpop.f32.mrf.mxu0
    %v1613 = vadd.f32 %v1516, %v1612
    %v1614 = vpop.f32.mrf.mxu0
    %v1615 = vpop.f32.mrf.mxu0
    %v1616 = vadd.f32 %v1519, %v1615
    %v1617 = vpop.f32.mrf.mxu0
    %1618 = vmatprep.mubr.bf16.mxu0 %v659
    %1619 = vmatmul.mubr.bf16.gmra.mxu0 %v658
    %v1620 = vpop.f32.mrf.mxu0
    %v1621 = vadd.f32 %v1524, %v1620
    %v1622 = vpop.f32.mrf.mxu0
    %v1623 = vpop.f32.mrf.mxu0
    %v1624 = vadd.f32 %v1527, %v1623
    %v1625 = vpop.f32.mrf.mxu0
    %1626 = vmatprep.mubr.bf16.mxu0 %v668
    %1627 = vmatmul.mubr.bf16.gmra.mxu0 %v667
    %v1628 = vpop.f32.mrf.mxu0
    %v1629 = vadd.f32 %v1532, %v1628
    %v1630 = vpop.f32.mrf.mxu0
    %v1631 = vpop.f32.mrf.mxu0
    %v1632 = vadd.f32 %v1535, %v1631
    %v1633 = vpop.f32.mrf.mxu0
    %1634 = vmatprep.mubr.bf16.mxu0 %v677
    %1635 = vmatmul.mubr.bf16.gmra.mxu0 %v676
    %v1636 = vpop.f32.mrf.mxu0
    %v1637 = vadd.f32 %v1540, %v1636
    %v1638 = vpop.f32.mrf.mxu0
    %v1639 = vpop.f32.mrf.mxu0
    %v1640 = vadd.f32 %v1543, %v1639
    %v1641 = vpop.f32.mrf.mxu0
    %1642 = vdwg.mxu0
    %1643 = vmatprep.subr.bf16.mxu0 0
    %1644 = vmatpush1.bf16.msra.mxu0 %v1182
    %1645 = vmatprep.subr.bf16.mxu0 0
    %1646 = vmatpush1.bf16.msra.mxu0 %v1181
    %1647 = vmatprep.subr.bf16.mxu0 0
    %1648 = vmatpush1.bf16.msra.mxu0 %v1180
    %1649 = vmatprep.subr.bf16.mxu0 0
    %1650 = vmatpush1.bf16.msra.mxu0 %v1179
    %1651 = vmatprep.subr.bf16.mxu0 0
    %1652 = vmatpush1.bf16.msra.mxu0 %v1178
    %1653 = vmatprep.subr.bf16.mxu0 0
    %1654 = vmatpush1.bf16.msra.mxu0 %v1177
    %1655 = vmatprep.subr.bf16.mxu0 0
    %1656 = vmatpush1.bf16.msra.mxu0 %v1176
    %1657 = vmatprep.subr.bf16.mxu0 0
    %1658 = vmatpush1.bf16.msra.mxu0 %v1175
    %1659 = vmatprep.subr.bf16.mxu0 0
    %1660 = vmatpush2.bf16.msra.mxu0 0
    %1661 = vmatprep.subr.bf16.mxu0 0
    %1662 = vmatpush2.bf16.msra.mxu0 0
    %1663 = vmatprep.subr.bf16.mxu0 0
    %1664 = vmatpush2.bf16.msra.mxu0 0
    %1665 = vmatprep.subr.bf16.mxu0 0
    %1666 = vmatpush2.bf16.msra.mxu0 0
    %1667 = vmatprep.subr.bf16.mxu0 0
    %1668 = vmatpush2.bf16.msra.mxu0 0
    %1669 = vmatprep.subr.bf16.mxu0 0
    %1670 = vmatpush2.bf16.msra.mxu0 0
    %1671 = vmatprep.subr.bf16.mxu0 0
    %1672 = vmatpush2.bf16.msra.mxu0 0
    %1673 = vmatprep.subr.bf16.mxu0 0
    %1674 = vmatpush2.bf16.msra.mxu0 0
    %1675 = vmatprep.mubr.bf16.mxu0 0
    %1676 = vmatmul.mubr.bf16.gmra.mxu0 %v615
    %v1677 = vpop.f32.mrf.mxu0
    %v1678 = vadd.f32 %v1581, %v1677
    %v1679 = vpop.f32.mrf.mxu0
    %v1680 = vpop.f32.mrf.mxu0
    %v1681 = vadd.f32 %v1584, %v1680
    %v1682 = vpop.f32.mrf.mxu0
    %1683 = vmatprep.mubr.bf16.mxu0 0
    %1684 = vmatmul.mubr.bf16.gmra.mxu0 %v624
    %v1685 = vpop.f32.mrf.mxu0
    %v1686 = vadd.f32 %v1589, %v1685
    %v1687 = vpop.f32.mrf.mxu0
    %v1688 = vpop.f32.mrf.mxu0
    %v1689 = vadd.f32 %v1592, %v1688
    %v1690 = vpop.f32.mrf.mxu0
    %1691 = vmatprep.mubr.bf16.mxu0 0
    %1692 = vmatmul.mubr.bf16.gmra.mxu0 %v633
    %v1693 = vpop.f32.mrf.mxu0
    %v1694 = vadd.f32 %v1597, %v1693
    %v1695 = vpop.f32.mrf.mxu0
    %v1696 = vpop.f32.mrf.mxu0
    %v1697 = vadd.f32 %v1600, %v1696
    %v1698 = vpop.f32.mrf.mxu0
    %1699 = vmatprep.mubr.bf16.mxu0 0
    %1700 = vmatmul.mubr.bf16.gmra.mxu0 %v642
    %v1701 = vpop.f32.mrf.mxu0
    %v1702 = vadd.f32 %v1605, %v1701
    %v1703 = vpop.f32.mrf.mxu0
    %v1704 = vpop.f32.mrf.mxu0
    %v1705 = vadd.f32 %v1608, %v1704
    %v1706 = vpop.f32.mrf.mxu0
    %1707 = vmatprep.mubr.bf16.mxu0 0
    %1708 = vmatmul.mubr.bf16.gmra.mxu0 %v651
    %v1709 = vpop.f32.mrf.mxu0
    %v1710 = vadd.f32 %v1613, %v1709
    %v1711 = vpop.f32.mrf.mxu0
    %v1712 = vpop.f32.mrf.mxu0
    %v1713 = vadd.f32 %v1616, %v1712
    %v1714 = vpop.f32.mrf.mxu0
    %1715 = vmatprep.mubr.bf16.mxu0 0
    %1716 = vmatmul.mubr.bf16.gmra.mxu0 %v660
    %v1717 = vpop.f32.mrf.mxu0
    %v1718 = vadd.f32 %v1621, %v1717
    %v1719 = vpop.f32.mrf.mxu0
    %v1720 = vpop.f32.mrf.mxu0
    %v1721 = vadd.f32 %v1624, %v1720
    %v1722 = vpop.f32.mrf.mxu0
    %1723 = vmatprep.mubr.bf16.mxu0 0
    %1724 = vmatmul.mubr.bf16.gmra.mxu0 %v669
    %v1725 = vpop.f32.mrf.mxu0
    %v1726 = vadd.f32 %v1629, %v1725
    %v1727 = vpop.f32.mrf.mxu0
    %v1728 = vpop.f32.mrf.mxu0
    %v1729 = vadd.f32 %v1632, %v1728
    %v1730 = vpop.f32.mrf.mxu0
    %1731 = vmatprep.mubr.bf16.mxu0 0
    %1732 = vmatmul.mubr.bf16.gmra.mxu0 %v678
    %v1733 = vpop.f32.mrf.mxu0
    %v1734 = vadd.f32 %v1637, %v1733
    %v1735 = vpop.f32.mrf.mxu0
    %v1736 = vpop.f32.mrf.mxu0
    %v1737 = vadd.f32 %v1640, %v1736
    %v1738 = vpop.f32.mrf.mxu0
    %1739 = vdwg.mxu0
    %v1740 = vld [vmem:[%s2] sm:$0x1]
    %v1741 = vld [vmem:[%s3] sm:$0x1]
    %v1742 = vadd.f32 %v1678, %v1681
    %v1743 = vadd.f32 %v1742, %v1686
    %v1744 = vadd.f32 %v1743, %v1689
    %v1745 = vadd.f32 %v1744, %v1694
    %v1746 = vadd.f32 %v1745, %v1697
    %v1747 = vadd.f32 %v1746, %v1702
    %v1748 = vadd.f32 %v1747, %v1705
    %v1749 = vadd.f32 %v1748, %v1710
    %v1750 = vadd.f32 %v1749, %v1713
    %v1751 = vadd.f32 %v1750, %v1718
    %v1752 = vadd.f32 %v1751, %v1721
    %v1753 = vadd.f32 %v1752, %v1726
    %v1754 = vadd.f32 %v1753, %v1729
    %v1755 = vadd.f32 %v1754, %v1734
    %v1756 = vadd.f32 %v1755, %v1737
    %v1757 = vrot.slane %v1756, 4
    %v1758 = vadd.f32 %v1756, %v1757
    %v1759 = vrot.slane %v1758, 2
    %v1760 = vadd.f32 %v1758, %v1759
    %v1761 = vrot.slane %v1760, 1
    %v1762 = vadd.f32 %v1760, %v1761
    %v1763 = vmul.f32 %v1678, %v1678
    %v1764 = vmul.f32 %v1681, %v1681
    %v1765 = vmul.f32 %v1686, %v1686
    %v1766 = vmul.f32 %v1689, %v1689
    %v1767 = vmul.f32 %v1694, %v1694
    %v1768 = vmul.f32 %v1697, %v1697
    %v1769 = vmul.f32 %v1702, %v1702
    %v1770 = vmul.f32 %v1705, %v1705
    %v1771 = vmul.f32 %v1710, %v1710
    %v1772 = vmul.f32 %v1713, %v1713
    %v1773 = vmul.f32 %v1718, %v1718
    %v1774 = vmul.f32 %v1721, %v1721
    %v1775 = vmul.f32 %v1726, %v1726
    %v1776 = vmul.f32 %v1729, %v1729
    %v1777 = vmul.f32 %v1734, %v1734
    %v1778 = vmul.f32 %v1737, %v1737
    %v1779 = vadd.f32 %v1763, %v1764
    %v1780 = vadd.f32 %v1779, %v1765
    %v1781 = vadd.f32 %v1780, %v1766
    %v1782 = vadd.f32 %v1781, %v1767
    %v1783 = vadd.f32 %v1782, %v1768
    %v1784 = vadd.f32 %v1783, %v1769
    %v1785 = vadd.f32 %v1784, %v1770
    %v1786 = vadd.f32 %v1785, %v1771
    %v1787 = vadd.f32 %v1786, %v1772
    %v1788 = vadd.f32 %v1787, %v1773
    %v1789 = vadd.f32 %v1788, %v1774
    %v1790 = vadd.f32 %v1789, %v1775
    %v1791 = vadd.f32 %v1790, %v1776
    %v1792 = vadd.f32 %v1791, %v1777
    %v1793 = vadd.f32 %v1792, %v1778
    %v1794 = vrot.slane %v1793, 4
    %v1795 = vadd.f32 %v1793, %v1794
    %v1796 = vrot.slane %v1795, 2
    %v1797 = vadd.f32 %v1795, %v1796
    %v1798 = vrot.slane %v1797, 1
    %v1799 = vadd.f32 %v1797, %v1798
    %v1800 = vmul.f32 %v1762, 0.0078125
    %v1801 = vmul.f32 %v1799, 0.0078125
    %v1802 = vmul.f32 %v1800, %v1800
    %v1803 = vsub.f32 %v1801, %v1802
    %v1804 = vadd.f32 %v1803, 1e-05
    %v1805 = vrsqrt.pop %v1804
    %v1806 = vmul.f32 %v1740, %v1805
    %v1807 = vmul.f32 %v1800, %v1806
    %v1808 = vsub.f32 %v1741, %v1807
    %v1810 = vlaneseq
    %v1811 = vshrl.u32 %v1810, 7
    %v1812 = vsub.s32 0, %v1811
    %v1813 = vrot.slane %v1806, %v1812
    %v1815 = vmul.f32 %v1678, %v1813
    %v1816 = vmul.f32 %v1681, %v1813
    %v1817 = vmul.f32 %v1686, %v1813
    %v1818 = vmul.f32 %v1689, %v1813
    %v1819 = vmul.f32 %v1694, %v1813
    %v1820 = vmul.f32 %v1697, %v1813
    %v1821 = vmul.f32 %v1702, %v1813
    %v1822 = vmul.f32 %v1705, %v1813
    %v1823 = vmul.f32 %v1710, %v1813
    %v1824 = vmul.f32 %v1713, %v1813
    %v1825 = vmul.f32 %v1718, %v1813
    %v1826 = vmul.f32 %v1721, %v1813
    %v1827 = vmul.f32 %v1726, %v1813
    %v1828 = vmul.f32 %v1729, %v1813
    %v1829 = vmul.f32 %v1734, %v1813
    %v1830 = vmul.f32 %v1737, %v1813
    %v1832 = vlaneseq
    %v1833 = vshrl.u32 %v1832, 7
    %v1834 = vsub.s32 0, %v1833
    %v1835 = vrot.slane %v1808, %v1834
    %v1837 = vadd.f32 %v1815, %v1835
    %v1838 = vadd.f32 %v1816, %v1835
    %v1839 = vadd.f32 %v1817, %v1835
    %v1840 = vadd.f32 %v1818, %v1835
    %v1841 = vadd.f32 %v1819, %v1835
    %v1842 = vadd.f32 %v1820, %v1835
    %v1843 = vadd.f32 %v1821, %v1835
    %v1844 = vadd.f32 %v1822, %v1835
    %v1845 = vadd.f32 %v1823, %v1835
    %v1846 = vadd.f32 %v1824, %v1835
    %v1847 = vadd.f32 %v1825, %v1835
    %v1848 = vadd.f32 %v1826, %v1835
    %v1849 = vadd.f32 %v1827, %v1835
    %v1850 = vadd.f32 %v1828, %v1835
    %v1851 = vadd.f32 %v1829, %v1835
    %v1852 = vadd.f32 %v1830, %v1835
    %v1853 = vmax.f32 %v1837, 0.0
    %v1854 = vmax.f32 %v1838, 0.0
    %v1855 = vmax.f32 %v1839, 0.0
    %v1856 = vmax.f32 %v1840, 0.0
    %v1857 = vmax.f32 %v1841, 0.0
    %v1858 = vmax.f32 %v1842, 0.0
    %v1859 = vmax.f32 %v1843, 0.0
    %v1860 = vmax.f32 %v1844, 0.0
    %v1861 = vmax.f32 %v1845, 0.0
    %v1862 = vmax.f32 %v1846, 0.0
    %v1863 = vmax.f32 %v1847, 0.0
    %v1864 = vmax.f32 %v1848, 0.0
    %v1865 = vmax.f32 %v1849, 0.0
    %v1866 = vmax.f32 %v1850, 0.0
    %v1867 = vmax.f32 %v1851, 0.0
    %v1868 = vmax.f32 %v1852, 0.0
    %1869 = vst [vmem:[#allocation3] sm:$0xff] 0.0
    %1870 = vst [vmem:[#allocation3 + $0x240] sm:$0xff] 0.0
    %1871 = vst [vmem:[#allocation3] sm:$0x1] 0.0
    %1872 = vst [vmem:[#allocation3 + $0x48] sm:$0x1] 0.0
    %1873 = vst [vmem:[#allocation3 + $0x90] sm:$0x1] 0.0
    %1874 = vst [vmem:[#allocation3 + $0xd8] sm:$0x1] 0.0
    %1875 = vst [vmem:[#allocation3 + $0x120] sm:$0x1] 0.0
    %1876 = vst [vmem:[#allocation3 + $0x168] sm:$0x1] 0.0
    %1877 = vst [vmem:[#allocation3 + $0x1b0] sm:$0x1] 0.0
    %1878 = vst [vmem:[#allocation3 + $0x1f8] sm:$0x1] 0.0
    %1879 = vst [vmem:[#allocation3 + $0x240] sm:$0x1] 0.0
    %1880 = vst [vmem:[#allocation3 + $0x288] sm:$0x1] 0.0
    %1881 = vst [vmem:[#allocation3 + $0x2d0] sm:$0x1] 0.0
    %1882 = vst [vmem:[#allocation3 + $0x318] sm:$0x1] 0.0
    %1883 = vst [vmem:[#allocation3 + $0x360] sm:$0x1] 0.0
    %1884 = vst [vmem:[#allocation3 + $0x3a8] sm:$0x1] 0.0
    %1885 = vst [vmem:[#allocation3 + $0x3f0] sm:$0x1] 0.0
    %1886 = vst [vmem:[#allocation3 + $0x438] sm:$0x1] 0.0
    %v1901 = vrot.slane %v1853, 7
    %v1902 = vrot.slane %v1854, 7
    %v1903 = vrot.slane %v1855, 7
    %v1904 = vrot.slane %v1856, 7
    %v1905 = vrot.slane %v1857, 7
    %v1906 = vrot.slane %v1858, 7
    %v1907 = vrot.slane %v1859, 7
    %v1908 = vrot.slane %v1861, 7
    %v1909 = vrot.slane %v1862, 7
    %v1910 = vrot.slane %v1863, 7
    %v1911 = vrot.slane %v1864, 7
    %v1912 = vrot.slane %v1865, 7
    %v1913 = vrot.slane %v1866, 7
    %v1914 = vrot.slane %v1867, 7
    %s1929 = scalar_lea.vmem [#allocation3], 72
    %1930 = vst [vmem:[%s1929] sm:$0xfe] %v1901
    %1931 = vst [vmem:[%s1929 + $0x48] sm:$0xfe] %v1902
    %1932 = vst [vmem:[%s1929 + $0x90] sm:$0xfe] %v1903
    %1933 = vst [vmem:[%s1929 + $0xd8] sm:$0xfe] %v1904
    %1934 = vst [vmem:[%s1929 + $0x120] sm:$0xfe] %v1905
    %1935 = vst [vmem:[%s1929 + $0x168] sm:$0xfe] %v1906
    %1936 = vst [vmem:[%s1929 + $0x1b0] sm:$0xfe] %v1907
    %1937 = vst [vmem:[%s1929 + $0x240] sm:$0xfe] %v1908
    %1938 = vst [vmem:[%s1929 + $0x288] sm:$0xfe] %v1909
    %1939 = vst [vmem:[%s1929 + $0x2d0] sm:$0xfe] %v1910
    %1940 = vst [vmem:[%s1929 + $0x318] sm:$0xfe] %v1911
    %1941 = vst [vmem:[%s1929 + $0x360] sm:$0xfe] %v1912
    %1942 = vst [vmem:[%s1929 + $0x3a8] sm:$0xfe] %v1913
    %1943 = vst [vmem:[%s1929 + $0x3f0] sm:$0xfe] %v1914
    %1944 = vst [vmem:[#allocation3 + $0x8] sm:$0xff] 0.0
    %1945 = vst [vmem:[#allocation3 + $0x248] sm:$0xff] 0.0
    %1946 = vst [vmem:[%s1929 + $0x8] sm:$0xff] %v1853
    %1947 = vst [vmem:[%s1929 + $0x50] sm:$0xff] %v1854
    %1948 = vst [vmem:[%s1929 + $0x98] sm:$0xff] %v1855
    %1949 = vst [vmem:[%s1929 + $0xe0] sm:$0xff] %v1856
    %1950 = vst [vmem:[%s1929 + $0x128] sm:$0xff] %v1857
    %1951 = vst [vmem:[%s1929 + $0x170] sm:$0xff] %v1858
    %1952 = vst [vmem:[%s1929 + $0x1b8] sm:$0xff] %v1859
    %1953 = vst [vmem:[%s1929 + $0x248] sm:$0xff] %v1861
    %1954 = vst [vmem:[%s1929 + $0x290] sm:$0xff] %v1862
    %1955 = vst [vmem:[%s1929 + $0x2d8] sm:$0xff] %v1863
    %1956 = vst [vmem:[%s1929 + $0x320] sm:$0xff] %v1864
    %1957 = vst [vmem:[%s1929 + $0x368] sm:$0xff] %v1865
    %1958 = vst [vmem:[%s1929 + $0x3b0] sm:$0xff] %v1866
    %1959 = vst [vmem:[%s1929 + $0x3f8] sm:$0xff] %v1867
    %1960 = vst [vmem:[#allocation3 + $0x10] sm:$0xff] 0.0
    %1961 = vst [vmem:[#allocation3 + $0x250] sm:$0xff] 0.0
    %1962 = vst [vmem:[#allocation3 + $0x17] sm:$0x1] 0.0
    %1963 = vst [vmem:[#allocation3 + $0x5f] sm:$0x1] 0.0
    %1964 = vst [vmem:[#allocation3 + $0xa7] sm:$0x1] 0.0
    %1965 = vst [vmem:[#allocation3 + $0xef] sm:$0x1] 0.0
    %1966 = vst [vmem:[#allocation3 + $0x137] sm:$0x1] 0.0
    %1967 = vst [vmem:[#allocation3 + $0x17f] sm:$0x1] 0.0
    %1968 = vst [vmem:[#allocation3 + $0x1c7] sm:$0x1] 0.0
    %1969 = vst [vmem:[#allocation3 + $0x20f] sm:$0x1] 0.0
    %1970 = vst [vmem:[#allocation3 + $0x257] sm:$0x1] 0.0
    %1971 = vst [vmem:[#allocation3 + $0x29f] sm:$0x1] 0.0
    %1972 = vst [vmem:[#allocation3 + $0x2e7] sm:$0x1] 0.0
    %1973 = vst [vmem:[#allocation3 + $0x32f] sm:$0x1] 0.0
    %1974 = vst [vmem:[#allocation3 + $0x377] sm:$0x1] 0.0
    %1975 = vst [vmem:[#allocation3 + $0x3bf] sm:$0x1] 0.0
    %1976 = vst [vmem:[#allocation3 + $0x407] sm:$0x1] 0.0
    %1977 = vst [vmem:[#allocation3 + $0x44f] sm:$0x1] 0.0
    %v1978 = vrot.slane %v1853, 1
    %v1979 = vrot.slane %v1854, 1
    %v1980 = vrot.slane %v1855, 1
    %v1981 = vrot.slane %v1856, 1
    %v1982 = vrot.slane %v1857, 1
    %v1983 = vrot.slane %v1858, 1
    %v1984 = vrot.slane %v1859, 1
    %v1985 = vrot.slane %v1861, 1
    %v1986 = vrot.slane %v1862, 1
    %v1987 = vrot.slane %v1863, 1
    %v1988 = vrot.slane %v1864, 1
    %v1989 = vrot.slane %v1865, 1
    %v1990 = vrot.slane %v1866, 1
    %v1991 = vrot.slane %v1867, 1
    %2006 = vst [vmem:[%s1929 + $0x10] sm:$0x7f] %v1978
    %2007 = vst [vmem:[%s1929 + $0x58] sm:$0x7f] %v1979
    %2008 = vst [vmem:[%s1929 + $0xa0] sm:$0x7f] %v1980
    %2009 = vst [vmem:[%s1929 + $0xe8] sm:$0x7f] %v1981
    %2010 = vst [vmem:[%s1929 + $0x130] sm:$0x7f] %v1982
    %2011 = vst [vmem:[%s1929 + $0x178] sm:$0x7f] %v1983
    %2012 = vst [vmem:[%s1929 + $0x1c0] sm:$0x7f] %v1984
    %2013 = vst [vmem:[%s1929 + $0x250] sm:$0x7f] %v1985
    %2014 = vst [vmem:[%s1929 + $0x298] sm:$0x7f] %v1986
    %2015 = vst [vmem:[%s1929 + $0x2e0] sm:$0x7f] %v1987
    %2016 = vst [vmem:[%s1929 + $0x328] sm:$0x7f] %v1988
    %2017 = vst [vmem:[%s1929 + $0x370] sm:$0x7f] %v1989
    %2018 = vst [vmem:[%s1929 + $0x3b8] sm:$0x7f] %v1990
    %2019 = vst [vmem:[%s1929 + $0x400] sm:$0x7f] %v1991
    %2020 = vst [vmem:[#allocation3 + $0x18] sm:$0x1] 0.0
    %2021 = vst [vmem:[#allocation3 + $0x60] sm:$0x1] 0.0
    %2022 = vst [vmem:[#allocation3 + $0xa8] sm:$0x1] 0.0
    %2023 = vst [vmem:[#allocation3 + $0xf0] sm:$0x1] 0.0
    %2024 = vst [vmem:[#allocation3 + $0x138] sm:$0x1] 0.0
    %2025 = vst [vmem:[#allocation3 + $0x180] sm:$0x1] 0.0
    %2026 = vst [vmem:[#allocation3 + $0x1c8] sm:$0x1] 0.0
    %2027 = vst [vmem:[#allocation3 + $0x210] sm:$0x1] 0.0
    %2028 = vst [vmem:[#allocation3 + $0x258] sm:$0x1] 0.0
    %2029 = vst [vmem:[#allocation3 + $0x2a0] sm:$0x1] 0.0
    %2030 = vst [vmem:[#allocation3 + $0x2e8] sm:$0x1] 0.0
    %2031 = vst [vmem:[#allocation3 + $0x330] sm:$0x1] 0.0
    %2032 = vst [vmem:[#allocation3 + $0x378] sm:$0x1] 0.0
    %2033 = vst [vmem:[#allocation3 + $0x3c0] sm:$0x1] 0.0
    %2034 = vst [vmem:[#allocation3 + $0x408] sm:$0x1] 0.0
    %2035 = vst [vmem:[#allocation3 + $0x450] sm:$0x1] 0.0
    %v2038 = vrot.slane %v1860, 7
    %v2039 = vrot.slane %v1868, 7
    %2042 = vst [vmem:[#allocation3 + $0x18] sm:$0xfe] %v1901
    %2043 = vst [vmem:[#allocation3 + $0x60] sm:$0xfe] %v1902
    %2044 = vst [vmem:[#allocation3 + $0xa8] sm:$0xfe] %v1903
    %2045 = vst [vmem:[#allocation3 + $0xf0] sm:$0xfe] %v1904
    %2046 = vst [vmem:[#allocation3 + $0x138] sm:$0xfe] %v1905
    %2047 = vst [vmem:[#allocation3 + $0x180] sm:$0xfe] %v1906
    %2048 = vst [vmem:[#allocation3 + $0x1c8] sm:$0xfe] %v1907
    %2049 = vst [vmem:[#allocation3 + $0x210] sm:$0xfe] %v2038
    %2050 = vst [vmem:[#allocation3 + $0x258] sm:$0xfe] %v1908
    %2051 = vst [vmem:[#allocation3 + $0x2a0] sm:$0xfe] %v1909
    %2052 = vst [vmem:[#allocation3 + $0x2e8] sm:$0xfe] %v1910
    %2053 = vst [vmem:[#allocation3 + $0x330] sm:$0xfe] %v1911
    %2054 = vst [vmem:[#allocation3 + $0x378] sm:$0xfe] %v1912
    %2055 = vst [vmem:[#allocation3 + $0x3c0] sm:$0xfe] %v1913
    %2056 = vst [vmem:[#allocation3 + $0x408] sm:$0xfe] %v1914
    %2057 = vst [vmem:[#allocation3 + $0x450] sm:$0xfe] %v2039
    %2058 = vst [vmem:[#allocation3 + $0x20] sm:$0xff] %v1853
    %2059 = vst [vmem:[#allocation3 + $0x68] sm:$0xff] %v1854
    %2060 = vst [vmem:[#allocation3 + $0xb0] sm:$0xff] %v1855
    %2061 = vst [vmem:[#allocation3 + $0xf8] sm:$0xff] %v1856
    %2062 = vst [vmem:[#allocation3 + $0x140] sm:$0xff] %v1857
    %2063 = vst [vmem:[#allocation3 + $0x188] sm:$0xff] %v1858
    %2064 = vst [vmem:[#allocation3 + $0x1d0] sm:$0xff] %v1859
    %2065 = vst [vmem:[#allocation3 + $0x218] sm:$0xff] %v1860
    %2066 = vst [vmem:[#allocation3 + $0x260] sm:$0xff] %v1861
    %2067 = vst [vmem:[#allocation3 + $0x2a8] sm:$0xff] %v1862
    %2068 = vst [vmem:[#allocation3 + $0x2f0] sm:$0xff] %v1863
    %2069 = vst [vmem:[#allocation3 + $0x338] sm:$0xff] %v1864
    %2070 = vst [vmem:[#allocation3 + $0x380] sm:$0xff] %v1865
    %2071 = vst [vmem:[#allocation3 + $0x3c8] sm:$0xff] %v1866
    %2072 = vst [vmem:[#allocation3 + $0x410] sm:$0xff] %v1867
    %2073 = vst [vmem:[#allocation3 + $0x458] sm:$0xff] %v1868
    %2074 = vst [vmem:[#allocation3 + $0x2f] sm:$0x1] 0.0
    %2075 = vst [vmem:[#allocation3 + $0x77] sm:$0x1] 0.0
    %2076 = vst [vmem:[#allocation3 + $0xbf] sm:$0x1] 0.0
    %2077 = vst [vmem:[#allocation3 + $0x107] sm:$0x1] 0.0
    %2078 = vst [vmem:[#allocation3 + $0x14f] sm:$0x1] 0.0
    %2079 = vst [vmem:[#allocation3 + $0x197] sm:$0x1] 0.0
    %2080 = vst [vmem:[#allocation3 + $0x1df] sm:$0x1] 0.0
    %2081 = vst [vmem:[#allocation3 + $0x227] sm:$0x1] 0.0
    %2082 = vst [vmem:[#allocation3 + $0x26f] sm:$0x1] 0.0
    %2083 = vst [vmem:[#allocation3 + $0x2b7] sm:$0x1] 0.0
    %2084 = vst [vmem:[#allocation3 + $0x2ff] sm:$0x1] 0.0
    %2085 = vst [vmem:[#allocation3 + $0x347] sm:$0x1] 0.0
    %2086 = vst [vmem:[#allocation3 + $0x38f] sm:$0x1] 0.0
    %2087 = vst [vmem:[#allocation3 + $0x3d7] sm:$0x1] 0.0
    %2088 = vst [vmem:[#allocation3 + $0x41f] sm:$0x1] 0.0
    %2089 = vst [vmem:[#allocation3 + $0x467] sm:$0x1] 0.0
    %v2090 = vrot.slane %v1860, 1
    %v2091 = vrot.slane %v1868, 1
    %2094 = vst [vmem:[#allocation3 + $0x28] sm:$0x7f] %v1978
    %2095 = vst [vmem:[#allocation3 + $0x70] sm:$0x7f] %v1979
    %2096 = vst [vmem:[#allocation3 + $0xb8] sm:$0x7f] %v1980
    %2097 = vst [vmem:[#allocation3 + $0x100] sm:$0x7f] %v1981
    %2098 = vst [vmem:[#allocation3 + $0x148] sm:$0x7f] %v1982
    %2099 = vst [vmem:[#allocation3 + $0x190] sm:$0x7f] %v1983
    %2100 = vst [vmem:[#allocation3 + $0x1d8] sm:$0x7f] %v1984
    %2101 = vst [vmem:[#allocation3 + $0x220] sm:$0x7f] %v2090
    %2102 = vst [vmem:[#allocation3 + $0x268] sm:$0x7f] %v1985
    %2103 = vst [vmem:[#allocation3 + $0x2b0] sm:$0x7f] %v1986
    %2104 = vst [vmem:[#allocation3 + $0x2f8] sm:$0x7f] %v1987
    %2105 = vst [vmem:[#allocation3 + $0x340] sm:$0x7f] %v1988
    %2106 = vst [vmem:[#allocation3 + $0x388] sm:$0x7f] %v1989
    %2107 = vst [vmem:[#allocation3 + $0x3d0] sm:$0x7f] %v1990
    %2108 = vst [vmem:[#allocation3 + $0x418] sm:$0x7f] %v1991
    %2109 = vst [vmem:[#allocation3 + $0x460] sm:$0x7f] %v2091
    %s2110 = scalar_lea.vmem [#allocation3], 504
    %2111 = vst [vmem:[%s2110 + $0x30] sm:$0xff] 0.0
    %2112 = vst [vmem:[%s2110 + $0x270] sm:$0xff] 0.0
    %2113 = vst [vmem:[#allocation3 + $0x30] sm:$0x1] 0.0
    %2114 = vst [vmem:[#allocation3 + $0x78] sm:$0x1] 0.0
    %2115 = vst [vmem:[#allocation3 + $0xc0] sm:$0x1] 0.0
    %2116 = vst [vmem:[#allocation3 + $0x108] sm:$0x1] 0.0
    %2117 = vst [vmem:[#allocation3 + $0x150] sm:$0x1] 0.0
    %2118 = vst [vmem:[#allocation3 + $0x198] sm:$0x1] 0.0
    %2119 = vst [vmem:[#allocation3 + $0x1e0] sm:$0x1] 0.0
    %2120 = vst [vmem:[#allocation3 + $0x228] sm:$0x1] 0.0
    %2121 = vst [vmem:[#allocation3 + $0x270] sm:$0x1] 0.0
    %2122 = vst [vmem:[#allocation3 + $0x2b8] sm:$0x1] 0.0
    %2123 = vst [vmem:[#allocation3 + $0x300] sm:$0x1] 0.0
    %2124 = vst [vmem:[#allocation3 + $0x348] sm:$0x1] 0.0
    %2125 = vst [vmem:[#allocation3 + $0x390] sm:$0x1] 0.0
    %2126 = vst [vmem:[#allocation3 + $0x3d8] sm:$0x1] 0.0
    %2127 = vst [vmem:[#allocation3 + $0x420] sm:$0x1] 0.0
    %2128 = vst [vmem:[#allocation3 + $0x468] sm:$0x1] 0.0
    %2129 = vst [vmem:[#allocation3 + $0x30] sm:$0xfe] %v1902
    %2130 = vst [vmem:[#allocation3 + $0x78] sm:$0xfe] %v1903
    %2131 = vst [vmem:[#allocation3 + $0xc0] sm:$0xfe] %v1904
    %2132 = vst [vmem:[#allocation3 + $0x108] sm:$0xfe] %v1905
    %2133 = vst [vmem:[#allocation3 + $0x150] sm:$0xfe] %v1906
    %2134 = vst [vmem:[#allocation3 + $0x198] sm:$0xfe] %v1907
    %2135 = vst [vmem:[#allocation3 + $0x1e0] sm:$0xfe] %v2038
    %2136 = vst [vmem:[#allocation3 + $0x270] sm:$0xfe] %v1909
    %2137 = vst [vmem:[#allocation3 + $0x2b8] sm:$0xfe] %v1910
    %2138 = vst [vmem:[#allocation3 + $0x300] sm:$0xfe] %v1911
    %2139 = vst [vmem:[#allocation3 + $0x348] sm:$0xfe] %v1912
    %2140 = vst [vmem:[#allocation3 + $0x390] sm:$0xfe] %v1913
    %2141 = vst [vmem:[#allocation3 + $0x3d8] sm:$0xfe] %v1914
    %2142 = vst [vmem:[#allocation3 + $0x420] sm:$0xfe] %v2039
    %2143 = vst [vmem:[%s2110 + $0x38] sm:$0xff] 0.0
    %2144 = vst [vmem:[%s2110 + $0x278] sm:$0xff] 0.0
    %2145 = vst [vmem:[#allocation3 + $0x38] sm:$0xff] %v1854
    %2146 = vst [vmem:[#allocation3 + $0x80] sm:$0xff] %v1855
    %2147 = vst [vmem:[#allocation3 + $0xc8] sm:$0xff] %v1856
    %2148 = vst [vmem:[#allocation3 + $0x110] sm:$0xff] %v1857
    %2149 = vst [vmem:[#allocation3 + $0x158] sm:$0xff] %v1858
    %2150 = vst [vmem:[#allocation3 + $0x1a0] sm:$0xff] %v1859
    %2151 = vst [vmem:[#allocation3 + $0x1e8] sm:$0xff] %v1860
    %2152 = vst [vmem:[#allocation3 + $0x278] sm:$0xff] %v1862
    %2153 = vst [vmem:[#allocation3 + $0x2c0] sm:$0xff] %v1863
    %2154 = vst [vmem:[#allocation3 + $0x308] sm:$0xff] %v1864
    %2155 = vst [vmem:[#allocation3 + $0x350] sm:$0xff] %v1865
    %2156 = vst [vmem:[#allocation3 + $0x398] sm:$0xff] %v1866
    %2157 = vst [vmem:[#allocation3 + $0x3e0] sm:$0xff] %v1867
    %2158 = vst [vmem:[#allocation3 + $0x428] sm:$0xff] %v1868
    %2159 = vst [vmem:[%s2110 + $0x40] sm:$0xff] 0.0
    %2160 = vst [vmem:[%s2110 + $0x280] sm:$0xff] 0.0
    %2161 = vst [vmem:[#allocation3 + $0x47] sm:$0x1] 0.0
    %2162 = vst [vmem:[#allocation3 + $0x8f] sm:$0x1] 0.0
    %2163 = vst [vmem:[#allocation3 + $0xd7] sm:$0x1] 0.0
    %2164 = vst [vmem:[#allocation3 + $0x11f] sm:$0x1] 0.0
    %2165 = vst [vmem:[#allocation3 + $0x167] sm:$0x1] 0.0
    %2166 = vst [vmem:[#allocation3 + $0x1af] sm:$0x1] 0.0
    %2167 = vst [vmem:[#allocation3 + $0x1f7] sm:$0x1] 0.0
    %2168 = vst [vmem:[#allocation3 + $0x23f] sm:$0x1] 0.0
    %2169 = vst [vmem:[#allocation3 + $0x287] sm:$0x1] 0.0
    %2170 = vst [vmem:[#allocation3 + $0x2cf] sm:$0x1] 0.0
    %2171 = vst [vmem:[#allocation3 + $0x317] sm:$0x1] 0.0
    %2172 = vst [vmem:[#allocation3 + $0x35f] sm:$0x1] 0.0
    %2173 = vst [vmem:[#allocation3 + $0x3a7] sm:$0x1] 0.0
    %2174 = vst [vmem:[#allocation3 + $0x3ef] sm:$0x1] 0.0
    %2175 = vst [vmem:[#allocation3 + $0x437] sm:$0x1] 0.0
    %2176 = vst [vmem:[#allocation3 + $0x47f] sm:$0x1] 0.0
    %2177 = vst [vmem:[#allocation3 + $0x40] sm:$0x7f] %v1979
    %2178 = vst [vmem:[#allocation3 + $0x88] sm:$0x7f] %v1980
    %2179 = vst [vmem:[#allocation3 + $0xd0] sm:$0x7f] %v1981
    %2180 = vst [vmem:[#allocation3 + $0x118] sm:$0x7f] %v1982
    %2181 = vst [vmem:[#allocation3 + $0x160] sm:$0x7f] %v1983
    %2182 = vst [vmem:[#allocation3 + $0x1a8] sm:$0x7f] %v1984
    %2183 = vst [vmem:[#allocation3 + $0x1f0] sm:$0x7f] %v2090
    %2184 = vst [vmem:[#allocation3 + $0x280] sm:$0x7f] %v1986
    %2185 = vst [vmem:[#allocation3 + $0x2c8] sm:$0x7f] %v1987
    %2186 = vst [vmem:[#allocation3 + $0x310] sm:$0x7f] %v1988
    %2187 = vst [vmem:[#allocation3 + $0x358] sm:$0x7f] %v1989
    %2188 = vst [vmem:[#allocation3 + $0x3a0] sm:$0x7f] %v1990
    %2189 = vst [vmem:[#allocation3 + $0x3e8] sm:$0x7f] %v1991
    %2190 = vst [vmem:[#allocation3 + $0x430] sm:$0x7f] %v2091
    %v2191 = vld [vmem:[#allocation3] sm:$0xff]
    %v2192 = vld [vmem:[#allocation3 + $0x8] sm:$0xff]
    %v2193 = vld [vmem:[#allocation3 + $0x10] sm:$0xff]
    %v2194 = vld [vmem:[#allocation3 + $0x18] sm:$0xff]
    %v2195 = vld [vmem:[#allocation3 + $0x20] sm:$0xff]
    %v2196 = vld [vmem:[#allocation3 + $0x28] sm:$0xff]
    %v2197 = vld [vmem:[#allocation3 + $0x30] sm:$0xff]
    %v2198 = vld [vmem:[#allocation3 + $0x38] sm:$0xff]
    %v2199 = vld [vmem:[#allocation3 + $0x40] sm:$0xff]
    %v2200 = vld [vmem:[#allocation3 + $0x48] sm:$0xff]
    %v2201 = vld [vmem:[#allocation3 + $0x50] sm:$0xff]
    %v2202 = vld [vmem:[#allocation3 + $0x58] sm:$0xff]
    %v2203 = vld [vmem:[#allocation3 + $0x60] sm:$0xff]
    %v2204 = vld [vmem:[#allocation3 + $0x68] sm:$0xff]
    %v2205 = vld [vmem:[#allocation3 + $0x70] sm:$0xff]
    %v2206 = vld [vmem:[#allocation3 + $0x78] sm:$0xff]
    %v2207 = vld [vmem:[#allocation3 + $0x80] sm:$0xff]
    %v2208 = vld [vmem:[#allocation3 + $0x88] sm:$0xff]
    %v2209 = vld [vmem:[#allocation3 + $0x90] sm:$0xff]
    %v2210 = vld [vmem:[#allocation3 + $0x98] sm:$0xff]
    %v2211 = vld [vmem:[#allocation3 + $0xa0] sm:$0xff]
    %v2212 = vld [vmem:[#allocation3 + $0xa8] sm:$0xff]
    %v2213 = vld [vmem:[#allocation3 + $0xb0] sm:$0xff]
    %v2214 = vld [vmem:[#allocation3 + $0xb8] sm:$0xff]
    %v2215 = vld [vmem:[#allocation3 + $0xc0] sm:$0xff]
    %v2216 = vld [vmem:[#allocation3 + $0xc8] sm:$0xff]
    %v2217 = vld [vmem:[#allocation3 + $0xd0] sm:$0xff]
    %v2218 = vld [vmem:[#allocation3 + $0xd8] sm:$0xff]
    %v2219 = vld [vmem:[#allocation3 + $0xe0] sm:$0xff]
    %v2220 = vld [vmem:[#allocation3 + $0xe8] sm:$0xff]
    %v2221 = vld [vmem:[#allocation3 + $0xf0] sm:$0xff]
    %v2222 = vld [vmem:[#allocation3 + $0xf8] sm:$0xff]
    %v2223 = vld [vmem:[#allocation3 + $0x100] sm:$0xff]
    %v2224 = vld [vmem:[#allocation3 + $0x108] sm:$0xff]
    %v2225 = vld [vmem:[#allocation3 + $0x110] sm:$0xff]
    %v2226 = vld [vmem:[#allocation3 + $0x118] sm:$0xff]
    %v2227 = vld [vmem:[#allocation3 + $0x120] sm:$0xff]
    %v2228 = vld [vmem:[#allocation3 + $0x128] sm:$0xff]
    %v2229 = vld [vmem:[#allocation3 + $0x130] sm:$0xff]
    %v2230 = vld [vmem:[#allocation3 + $0x138] sm:$0xff]
    %v2231 = vld [vmem:[#allocation3 + $0x140] sm:$0xff]
    %v2232 = vld [vmem:[#allocation3 + $0x148] sm:$0xff]
    %v2233 = vld [vmem:[#allocation3 + $0x150] sm:$0xff]
    %v2234 = vld [vmem:[#allocation3 + $0x158] sm:$0xff]
    %v2235 = vld [vmem:[#allocation3 + $0x160] sm:$0xff]
    %v2236 = vld [vmem:[#allocation3 + $0x168] sm:$0xff]
    %v2237 = vld [vmem:[#allocation3 + $0x170] sm:$0xff]
    %v2238 = vld [vmem:[#allocation3 + $0x178] sm:$0xff]
    %v2239 = vld [vmem:[#allocation3 + $0x180] sm:$0xff]
    %v2240 = vld [vmem:[#allocation3 + $0x188] sm:$0xff]
    %v2241 = vld [vmem:[#allocation3 + $0x190] sm:$0xff]
    %v2242 = vld [vmem:[#allocation3 + $0x198] sm:$0xff]
    %v2243 = vld [vmem:[#allocation3 + $0x1a0] sm:$0xff]
    %v2244 = vld [vmem:[#allocation3 + $0x1a8] sm:$0xff]
    %v2245 = vld [vmem:[#allocation3 + $0x1b0] sm:$0xff]
    %v2246 = vld [vmem:[#allocation3 + $0x1b8] sm:$0xff]
    %v2247 = vld [vmem:[#allocation3 + $0x1c0] sm:$0xff]
    %v2248 = vld [vmem:[#allocation3 + $0x1c8] sm:$0xff]
    %v2249 = vld [vmem:[#allocation3 + $0x1d0] sm:$0xff]
    %v2250 = vld [vmem:[#allocation3 + $0x1d8] sm:$0xff]
    %v2251 = vld [vmem:[#allocation3 + $0x1e0] sm:$0xff]
    %v2252 = vld [vmem:[#allocation3 + $0x1e8] sm:$0xff]
    %v2253 = vld [vmem:[#allocation3 + $0x1f0] sm:$0xff]
    %v2254 = vld [vmem:[#allocation3 + $0x1f8] sm:$0xff]
    %v2255 = vld [vmem:[#allocation3 + $0x200] sm:$0xff]
    %v2256 = vld [vmem:[#allocation3 + $0x208] sm:$0xff]
    %v2257 = vld [vmem:[#allocation3 + $0x210] sm:$0xff]
    %v2258 = vld [vmem:[#allocation3 + $0x218] sm:$0xff]
    %v2259 = vld [vmem:[#allocation3 + $0x220] sm:$0xff]
    %v2260 = vld [vmem:[#allocation3 + $0x228] sm:$0xff]
    %v2261 = vld [vmem:[#allocation3 + $0x230] sm:$0xff]
    %v2262 = vld [vmem:[#allocation3 + $0x238] sm:$0xff]
    %v2263 = vld [vmem:[#allocation3 + $0x240] sm:$0xff]
    %v2264 = vld [vmem:[#allocation3 + $0x248] sm:$0xff]
    %v2265 = vld [vmem:[#allocation3 + $0x250] sm:$0xff]
    %v2266 = vld [vmem:[#allocation3 + $0x258] sm:$0xff]
    %v2267 = vld [vmem:[#allocation3 + $0x260] sm:$0xff]
    %v2268 = vld [vmem:[#allocation3 + $0x268] sm:$0xff]
    %v2269 = vld [vmem:[#allocation3 + $0x270] sm:$0xff]
    %v2270 = vld [vmem:[#allocation3 + $0x278] sm:$0xff]
    %v2271 = vld [vmem:[#allocation3 + $0x280] sm:$0xff]
    %v2272 = vld [vmem:[#allocation3 + $0x288] sm:$0xff]
    %v2273 = vld [vmem:[#allocation3 + $0x290] sm:$0xff]
    %v2274 = vld [vmem:[#allocation3 + $0x298] sm:$0xff]
    %v2275 = vld [vmem:[#allocation3 + $0x2a0] sm:$0xff]
    %v2276 = vld [vmem:[#allocation3 + $0x2a8] sm:$0xff]
    %v2277 = vld [vmem:[#allocation3 + $0x2b0] sm:$0xff]
    %v2278 = vld [vmem:[#allocation3 + $0x2b8] sm:$0xff]
    %v2279 = vld [vmem:[#allocation3 + $0x2c0] sm:$0xff]
    %v2280 = vld [vmem:[#allocation3 + $0x2c8] sm:$0xff]
    %v2281 = vld [vmem:[#allocation3 + $0x2d0] sm:$0xff]
    %v2282 = vld [vmem:[#allocation3 + $0x2d8] sm:$0xff]
    %v2283 = vld [vmem:[#allocation3 + $0x2e0] sm:$0xff]
    %v2284 = vld [vmem:[#allocation3 + $0x2e8] sm:$0xff]
    %v2285 = vld [vmem:[#allocation3 + $0x2f0] sm:$0xff]
    %v2286 = vld [vmem:[#allocation3 + $0x2f8] sm:$0xff]
    %v2287 = vld [vmem:[#allocation3 + $0x300] sm:$0xff]
    %v2288 = vld [vmem:[#allocation3 + $0x308] sm:$0xff]
    %v2289 = vld [vmem:[#allocation3 + $0x310] sm:$0xff]
    %v2290 = vld [vmem:[#allocation3 + $0x318] sm:$0xff]
    %v2291 = vld [vmem:[#allocation3 + $0x320] sm:$0xff]
    %v2292 = vld [vmem:[#allocation3 + $0x328] sm:$0xff]
    %v2293 = vld [vmem:[#allocation3 + $0x330] sm:$0xff]
    %v2294 = vld [vmem:[#allocation3 + $0x338] sm:$0xff]
    %v2295 = vld [vmem:[#allocation3 + $0x340] sm:$0xff]
    %v2296 = vld [vmem:[#allocation3 + $0x348] sm:$0xff]
    %v2297 = vld [vmem:[#allocation3 + $0x350] sm:$0xff]
    %v2298 = vld [vmem:[#allocation3 + $0x358] sm:$0xff]
    %v2299 = vld [vmem:[#allocation3 + $0x360] sm:$0xff]
    %v2300 = vld [vmem:[#allocation3 + $0x368] sm:$0xff]
    %v2301 = vld [vmem:[#allocation3 + $0x370] sm:$0xff]
    %v2302 = vld [vmem:[#allocation3 + $0x378] sm:$0xff]
    %v2303 = vld [vmem:[#allocation3 + $0x380] sm:$0xff]
    %v2304 = vld [vmem:[#allocation3 + $0x388] sm:$0xff]
    %v2305 = vld [vmem:[#allocation3 + $0x390] sm:$0xff]
    %v2306 = vld [vmem:[#allocation3 + $0x398] sm:$0xff]
    %v2307 = vld [vmem:[#allocation3 + $0x3a0] sm:$0xff]
    %v2308 = vld [vmem:[#allocation3 + $0x3a8] sm:$0xff]
    %v2309 = vld [vmem:[#allocation3 + $0x3b0] sm:$0xff]
    %v2310 = vld [vmem:[#allocation3 + $0x3b8] sm:$0xff]
    %v2311 = vld [vmem:[#allocation3 + $0x3c0] sm:$0xff]
    %v2312 = vld [vmem:[#allocation3 + $0x3c8] sm:$0xff]
    %v2313 = vld [vmem:[#allocation3 + $0x3d0] sm:$0xff]
    %v2314 = vld [vmem:[#allocation3 + $0x3d8] sm:$0xff]
    %v2315 = vld [vmem:[#allocation3 + $0x3e0] sm:$0xff]
    %v2316 = vld [vmem:[#allocation3 + $0x3e8] sm:$0xff]
    %v2317 = vld [vmem:[#allocation3 + $0x3f0] sm:$0xff]
    %v2318 = vld [vmem:[#allocation3 + $0x3f8] sm:$0xff]
    %v2319 = vld [vmem:[#allocation3 + $0x400] sm:$0xff]
    %v2320 = vld [vmem:[#allocation3 + $0x408] sm:$0xff]
    %v2321 = vld [vmem:[#allocation3 + $0x410] sm:$0xff]
    %v2322 = vld [vmem:[#allocation3 + $0x418] sm:$0xff]
    %v2323 = vld [vmem:[#allocation3 + $0x420] sm:$0xff]
    %v2324 = vld [vmem:[#allocation3 + $0x428] sm:$0xff]
    %v2325 = vld [vmem:[#allocation3 + $0x430] sm:$0xff]
    %v2326 = vld [vmem:[#allocation3 + $0x438] sm:$0xff]
    %v2327 = vld [vmem:[#allocation3 + $0x440] sm:$0xff]
    %v2328 = vld [vmem:[#allocation3 + $0x448] sm:$0xff]
    %v2329 = vld [vmem:[#allocation3 + $0x450] sm:$0xff]
    %v2330 = vld [vmem:[#allocation3 + $0x458] sm:$0xff]
    %v2331 = vld [vmem:[#allocation3 + $0x460] sm:$0xff]
    %v2332 = vld [vmem:[#allocation3 + $0x468] sm:$0xff]
    %v2333 = vld [vmem:[#allocation3 + $0x470] sm:$0xff]
    %v2334 = vld [vmem:[#allocation3 + $0x478] sm:$0xff]
    %v2335 = vpack.c.bf16 %v2200, %v2191
    %v2336 = vpack.c.bf16 %v2201, %v2192
    %v2337 = vpack.c.bf16 %v2202, %v2193
    %v2338 = vpack.c.bf16 %v2203, %v2194
    %v2339 = vpack.c.bf16 %v2204, %v2195
    %v2340 = vpack.c.bf16 %v2205, %v2196
    %v2341 = vpack.c.bf16 %v2206, %v2197
    %v2342 = vpack.c.bf16 %v2207, %v2198
    %v2343 = vpack.c.bf16 %v2208, %v2199
    %v2344 = vpack.c.bf16 %v2218, %v2209
    %v2345 = vpack.c.bf16 %v2219, %v2210
    %v2346 = vpack.c.bf16 %v2220, %v2211
    %v2347 = vpack.c.bf16 %v2221, %v2212
    %v2348 = vpack.c.bf16 %v2222, %v2213
    %v2349 = vpack.c.bf16 %v2223, %v2214
    %v2350 = vpack.c.bf16 %v2224, %v2215
    %v2351 = vpack.c.bf16 %v2225, %v2216
    %v2352 = vpack.c.bf16 %v2226, %v2217
    %v2353 = vpack.c.bf16 %v2236, %v2227
    %v2354 = vpack.c.bf16 %v2237, %v2228
    %v2355 = vpack.c.bf16 %v2238, %v2229
    %v2356 = vpack.c.bf16 %v2239, %v2230
    %v2357 = vpack.c.bf16 %v2240, %v2231
    %v2358 = vpack.c.bf16 %v2241, %v2232
    %v2359 = vpack.c.bf16 %v2242, %v2233
    %v2360 = vpack.c.bf16 %v2243, %v2234
    %v2361 = vpack.c.bf16 %v2244, %v2235
    %v2362 = vpack.c.bf16 %v2254, %v2245
    %v2363 = vpack.c.bf16 %v2255, %v2246
    %v2364 = vpack.c.bf16 %v2256, %v2247
    %v2365 = vpack.c.bf16 %v2257, %v2248
    %v2366 = vpack.c.bf16 %v2258, %v2249
    %v2367 = vpack.c.bf16 %v2259, %v2250
    %v2368 = vpack.c.bf16 %v2260, %v2251
    %v2369 = vpack.c.bf16 %v2261, %v2252
    %v2370 = vpack.c.bf16 %v2262, %v2253
    %v2371 = vpack.c.bf16 %v2272, %v2263
    %v2372 = vpack.c.bf16 %v2273, %v2264
    %v2373 = vpack.c.bf16 %v2274, %v2265
    %v2374 = vpack.c.bf16 %v2275, %v2266
    %v2375 = vpack.c.bf16 %v2276, %v2267
    %v2376 = vpack.c.bf16 %v2277, %v2268
    %v2377 = vpack.c.bf16 %v2278, %v2269
    %v2378 = vpack.c.bf16 %v2279, %v2270
    %v2379 = vpack.c.bf16 %v2280, %v2271
    %v2380 = vpack.c.bf16 %v2290, %v2281
    %v2381 = vpack.c.bf16 %v2291, %v2282
    %v2382 = vpack.c.bf16 %v2292, %v2283
    %v2383 = vpack.c.bf16 %v2293, %v2284
    %v2384 = vpack.c.bf16 %v2294, %v2285
    %v2385 = vpack.c.bf16 %v2295, %v2286
    %v2386 = vpack.c.bf16 %v2296, %v2287
    %v2387 = vpack.c.bf16 %v2297, %v2288
    %v2388 = vpack.c.bf16 %v2298, %v2289
    %v2389 = vpack.c.bf16 %v2308, %v2299
    %v2390 = vpack.c.bf16 %v2309, %v2300
    %v2391 = vpack.c.bf16 %v2310, %v2301
    %v2392 = vpack.c.bf16 %v2311, %v2302
    %v2393 = vpack.c.bf16 %v2312, %v2303
    %v2394 = vpack.c.bf16 %v2313, %v2304
    %v2395 = vpack.c.bf16 %v2314, %v2305
    %v2396 = vpack.c.bf16 %v2315, %v2306
    %v2397 = vpack.c.bf16 %v2316, %v2307
    %v2398 = vpack.c.bf16 %v2326, %v2317
    %v2399 = vpack.c.bf16 %v2327, %v2318
    %v2400 = vpack.c.bf16 %v2328, %v2319
    %v2401 = vpack.c.bf16 %v2329, %v2320
    %v2402 = vpack.c.bf16 %v2330, %v2321
    %v2403 = vpack.c.bf16 %v2331, %v2322
    %v2404 = vpack.c.bf16 %v2332, %v2323
    %v2405 = vpack.c.bf16 %v2333, %v2324
    %v2406 = vpack.c.bf16 %v2334, %v2325
    %v2407 = vld [vmem:[%s4] sm:$0xf]
    %v2408 = vld [vmem:[%s4 + $0x4] sm:$0xf]
    %v2409 = vld [vmem:[%s4 + $0x8] sm:$0xf]
    %v2410 = vld [vmem:[%s4 + $0xc] sm:$0xf]
    %v2411 = vld [vmem:[%s4 + $0x10] sm:$0xf]
    %v2412 = vld [vmem:[%s4 + $0x14] sm:$0xf]
    %v2413 = vld [vmem:[%s4 + $0x18] sm:$0xf]
    %v2414 = vld [vmem:[%s4 + $0x1c] sm:$0xf]
    %v2415 = vld [vmem:[%s4 + $0x20] sm:$0xf]
    %v2416 = vld [vmem:[%s4 + $0x24] sm:$0xf]
    %v2417 = vld [vmem:[%s4 + $0x28] sm:$0xf]
    %v2418 = vld [vmem:[%s4 + $0x2c] sm:$0xf]
    %v2419 = vld [vmem:[%s4 + $0x30] sm:$0xf]
    %v2420 = vld [vmem:[%s4 + $0x34] sm:$0xf]
    %v2421 = vld [vmem:[%s4 + $0x38] sm:$0xf]
    %v2422 = vld [vmem:[%s4 + $0x3c] sm:$0xf]
    %v2423 = vld [vmem:[%s4 + $0x40] sm:$0xf]
    %v2424 = vld [vmem:[%s4 + $0x44] sm:$0xf]
    %v2425 = vld [vmem:[%s4 + $0x48] sm:$0xf]
    %v2426 = vld [vmem:[%s4 + $0x4c] sm:$0xf]
    %v2427 = vld [vmem:[%s4 + $0x50] sm:$0xf]
    %v2428 = vld [vmem:[%s4 + $0x54] sm:$0xf]
    %v2429 = vld [vmem:[%s4 + $0x58] sm:$0xf]
    %v2430 = vld [vmem:[%s4 + $0x5c] sm:$0xf]
    %v2431 = vld [vmem:[%s4 + $0x60] sm:$0xf]
    %v2432 = vld [vmem:[%s4 + $0x64] sm:$0xf]
    %v2433 = vld [vmem:[%s4 + $0x68] sm:$0xf]
    %v2434 = vld [vmem:[%s4 + $0x6c] sm:$0xf]
    %v2435 = vld [vmem:[%s4 + $0x70] sm:$0xf]
    %v2436 = vld [vmem:[%s4 + $0x74] sm:$0xf]
    %v2437 = vld [vmem:[%s4 + $0x78] sm:$0xf]
    %v2438 = vld [vmem:[%s4 + $0x7c] sm:$0xf]
    %v2439 = vld [vmem:[%s4 + $0x80] sm:$0xf]
    %v2440 = vld [vmem:[%s4 + $0x84] sm:$0xf]
    %v2441 = vld [vmem:[%s4 + $0x88] sm:$0xf]
    %v2442 = vld [vmem:[%s4 + $0x8c] sm:$0xf]
    %v2443 = vld [vmem:[%s4 + $0x90] sm:$0xf]
    %v2444 = vld [vmem:[%s4 + $0x94] sm:$0xf]
    %v2445 = vld [vmem:[%s4 + $0x98] sm:$0xf]
    %v2446 = vld [vmem:[%s4 + $0x9c] sm:$0xf]
    %v2447 = vld [vmem:[%s4 + $0xa0] sm:$0xf]
    %v2448 = vld [vmem:[%s4 + $0xa4] sm:$0xf]
    %v2449 = vld [vmem:[%s4 + $0xa8] sm:$0xf]
    %v2450 = vld [vmem:[%s4 + $0xac] sm:$0xf]
    %v2451 = vld [vmem:[%s4 + $0xb0] sm:$0xf]
    %v2452 = vld [vmem:[%s4 + $0xb4] sm:$0xf]
    %v2453 = vld [vmem:[%s4 + $0xb8] sm:$0xf]
    %v2454 = vld [vmem:[%s4 + $0xbc] sm:$0xf]
    %v2455 = vld [vmem:[%s4 + $0xc0] sm:$0xf]
    %v2456 = vld [vmem:[%s4 + $0xc4] sm:$0xf]
    %v2457 = vld [vmem:[%s4 + $0xc8] sm:$0xf]
    %v2458 = vld [vmem:[%s4 + $0xcc] sm:$0xf]
    %v2459 = vld [vmem:[%s4 + $0xd0] sm:$0xf]
    %v2460 = vld [vmem:[%s4 + $0xd4] sm:$0xf]
    %v2461 = vld [vmem:[%s4 + $0xd8] sm:$0xf]
    %v2462 = vld [vmem:[%s4 + $0xdc] sm:$0xf]
    %v2463 = vld [vmem:[%s4 + $0xe0] sm:$0xf]
    %v2464 = vld [vmem:[%s4 + $0xe4] sm:$0xf]
    %v2465 = vld [vmem:[%s4 + $0xe8] sm:$0xf]
    %v2466 = vld [vmem:[%s4 + $0xec] sm:$0xf]
    %v2467 = vld [vmem:[%s4 + $0xf0] sm:$0xf]
    %v2468 = vld [vmem:[%s4 + $0xf4] sm:$0xf]
    %v2469 = vld [vmem:[%s4 + $0xf8] sm:$0xf]
    %v2470 = vld [vmem:[%s4 + $0xfc] sm:$0xf]
    %v2471 = vld [vmem:[%s4 + $0x100] sm:$0xf]
    %v2472 = vld [vmem:[%s4 + $0x104] sm:$0xf]
    %v2473 = vld [vmem:[%s4 + $0x108] sm:$0xf]
    %v2474 = vld [vmem:[%s4 + $0x10c] sm:$0xf]
    %v2475 = vld [vmem:[%s4 + $0x110] sm:$0xf]
    %v2476 = vld [vmem:[%s4 + $0x114] sm:$0xf]
    %v2477 = vld [vmem:[%s4 + $0x118] sm:$0xf]
    %v2478 = vld [vmem:[%s4 + $0x11c] sm:$0xf]
    %v2479 = vld [vmem:[%s4 + $0x120] sm:$0xf]
    %v2480 = vld [vmem:[%s4 + $0x124] sm:$0xf]
    %v2481 = vld [vmem:[%s4 + $0x128] sm:$0xf]
    %v2482 = vld [vmem:[%s4 + $0x12c] sm:$0xf]
    %v2483 = vld [vmem:[%s4 + $0x130] sm:$0xf]
    %v2484 = vld [vmem:[%s4 + $0x134] sm:$0xf]
    %v2485 = vld [vmem:[%s4 + $0x138] sm:$0xf]
    %v2486 = vld [vmem:[%s4 + $0x13c] sm:$0xf]
    %v2487 = vld [vmem:[%s4 + $0x140] sm:$0xf]
    %v2488 = vld [vmem:[%s4 + $0x144] sm:$0xf]
    %v2489 = vld [vmem:[%s4 + $0x148] sm:$0xf]
    %v2490 = vld [vmem:[%s4 + $0x14c] sm:$0xf]
    %v2491 = vld [vmem:[%s4 + $0x150] sm:$0xf]
    %v2492 = vld [vmem:[%s4 + $0x154] sm:$0xf]
    %v2493 = vld [vmem:[%s4 + $0x158] sm:$0xf]
    %v2494 = vld [vmem:[%s4 + $0x15c] sm:$0xf]
    %v2495 = vld [vmem:[%s4 + $0x160] sm:$0xf]
    %v2496 = vld [vmem:[%s4 + $0x164] sm:$0xf]
    %v2497 = vld [vmem:[%s4 + $0x168] sm:$0xf]
    %v2498 = vld [vmem:[%s4 + $0x16c] sm:$0xf]
    %v2499 = vld [vmem:[%s4 + $0x170] sm:$0xf]
    %v2500 = vld [vmem:[%s4 + $0x174] sm:$0xf]
    %v2501 = vld [vmem:[%s4 + $0x178] sm:$0xf]
    %v2502 = vld [vmem:[%s4 + $0x17c] sm:$0xf]
    %v2503 = vld [vmem:[%s4 + $0x180] sm:$0xf]
    %v2504 = vld [vmem:[%s4 + $0x184] sm:$0xf]
    %v2505 = vld [vmem:[%s4 + $0x188] sm:$0xf]
    %v2506 = vld [vmem:[%s4 + $0x18c] sm:$0xf]
    %v2507 = vld [vmem:[%s4 + $0x190] sm:$0xf]
    %v2508 = vld [vmem:[%s4 + $0x194] sm:$0xf]
    %v2509 = vld [vmem:[%s4 + $0x198] sm:$0xf]
    %v2510 = vld [vmem:[%s4 + $0x19c] sm:$0xf]
    %v2511 = vld [vmem:[%s4 + $0x1a0] sm:$0xf]
    %v2512 = vld [vmem:[%s4 + $0x1a4] sm:$0xf]
    %v2513 = vld [vmem:[%s4 + $0x1a8] sm:$0xf]
    %v2514 = vld [vmem:[%s4 + $0x1ac] sm:$0xf]
    %v2515 = vld [vmem:[%s4 + $0x1b0] sm:$0xf]
    %v2516 = vld [vmem:[%s4 + $0x1b4] sm:$0xf]
    %v2517 = vld [vmem:[%s4 + $0x1b8] sm:$0xf]
    %v2518 = vld [vmem:[%s4 + $0x1bc] sm:$0xf]
    %v2519 = vld [vmem:[%s4 + $0x1c0] sm:$0xf]
    %v2520 = vld [vmem:[%s4 + $0x1c4] sm:$0xf]
    %v2521 = vld [vmem:[%s4 + $0x1c8] sm:$0xf]
    %v2522 = vld [vmem:[%s4 + $0x1cc] sm:$0xf]
    %v2523 = vld [vmem:[%s4 + $0x1d0] sm:$0xf]
    %v2524 = vld [vmem:[%s4 + $0x1d4] sm:$0xf]
    %v2525 = vld [vmem:[%s4 + $0x1d8] sm:$0xf]
    %v2526 = vld [vmem:[%s4 + $0x1dc] sm:$0xf]
    %v2527 = vld [vmem:[%s4 + $0x1e0] sm:$0xf]
    %v2528 = vld [vmem:[%s4 + $0x1e4] sm:$0xf]
    %v2529 = vld [vmem:[%s4 + $0x1e8] sm:$0xf]
    %v2530 = vld [vmem:[%s4 + $0x1ec] sm:$0xf]
    %v2531 = vld [vmem:[%s4 + $0x1f0] sm:$0xf]
    %v2532 = vld [vmem:[%s4 + $0x1f4] sm:$0xf]
    %v2533 = vld [vmem:[%s4 + $0x1f8] sm:$0xf]
    %v2534 = vld [vmem:[%s4 + $0x1fc] sm:$0xf]
    %v2535 = vld [vmem:[%s4 + $0x200] sm:$0xf]
    %v2536 = vld [vmem:[%s4 + $0x204] sm:$0xf]
    %v2537 = vld [vmem:[%s4 + $0x208] sm:$0xf]
    %v2538 = vld [vmem:[%s4 + $0x20c] sm:$0xf]
    %v2539 = vld [vmem:[%s4 + $0x210] sm:$0xf]
    %v2540 = vld [vmem:[%s4 + $0x214] sm:$0xf]
    %v2541 = vld [vmem:[%s4 + $0x218] sm:$0xf]
    %v2542 = vld [vmem:[%s4 + $0x21c] sm:$0xf]
    %v2543 = vld [vmem:[%s4 + $0x220] sm:$0xf]
    %v2544 = vld [vmem:[%s4 + $0x224] sm:$0xf]
    %v2545 = vld [vmem:[%s4 + $0x228] sm:$0xf]
    %v2546 = vld [vmem:[%s4 + $0x22c] sm:$0xf]
    %v2547 = vld [vmem:[%s4 + $0x230] sm:$0xf]
    %v2548 = vld [vmem:[%s4 + $0x234] sm:$0xf]
    %v2549 = vld [vmem:[%s4 + $0x238] sm:$0xf]
    %v2550 = vld [vmem:[%s4 + $0x23c] sm:$0xf]
    %v2695 = vunpack.c.l.b16 %v2407
    %v2696 = vunpack.c.l.b16 %v2408
    %v2697 = vunpack.c.l.b16 %v2409
    %v2698 = vunpack.c.l.b16 %v2410
    %v2699 = vunpack.c.l.b16 %v2411
    %v2700 = vunpack.c.l.b16 %v2412
    %v2701 = vunpack.c.l.b16 %v2413
    %v2702 = vunpack.c.l.b16 %v2414
    %v2703 = vunpack.c.l.b16 %v2415
    %v2704 = vunpack.c.l.b16 %v2416
    %v2705 = vunpack.c.l.b16 %v2417
    %v2706 = vunpack.c.l.b16 %v2418
    %v2707 = vunpack.c.l.b16 %v2419
    %v2708 = vunpack.c.l.b16 %v2420
    %v2709 = vunpack.c.l.b16 %v2421
    %v2710 = vunpack.c.l.b16 %v2422
    %v2711 = vunpack.c.l.b16 %v2423
    %v2712 = vunpack.c.l.b16 %v2424
    %v2713 = vunpack.c.l.b16 %v2425
    %v2714 = vunpack.c.l.b16 %v2426
    %v2715 = vunpack.c.l.b16 %v2427
    %v2716 = vunpack.c.l.b16 %v2428
    %v2717 = vunpack.c.l.b16 %v2429
    %v2718 = vunpack.c.l.b16 %v2430
    %v2719 = vunpack.c.l.b16 %v2431
    %v2720 = vunpack.c.l.b16 %v2432
    %v2721 = vunpack.c.l.b16 %v2433
    %v2722 = vunpack.c.l.b16 %v2434
    %v2723 = vunpack.c.l.b16 %v2435
    %v2724 = vunpack.c.l.b16 %v2436
    %v2725 = vunpack.c.l.b16 %v2437
    %v2726 = vunpack.c.l.b16 %v2438
    %v2727 = vunpack.c.l.b16 %v2439
    %v2728 = vunpack.c.l.b16 %v2440
    %v2729 = vunpack.c.l.b16 %v2441
    %v2730 = vunpack.c.l.b16 %v2442
    %v2731 = vunpack.c.l.b16 %v2443
    %v2732 = vunpack.c.l.b16 %v2444
    %v2733 = vunpack.c.l.b16 %v2445
    %v2734 = vunpack.c.l.b16 %v2446
    %v2735 = vunpack.c.l.b16 %v2447
    %v2736 = vunpack.c.l.b16 %v2448
    %v2737 = vunpack.c.l.b16 %v2449
    %v2738 = vunpack.c.l.b16 %v2450
    %v2739 = vunpack.c.l.b16 %v2451
    %v2740 = vunpack.c.l.b16 %v2452
    %v2741 = vunpack.c.l.b16 %v2453
    %v2742 = vunpack.c.l.b16 %v2454
    %v2743 = vunpack.c.l.b16 %v2455
    %v2744 = vunpack.c.l.b16 %v2456
    %v2745 = vunpack.c.l.b16 %v2457
    %v2746 = vunpack.c.l.b16 %v2458
    %v2747 = vunpack.c.l.b16 %v2459
    %v2748 = vunpack.c.l.b16 %v2460
    %v2749 = vunpack.c.l.b16 %v2461
    %v2750 = vunpack.c.l.b16 %v2462
    %v2751 = vunpack.c.l.b16 %v2463
    %v2752 = vunpack.c.l.b16 %v2464
    %v2753 = vunpack.c.l.b16 %v2465
    %v2754 = vunpack.c.l.b16 %v2466
    %v2755 = vunpack.c.l.b16 %v2467
    %v2756 = vunpack.c.l.b16 %v2468
    %v2757 = vunpack.c.l.b16 %v2469
    %v2758 = vunpack.c.l.b16 %v2470
    %v2759 = vunpack.c.l.b16 %v2471
    %v2760 = vunpack.c.l.b16 %v2472
    %v2761 = vunpack.c.l.b16 %v2473
    %v2762 = vunpack.c.l.b16 %v2474
    %v2763 = vunpack.c.l.b16 %v2475
    %v2764 = vunpack.c.l.b16 %v2476
    %v2765 = vunpack.c.l.b16 %v2477
    %v2766 = vunpack.c.l.b16 %v2478
    %v2767 = vunpack.c.l.b16 %v2479
    %v2768 = vunpack.c.l.b16 %v2480
    %v2769 = vunpack.c.l.b16 %v2481
    %v2770 = vunpack.c.l.b16 %v2482
    %v2771 = vunpack.c.l.b16 %v2483
    %v2772 = vunpack.c.l.b16 %v2484
    %v2773 = vunpack.c.l.b16 %v2485
    %v2774 = vunpack.c.l.b16 %v2486
    %v2775 = vunpack.c.l.b16 %v2487
    %v2776 = vunpack.c.l.b16 %v2488
    %v2777 = vunpack.c.l.b16 %v2489
    %v2778 = vunpack.c.l.b16 %v2490
    %v2779 = vunpack.c.l.b16 %v2491
    %v2780 = vunpack.c.l.b16 %v2492
    %v2781 = vunpack.c.l.b16 %v2493
    %v2782 = vunpack.c.l.b16 %v2494
    %v2783 = vunpack.c.l.b16 %v2495
    %v2784 = vunpack.c.l.b16 %v2496
    %v2785 = vunpack.c.l.b16 %v2497
    %v2786 = vunpack.c.l.b16 %v2498
    %v2787 = vunpack.c.l.b16 %v2499
    %v2788 = vunpack.c.l.b16 %v2500
    %v2789 = vunpack.c.l.b16 %v2501
    %v2790 = vunpack.c.l.b16 %v2502
    %v2791 = vunpack.c.l.b16 %v2503
    %v2792 = vunpack.c.l.b16 %v2504
    %v2793 = vunpack.c.l.b16 %v2505
    %v2794 = vunpack.c.l.b16 %v2506
    %v2795 = vunpack.c.l.b16 %v2507
    %v2796 = vunpack.c.l.b16 %v2508
    %v2797 = vunpack.c.l.b16 %v2509
    %v2798 = vunpack.c.l.b16 %v2510
    %v2799 = vunpack.c.l.b16 %v2511
    %v2800 = vunpack.c.l.b16 %v2512
    %v2801 = vunpack.c.l.b16 %v2513
    %v2802 = vunpack.c.l.b16 %v2514
    %v2803 = vunpack.c.l.b16 %v2515
    %v2804 = vunpack.c.l.b16 %v2516
    %v2805 = vunpack.c.l.b16 %v2517
    %v2806 = vunpack.c.l.b16 %v2518
    %v2807 = vunpack.c.l.b16 %v2519
    %v2808 = vunpack.c.l.b16 %v2520
    %v2809 = vunpack.c.l.b16 %v2521
    %v2810 = vunpack.c.l.b16 %v2522
    %v2811 = vunpack.c.l.b16 %v2523
    %v2812 = vunpack.c.l.b16 %v2524
    %v2813 = vunpack.c.l.b16 %v2525
    %v2814 = vunpack.c.l.b16 %v2526
    %v2815 = vunpack.c.l.b16 %v2527
    %v2816 = vunpack.c.l.b16 %v2528
    %v2817 = vunpack.c.l.b16 %v2529
    %v2818 = vunpack.c.l.b16 %v2530
    %v2819 = vunpack.c.l.b16 %v2531
    %v2820 = vunpack.c.l.b16 %v2532
    %v2821 = vunpack.c.l.b16 %v2533
    %v2822 = vunpack.c.l.b16 %v2534
    %v2823 = vunpack.c.l.b16 %v2535
    %v2824 = vunpack.c.l.b16 %v2536
    %v2825 = vunpack.c.l.b16 %v2537
    %v2826 = vunpack.c.l.b16 %v2538
    %v2827 = vunpack.c.l.b16 %v2539
    %v2828 = vunpack.c.l.b16 %v2540
    %v2829 = vunpack.c.l.b16 %v2541
    %v2830 = vunpack.c.l.b16 %v2542
    %v2831 = vunpack.c.l.b16 %v2543
    %v2832 = vunpack.c.l.b16 %v2544
    %v2833 = vunpack.c.l.b16 %v2545
    %v2834 = vunpack.c.l.b16 %v2546
    %v2835 = vunpack.c.l.b16 %v2547
    %v2836 = vunpack.c.l.b16 %v2548
    %v2837 = vunpack.c.l.b16 %v2549
    %v2838 = vunpack.c.l.b16 %v2550
    %v2839 = vpack.c.b16 %v2696, %v2695
    %v2840 = vpack.c.b16 %v2698, %v2697
    %v2841 = vpack.c.b16 %v2700, %v2699
    %v2842 = vpack.c.b16 %v2702, %v2701
    %v2843 = vpack.c.b16 %v2704, %v2703
    %v2844 = vpack.c.b16 %v2706, %v2705
    %v2845 = vpack.c.b16 %v2708, %v2707
    %v2846 = vpack.c.b16 %v2710, %v2709
    %v2847 = vpack.c.b16 %v2712, %v2711
    %v2848 = vpack.c.b16 %v2714, %v2713
    %v2849 = vpack.c.b16 %v2716, %v2715
    %v2850 = vpack.c.b16 %v2718, %v2717
    %v2851 = vpack.c.b16 %v2720, %v2719
    %v2852 = vpack.c.b16 %v2722, %v2721
    %v2853 = vpack.c.b16 %v2724, %v2723
    %v2854 = vpack.c.b16 %v2726, %v2725
    %v2855 = vpack.c.b16 %v2728, %v2727
    %v2856 = vpack.c.b16 %v2730, %v2729
    %v2857 = vpack.c.b16 %v2732, %v2731
    %v2858 = vpack.c.b16 %v2734, %v2733
    %v2859 = vpack.c.b16 %v2736, %v2735
    %v2860 = vpack.c.b16 %v2738, %v2737
    %v2861 = vpack.c.b16 %v2740, %v2739
    %v2862 = vpack.c.b16 %v2742, %v2741
    %v2863 = vpack.c.b16 %v2744, %v2743
    %v2864 = vpack.c.b16 %v2746, %v2745
    %v2865 = vpack.c.b16 %v2748, %v2747
    %v2866 = vpack.c.b16 %v2750, %v2749
    %v2867 = vpack.c.b16 %v2752, %v2751
    %v2868 = vpack.c.b16 %v2754, %v2753
    %v2869 = vpack.c.b16 %v2756, %v2755
    %v2870 = vpack.c.b16 %v2758, %v2757
    %v2871 = vpack.c.b16 %v2760, %v2759
    %v2872 = vpack.c.b16 %v2762, %v2761
    %v2873 = vpack.c.b16 %v2764, %v2763
    %v2874 = vpack.c.b16 %v2766, %v2765
    %v2875 = vpack.c.b16 %v2768, %v2767
    %v2876 = vpack.c.b16 %v2770, %v2769
    %v2877 = vpack.c.b16 %v2772, %v2771
    %v2878 = vpack.c.b16 %v2774, %v2773
    %v2879 = vpack.c.b16 %v2776, %v2775
    %v2880 = vpack.c.b16 %v2778, %v2777
    %v2881 = vpack.c.b16 %v2780, %v2779
    %v2882 = vpack.c.b16 %v2782, %v2781
    %v2883 = vpack.c.b16 %v2784, %v2783
    %v2884 = vpack.c.b16 %v2786, %v2785
    %v2885 = vpack.c.b16 %v2788, %v2787
    %v2886 = vpack.c.b16 %v2790, %v2789
    %v2887 = vpack.c.b16 %v2792, %v2791
    %v2888 = vpack.c.b16 %v2794, %v2793
    %v2889 = vpack.c.b16 %v2796, %v2795
    %v2890 = vpack.c.b16 %v2798, %v2797
    %v2891 = vpack.c.b16 %v2800, %v2799
    %v2892 = vpack.c.b16 %v2802, %v2801
    %v2893 = vpack.c.b16 %v2804, %v2803
    %v2894 = vpack.c.b16 %v2806, %v2805
    %v2895 = vpack.c.b16 %v2808, %v2807
    %v2896 = vpack.c.b16 %v2810, %v2809
    %v2897 = vpack.c.b16 %v2812, %v2811
    %v2898 = vpack.c.b16 %v2814, %v2813
    %v2899 = vpack.c.b16 %v2816, %v2815
    %v2900 = vpack.c.b16 %v2818, %v2817
    %v2901 = vpack.c.b16 %v2820, %v2819
    %v2902 = vpack.c.b16 %v2822, %v2821
    %v2903 = vpack.c.b16 %v2824, %v2823
    %v2904 = vpack.c.b16 %v2826, %v2825
    %v2905 = vpack.c.b16 %v2828, %v2827
    %v2906 = vpack.c.b16 %v2830, %v2829
    %v2907 = vpack.c.b16 %v2832, %v2831
    %v2908 = vpack.c.b16 %v2834, %v2833
    %v2909 = vpack.c.b16 %v2836, %v2835
    %v2910 = vpack.c.b16 %v2838, %v2837
    %2983 = vmatprep.subr.bf16.mxu0 0
    %2984 = vmatpush1.bf16.msra.mxu0 %v2846
    %2985 = vmatprep.subr.bf16.mxu0 0
    %2986 = vmatpush1.bf16.msra.mxu0 %v2845
    %2987 = vmatprep.subr.bf16.mxu0 0
    %2988 = vmatpush1.bf16.msra.mxu0 %v2844
    %2989 = vmatprep.subr.bf16.mxu0 0
    %2990 = vmatpush1.bf16.msra.mxu0 %v2843
    %2991 = vmatprep.subr.bf16.mxu0 0
    %2992 = vmatpush1.bf16.msra.mxu0 %v2842
    %2993 = vmatprep.subr.bf16.mxu0 0
    %2994 = vmatpush1.bf16.msra.mxu0 %v2841
    %2995 = vmatprep.subr.bf16.mxu0 0
    %2996 = vmatpush1.bf16.msra.mxu0 %v2840
    %2997 = vmatprep.subr.bf16.mxu0 0
    %2998 = vmatpush1.bf16.msra.mxu0 %v2839
    %2999 = vmatprep.subr.bf16.mxu0 0
    %3000 = vmatpush2.bf16.msra.mxu0 %v2854
    %3001 = vmatprep.subr.bf16.mxu0 0
    %3002 = vmatpush2.bf16.msra.mxu0 %v2853
    %3003 = vmatprep.subr.bf16.mxu0 0
    %3004 = vmatpush2.bf16.msra.mxu0 %v2852
    %3005 = vmatprep.subr.bf16.mxu0 0
    %3006 = vmatpush2.bf16.msra.mxu0 %v2851
    %3007 = vmatprep.subr.bf16.mxu0 0
    %3008 = vmatpush2.bf16.msra.mxu0 %v2850
    %3009 = vmatprep.subr.bf16.mxu0 0
    %3010 = vmatpush2.bf16.msra.mxu0 %v2849
    %3011 = vmatprep.subr.bf16.mxu0 0
    %3012 = vmatpush2.bf16.msra.mxu0 %v2848
    %3013 = vmatprep.subr.bf16.mxu0 0
    %3014 = vmatpush2.bf16.msra.mxu0 %v2847
    %3015 = vmatprep.mubr.bf16.mxu0 %v2336
    %3016 = vmatmul.mubr.bf16.gmra.mxu0 %v2335
    %v3017 = vpop.f32.mrf.mxu0
    %v3018 = vadd.f32 0.0, %v3017
    %v3019 = vpop.f32.mrf.mxu0
    %v3020 = vpop.f32.mrf.mxu0
    %v3021 = vadd.f32 0.0, %v3020
    %v3022 = vpop.f32.mrf.mxu0
    %3023 = vmatprep.mubr.bf16.mxu0 %v2345
    %3024 = vmatmul.mubr.bf16.gmra.mxu0 %v2344
    %v3025 = vpop.f32.mrf.mxu0
    %v3026 = vadd.f32 0.0, %v3025
    %v3027 = vpop.f32.mrf.mxu0
    %v3028 = vpop.f32.mrf.mxu0
    %v3029 = vadd.f32 0.0, %v3028
    %v3030 = vpop.f32.mrf.mxu0
    %3031 = vmatprep.mubr.bf16.mxu0 %v2354
    %3032 = vmatmul.mubr.bf16.gmra.mxu0 %v2353
    %v3033 = vpop.f32.mrf.mxu0
    %v3034 = vadd.f32 0.0, %v3033
    %v3035 = vpop.f32.mrf.mxu0
    %v3036 = vpop.f32.mrf.mxu0
    %v3037 = vadd.f32 0.0, %v3036
    %v3038 = vpop.f32.mrf.mxu0
    %3039 = vmatprep.mubr.bf16.mxu0 %v2363
    %3040 = vmatmul.mubr.bf16.gmra.mxu0 %v2362
    %v3041 = vpop.f32.mrf.mxu0
    %v3042 = vadd.f32 0.0, %v3041
    %v3043 = vpop.f32.mrf.mxu0
    %v3044 = vpop.f32.mrf.mxu0
    %v3045 = vadd.f32 0.0, %v3044
    %v3046 = vpop.f32.mrf.mxu0
    %3047 = vmatprep.mubr.bf16.mxu0 %v2372
    %3048 = vmatmul.mubr.bf16.gmra.mxu0 %v2371
    %v3049 = vpop.f32.mrf.mxu0
    %v3050 = vadd.f32 0.0, %v3049
    %v3051 = vpop.f32.mrf.mxu0
    %v3052 = vpop.f32.mrf.mxu0
    %v3053 = vadd.f32 0.0, %v3052
    %v3054 = vpop.f32.mrf.mxu0
    %3055 = vmatprep.mubr.bf16.mxu0 %v2381
    %3056 = vmatmul.mubr.bf16.gmra.mxu0 %v2380
    %v3057 = vpop.f32.mrf.mxu0
    %v3058 = vadd.f32 0.0, %v3057
    %v3059 = vpop.f32.mrf.mxu0
    %v3060 = vpop.f32.mrf.mxu0
    %v3061 = vadd.f32 0.0, %v3060
    %v3062 = vpop.f32.mrf.mxu0
    %3063 = vmatprep.mubr.bf16.mxu0 %v2390
    %3064 = vmatmul.mubr.bf16.gmra.mxu0 %v2389
    %v3065 = vpop.f32.mrf.mxu0
    %v3066 = vadd.f32 0.0, %v3065
    %v3067 = vpop.f32.mrf.mxu0
    %v3068 = vpop.f32.mrf.mxu0
    %v3069 = vadd.f32 0.0, %v3068
    %v3070 = vpop.f32.mrf.mxu0
    %3071 = vmatprep.mubr.bf16.mxu0 %v2399
    %3072 = vmatmul.mubr.bf16.gmra.mxu0 %v2398
    %v3073 = vpop.f32.mrf.mxu0
    %v3074 = vadd.f32 0.0, %v3073
    %v3075 = vpop.f32.mrf.mxu0
    %v3076 = vpop.f32.mrf.mxu0
    %v3077 = vadd.f32 0.0, %v3076
    %v3078 = vpop.f32.mrf.mxu0
    %3079 = vdwg.mxu0
    %3080 = vmatprep.subr.bf16.mxu0 0
    %3081 = vmatpush1.bf16.msra.mxu0 %v2862
    %3082 = vmatprep.subr.bf16.mxu0 0
    %3083 = vmatpush1.bf16.msra.mxu0 %v2861
    %3084 = vmatprep.subr.bf16.mxu0 0
    %3085 = vmatpush1.bf16.msra.mxu0 %v2860
    %3086 = vmatprep.subr.bf16.mxu0 0
    %3087 = vmatpush1.bf16.msra.mxu0 %v2859
    %3088 = vmatprep.subr.bf16.mxu0 0
    %3089 = vmatpush1.bf16.msra.mxu0 %v2858
    %3090 = vmatprep.subr.bf16.mxu0 0
    %3091 = vmatpush1.bf16.msra.mxu0 %v2857
    %3092 = vmatprep.subr.bf16.mxu0 0
    %3093 = vmatpush1.bf16.msra.mxu0 %v2856
    %3094 = vmatprep.subr.bf16.mxu0 0
    %3095 = vmatpush1.bf16.msra.mxu0 %v2855
    %3096 = vmatprep.subr.bf16.mxu0 0
    %3097 = vmatpush2.bf16.msra.mxu0 %v2870
    %3098 = vmatprep.subr.bf16.mxu0 0
    %3099 = vmatpush2.bf16.msra.mxu0 %v2869
    %3100 = vmatprep.subr.bf16.mxu0 0
    %3101 = vmatpush2.bf16.msra.mxu0 %v2868
    %3102 = vmatprep.subr.bf16.mxu0 0
    %3103 = vmatpush2.bf16.msra.mxu0 %v2867
    %3104 = vmatprep.subr.bf16.mxu0 0
    %3105 = vmatpush2.bf16.msra.mxu0 %v2866
    %3106 = vmatprep.subr.bf16.mxu0 0
    %3107 = vmatpush2.bf16.msra.mxu0 %v2865
    %3108 = vmatprep.subr.bf16.mxu0 0
    %3109 = vmatpush2.bf16.msra.mxu0 %v2864
    %3110 = vmatprep.subr.bf16.mxu0 0
    %3111 = vmatpush2.bf16.msra.mxu0 %v2863
    %3112 = vmatprep.mubr.bf16.mxu0 %v2338
    %3113 = vmatmul.mubr.bf16.gmra.mxu0 %v2337
    %v3114 = vpop.f32.mrf.mxu0
    %v3115 = vadd.f32 %v3018, %v3114
    %v3116 = vpop.f32.mrf.mxu0
    %v3117 = vpop.f32.mrf.mxu0
    %v3118 = vadd.f32 %v3021, %v3117
    %v3119 = vpop.f32.mrf.mxu0
    %3120 = vmatprep.mubr.bf16.mxu0 %v2347
    %3121 = vmatmul.mubr.bf16.gmra.mxu0 %v2346
    %v3122 = vpop.f32.mrf.mxu0
    %v3123 = vadd.f32 %v3026, %v3122
    %v3124 = vpop.f32.mrf.mxu0
    %v3125 = vpop.f32.mrf.mxu0
    %v3126 = vadd.f32 %v3029, %v3125
    %v3127 = vpop.f32.mrf.mxu0
    %3128 = vmatprep.mubr.bf16.mxu0 %v2356
    %3129 = vmatmul.mubr.bf16.gmra.mxu0 %v2355
    %v3130 = vpop.f32.mrf.mxu0
    %v3131 = vadd.f32 %v3034, %v3130
    %v3132 = vpop.f32.mrf.mxu0
    %v3133 = vpop.f32.mrf.mxu0
    %v3134 = vadd.f32 %v3037, %v3133
    %v3135 = vpop.f32.mrf.mxu0
    %3136 = vmatprep.mubr.bf16.mxu0 %v2365
    %3137 = vmatmul.mubr.bf16.gmra.mxu0 %v2364
    %v3138 = vpop.f32.mrf.mxu0
    %v3139 = vadd.f32 %v3042, %v3138
    %v3140 = vpop.f32.mrf.mxu0
    %v3141 = vpop.f32.mrf.mxu0
    %v3142 = vadd.f32 %v3045, %v3141
    %v3143 = vpop.f32.mrf.mxu0
    %3144 = vmatprep.mubr.bf16.mxu0 %v2374
    %3145 = vmatmul.mubr.bf16.gmra.mxu0 %v2373
    %v3146 = vpop.f32.mrf.mxu0
    %v3147 = vadd.f32 %v3050, %v3146
    %v3148 = vpop.f32.mrf.mxu0
    %v3149 = vpop.f32.mrf.mxu0
    %v3150 = vadd.f32 %v3053, %v3149
    %v3151 = vpop.f32.mrf.mxu0
    %3152 = vmatprep.mubr.bf16.mxu0 %v2383
    %3153 = vmatmul.mubr.bf16.gmra.mxu0 %v2382
    %v3154 = vpop.f32.mrf.mxu0
    %v3155 = vadd.f32 %v3058, %v3154
    %v3156 = vpop.f32.mrf.mxu0
    %v3157 = vpop.f32.mrf.mxu0
    %v3158 = vadd.f32 %v3061, %v3157
    %v3159 = vpop.f32.mrf.mxu0
    %3160 = vmatprep.mubr.bf16.mxu0 %v2392
    %3161 = vmatmul.mubr.bf16.gmra.mxu0 %v2391
    %v3162 = vpop.f32.mrf.mxu0
    %v3163 = vadd.f32 %v3066, %v3162
    %v3164 = vpop.f32.mrf.mxu0
    %v3165 = vpop.f32.mrf.mxu0
    %v3166 = vadd.f32 %v3069, %v3165
    %v3167 = vpop.f32.mrf.mxu0
    %3168 = vmatprep.mubr.bf16.mxu0 %v2401
    %3169 = vmatmul.mubr.bf16.gmra.mxu0 %v2400
    %v3170 = vpop.f32.mrf.mxu0
    %v3171 = vadd.f32 %v3074, %v3170
    %v3172 = vpop.f32.mrf.mxu0
    %v3173 = vpop.f32.mrf.mxu0
    %v3174 = vadd.f32 %v3077, %v3173
    %v3175 = vpop.f32.mrf.mxu0
    %3176 = vdwg.mxu0
    %3177 = vmatprep.subr.bf16.mxu0 0
    %3178 = vmatpush1.bf16.msra.mxu0 %v2878
    %3179 = vmatprep.subr.bf16.mxu0 0
    %3180 = vmatpush1.bf16.msra.mxu0 %v2877
    %3181 = vmatprep.subr.bf16.mxu0 0
    %3182 = vmatpush1.bf16.msra.mxu0 %v2876
    %3183 = vmatprep.subr.bf16.mxu0 0
    %3184 = vmatpush1.bf16.msra.mxu0 %v2875
    %3185 = vmatprep.subr.bf16.mxu0 0
    %3186 = vmatpush1.bf16.msra.mxu0 %v2874
    %3187 = vmatprep.subr.bf16.mxu0 0
    %3188 = vmatpush1.bf16.msra.mxu0 %v2873
    %3189 = vmatprep.subr.bf16.mxu0 0
    %3190 = vmatpush1.bf16.msra.mxu0 %v2872
    %3191 = vmatprep.subr.bf16.mxu0 0
    %3192 = vmatpush1.bf16.msra.mxu0 %v2871
    %3193 = vmatprep.subr.bf16.mxu0 0
    %3194 = vmatpush2.bf16.msra.mxu0 %v2886
    %3195 = vmatprep.subr.bf16.mxu0 0
    %3196 = vmatpush2.bf16.msra.mxu0 %v2885
    %3197 = vmatprep.subr.bf16.mxu0 0
    %3198 = vmatpush2.bf16.msra.mxu0 %v2884
    %3199 = vmatprep.subr.bf16.mxu0 0
    %3200 = vmatpush2.bf16.msra.mxu0 %v2883
    %3201 = vmatprep.subr.bf16.mxu0 0
    %3202 = vmatpush2.bf16.msra.mxu0 %v2882
    %3203 = vmatprep.subr.bf16.mxu0 0
    %3204 = vmatpush2.bf16.msra.mxu0 %v2881
    %3205 = vmatprep.subr.bf16.mxu0 0
    %3206 = vmatpush2.bf16.msra.mxu0 %v2880
    %3207 = vmatprep.subr.bf16.mxu0 0
    %3208 = vmatpush2.bf16.msra.mxu0 %v2879
    %3209 = vmatprep.mubr.bf16.mxu0 %v2340
    %3210 = vmatmul.mubr.bf16.gmra.mxu0 %v2339
    %v3211 = vpop.f32.mrf.mxu0
    %v3212 = vadd.f32 %v3115, %v3211
    %v3213 = vpop.f32.mrf.mxu0
    %v3214 = vpop.f32.mrf.mxu0
    %v3215 = vadd.f32 %v3118, %v3214
    %v3216 = vpop.f32.mrf.mxu0
    %3217 = vmatprep.mubr.bf16.mxu0 %v2349
    %3218 = vmatmul.mubr.bf16.gmra.mxu0 %v2348
    %v3219 = vpop.f32.mrf.mxu0
    %v3220 = vadd.f32 %v3123, %v3219
    %v3221 = vpop.f32.mrf.mxu0
    %v3222 = vpop.f32.mrf.mxu0
    %v3223 = vadd.f32 %v3126, %v3222
    %v3224 = vpop.f32.mrf.mxu0
    %3225 = vmatprep.mubr.bf16.mxu0 %v2358
    %3226 = vmatmul.mubr.bf16.gmra.mxu0 %v2357
    %v3227 = vpop.f32.mrf.mxu0
    %v3228 = vadd.f32 %v3131, %v3227
    %v3229 = vpop.f32.mrf.mxu0
    %v3230 = vpop.f32.mrf.mxu0
    %v3231 = vadd.f32 %v3134, %v3230
    %v3232 = vpop.f32.mrf.mxu0
    %3233 = vmatprep.mubr.bf16.mxu0 %v2367
    %3234 = vmatmul.mubr.bf16.gmra.mxu0 %v2366
    %v3235 = vpop.f32.mrf.mxu0
    %v3236 = vadd.f32 %v3139, %v3235
    %v3237 = vpop.f32.mrf.mxu0
    %v3238 = vpop.f32.mrf.mxu0
    %v3239 = vadd.f32 %v3142, %v3238
    %v3240 = vpop.f32.mrf.mxu0
    %3241 = vmatprep.mubr.bf16.mxu0 %v2376
    %3242 = vmatmul.mubr.bf16.gmra.mxu0 %v2375
    %v3243 = vpop.f32.mrf.mxu0
    %v3244 = vadd.f32 %v3147, %v3243
    %v3245 = vpop.f32.mrf.mxu0
    %v3246 = vpop.f32.mrf.mxu0
    %v3247 = vadd.f32 %v3150, %v3246
    %v3248 = vpop.f32.mrf.mxu0
    %3249 = vmatprep.mubr.bf16.mxu0 %v2385
    %3250 = vmatmul.mubr.bf16.gmra.mxu0 %v2384
    %v3251 = vpop.f32.mrf.mxu0
    %v3252 = vadd.f32 %v3155, %v3251
    %v3253 = vpop.f32.mrf.mxu0
    %v3254 = vpop.f32.mrf.mxu0
    %v3255 = vadd.f32 %v3158, %v3254
    %v3256 = vpop.f32.mrf.mxu0
    %3257 = vmatprep.mubr.bf16.mxu0 %v2394
    %3258 = vmatmul.mubr.bf16.gmra.mxu0 %v2393
    %v3259 = vpop.f32.mrf.mxu0
    %v3260 = vadd.f32 %v3163, %v3259
    %v3261 = vpop.f32.mrf.mxu0
    %v3262 = vpop.f32.mrf.mxu0
    %v3263 = vadd.f32 %v3166, %v3262
    %v3264 = vpop.f32.mrf.mxu0
    %3265 = vmatprep.mubr.bf16.mxu0 %v2403
    %3266 = vmatmul.mubr.bf16.gmra.mxu0 %v2402
    %v3267 = vpop.f32.mrf.mxu0
    %v3268 = vadd.f32 %v3171, %v3267
    %v3269 = vpop.f32.mrf.mxu0
    %v3270 = vpop.f32.mrf.mxu0
    %v3271 = vadd.f32 %v3174, %v3270
    %v3272 = vpop.f32.mrf.mxu0
    %3273 = vdwg.mxu0
    %3274 = vmatprep.subr.bf16.mxu0 0
    %3275 = vmatpush1.bf16.msra.mxu0 %v2894
    %3276 = vmatprep.subr.bf16.mxu0 0
    %3277 = vmatpush1.bf16.msra.mxu0 %v2893
    %3278 = vmatprep.subr.bf16.mxu0 0
    %3279 = vmatpush1.bf16.msra.mxu0 %v2892
    %3280 = vmatprep.subr.bf16.mxu0 0
    %3281 = vmatpush1.bf16.msra.mxu0 %v2891
    %3282 = vmatprep.subr.bf16.mxu0 0
    %3283 = vmatpush1.bf16.msra.mxu0 %v2890
    %3284 = vmatprep.subr.bf16.mxu0 0
    %3285 = vmatpush1.bf16.msra.mxu0 %v2889
    %3286 = vmatprep.subr.bf16.mxu0 0
    %3287 = vmatpush1.bf16.msra.mxu0 %v2888
    %3288 = vmatprep.subr.bf16.mxu0 0
    %3289 = vmatpush1.bf16.msra.mxu0 %v2887
    %3290 = vmatprep.subr.bf16.mxu0 0
    %3291 = vmatpush2.bf16.msra.mxu0 %v2902
    %3292 = vmatprep.subr.bf16.mxu0 0
    %3293 = vmatpush2.bf16.msra.mxu0 %v2901
    %3294 = vmatprep.subr.bf16.mxu0 0
    %3295 = vmatpush2.bf16.msra.mxu0 %v2900
    %3296 = vmatprep.subr.bf16.mxu0 0
    %3297 = vmatpush2.bf16.msra.mxu0 %v2899
    %3298 = vmatprep.subr.bf16.mxu0 0
    %3299 = vmatpush2.bf16.msra.mxu0 %v2898
    %3300 = vmatprep.subr.bf16.mxu0 0
    %3301 = vmatpush2.bf16.msra.mxu0 %v2897
    %3302 = vmatprep.subr.bf16.mxu0 0
    %3303 = vmatpush2.bf16.msra.mxu0 %v2896
    %3304 = vmatprep.subr.bf16.mxu0 0
    %3305 = vmatpush2.bf16.msra.mxu0 %v2895
    %3306 = vmatprep.mubr.bf16.mxu0 %v2342
    %3307 = vmatmul.mubr.bf16.gmra.mxu0 %v2341
    %v3308 = vpop.f32.mrf.mxu0
    %v3309 = vadd.f32 %v3212, %v3308
    %v3310 = vpop.f32.mrf.mxu0
    %v3311 = vpop.f32.mrf.mxu0
    %v3312 = vadd.f32 %v3215, %v3311
    %v3313 = vpop.f32.mrf.mxu0
    %3314 = vmatprep.mubr.bf16.mxu0 %v2351
    %3315 = vmatmul.mubr.bf16.gmra.mxu0 %v2350
    %v3316 = vpop.f32.mrf.mxu0
    %v3317 = vadd.f32 %v3220, %v3316
    %v3318 = vpop.f32.mrf.mxu0
    %v3319 = vpop.f32.mrf.mxu0
    %v3320 = vadd.f32 %v3223, %v3319
    %v3321 = vpop.f32.mrf.mxu0
    %3322 = vmatprep.mubr.bf16.mxu0 %v2360
    %3323 = vmatmul.mubr.bf16.gmra.mxu0 %v2359
    %v3324 = vpop.f32.mrf.mxu0
    %v3325 = vadd.f32 %v3228, %v3324
    %v3326 = vpop.f32.mrf.mxu0
    %v3327 = vpop.f32.mrf.mxu0
    %v3328 = vadd.f32 %v3231, %v3327
    %v3329 = vpop.f32.mrf.mxu0
    %3330 = vmatprep.mubr.bf16.mxu0 %v2369
    %3331 = vmatmul.mubr.bf16.gmra.mxu0 %v2368
    %v3332 = vpop.f32.mrf.mxu0
    %v3333 = vadd.f32 %v3236, %v3332
    %v3334 = vpop.f32.mrf.mxu0
    %v3335 = vpop.f32.mrf.mxu0
    %v3336 = vadd.f32 %v3239, %v3335
    %v3337 = vpop.f32.mrf.mxu0
    %3338 = vmatprep.mubr.bf16.mxu0 %v2378
    %3339 = vmatmul.mubr.bf16.gmra.mxu0 %v2377
    %v3340 = vpop.f32.mrf.mxu0
    %v3341 = vadd.f32 %v3244, %v3340
    %v3342 = vpop.f32.mrf.mxu0
    %v3343 = vpop.f32.mrf.mxu0
    %v3344 = vadd.f32 %v3247, %v3343
    %v3345 = vpop.f32.mrf.mxu0
    %3346 = vmatprep.mubr.bf16.mxu0 %v2387
    %3347 = vmatmul.mubr.bf16.gmra.mxu0 %v2386
    %v3348 = vpop.f32.mrf.mxu0
    %v3349 = vadd.f32 %v3252, %v3348
    %v3350 = vpop.f32.mrf.mxu0
    %v3351 = vpop.f32.mrf.mxu0
    %v3352 = vadd.f32 %v3255, %v3351
    %v3353 = vpop.f32.mrf.mxu0
    %3354 = vmatprep.mubr.bf16.mxu0 %v2396
    %3355 = vmatmul.mubr.bf16.gmra.mxu0 %v2395
    %v3356 = vpop.f32.mrf.mxu0
    %v3357 = vadd.f32 %v3260, %v3356
    %v3358 = vpop.f32.mrf.mxu0
    %v3359 = vpop.f32.mrf.mxu0
    %v3360 = vadd.f32 %v3263, %v3359
    %v3361 = vpop.f32.mrf.mxu0
    %3362 = vmatprep.mubr.bf16.mxu0 %v2405
    %3363 = vmatmul.mubr.bf16.gmra.mxu0 %v2404
    %v3364 = vpop.f32.mrf.mxu0
    %v3365 = vadd.f32 %v3268, %v3364
    %v3366 = vpop.f32.mrf.mxu0
    %v3367 = vpop.f32.mrf.mxu0
    %v3368 = vadd.f32 %v3271, %v3367
    %v3369 = vpop.f32.mrf.mxu0
    %3370 = vdwg.mxu0
    %3371 = vmatprep.subr.bf16.mxu0 0
    %3372 = vmatpush1.bf16.msra.mxu0 %v2910
    %3373 = vmatprep.subr.bf16.mxu0 0
    %3374 = vmatpush1.bf16.msra.mxu0 %v2909
    %3375 = vmatprep.subr.bf16.mxu0 0
    %3376 = vmatpush1.bf16.msra.mxu0 %v2908
    %3377 = vmatprep.subr.bf16.mxu0 0
    %3378 = vmatpush1.bf16.msra.mxu0 %v2907
    %3379 = vmatprep.subr.bf16.mxu0 0
    %3380 = vmatpush1.bf16.msra.mxu0 %v2906
    %3381 = vmatprep.subr.bf16.mxu0 0
    %3382 = vmatpush1.bf16.msra.mxu0 %v2905
    %3383 = vmatprep.subr.bf16.mxu0 0
    %3384 = vmatpush1.bf16.msra.mxu0 %v2904
    %3385 = vmatprep.subr.bf16.mxu0 0
    %3386 = vmatpush1.bf16.msra.mxu0 %v2903
    %3387 = vmatprep.subr.bf16.mxu0 0
    %3388 = vmatpush2.bf16.msra.mxu0 0
    %3389 = vmatprep.subr.bf16.mxu0 0
    %3390 = vmatpush2.bf16.msra.mxu0 0
    %3391 = vmatprep.subr.bf16.mxu0 0
    %3392 = vmatpush2.bf16.msra.mxu0 0
    %3393 = vmatprep.subr.bf16.mxu0 0
    %3394 = vmatpush2.bf16.msra.mxu0 0
    %3395 = vmatprep.subr.bf16.mxu0 0
    %3396 = vmatpush2.bf16.msra.mxu0 0
    %3397 = vmatprep.subr.bf16.mxu0 0
    %3398 = vmatpush2.bf16.msra.mxu0 0
    %3399 = vmatprep.subr.bf16.mxu0 0
    %3400 = vmatpush2.bf16.msra.mxu0 0
    %3401 = vmatprep.subr.bf16.mxu0 0
    %3402 = vmatpush2.bf16.msra.mxu0 0
    %3403 = vmatprep.mubr.bf16.mxu0 0
    %3404 = vmatmul.mubr.bf16.gmra.mxu0 %v2343
    %v3405 = vpop.f32.mrf.mxu0
    %v3406 = vadd.f32 %v3309, %v3405
    %v3407 = vpop.f32.mrf.mxu0
    %v3408 = vpop.f32.mrf.mxu0
    %v3409 = vadd.f32 %v3312, %v3408
    %v3410 = vpop.f32.mrf.mxu0
    %3411 = vmatprep.mubr.bf16.mxu0 0
    %3412 = vmatmul.mubr.bf16.gmra.mxu0 %v2352
    %v3413 = vpop.f32.mrf.mxu0
    %v3414 = vadd.f32 %v3317, %v3413
    %v3415 = vpop.f32.mrf.mxu0
    %v3416 = vpop.f32.mrf.mxu0
    %v3417 = vadd.f32 %v3320, %v3416
    %v3418 = vpop.f32.mrf.mxu0
    %3419 = vmatprep.mubr.bf16.mxu0 0
    %3420 = vmatmul.mubr.bf16.gmra.mxu0 %v2361
    %v3421 = vpop.f32.mrf.mxu0
    %v3422 = vadd.f32 %v3325, %v3421
    %v3423 = vpop.f32.mrf.mxu0
    %v3424 = vpop.f32.mrf.mxu0
    %v3425 = vadd.f32 %v3328, %v3424
    %v3426 = vpop.f32.mrf.mxu0
    %3427 = vmatprep.mubr.bf16.mxu0 0
    %3428 = vmatmul.mubr.bf16.gmra.mxu0 %v2370
    %v3429 = vpop.f32.mrf.mxu0
    %v3430 = vadd.f32 %v3333, %v3429
    %v3431 = vpop.f32.mrf.mxu0
    %v3432 = vpop.f32.mrf.mxu0
    %v3433 = vadd.f32 %v3336, %v3432
    %v3434 = vpop.f32.mrf.mxu0
    %3435 = vmatprep.mubr.bf16.mxu0 0
    %3436 = vmatmul.mubr.bf16.gmra.mxu0 %v2379
    %v3437 = vpop.f32.mrf.mxu0
    %v3438 = vadd.f32 %v3341, %v3437
    %v3439 = vpop.f32.mrf.mxu0
    %v3440 = vpop.f32.mrf.mxu0
    %v3441 = vadd.f32 %v3344, %v3440
    %v3442 = vpop.f32.mrf.mxu0
    %3443 = vmatprep.mubr.bf16.mxu0 0
    %3444 = vmatmul.mubr.bf16.gmra.mxu0 %v2388
    %v3445 = vpop.f32.mrf.mxu0
    %v3446 = vadd.f32 %v3349, %v3445
    %v3447 = vpop.f32.mrf.mxu0
    %v3448 = vpop.f32.mrf.mxu0
    %v3449 = vadd.f32 %v3352, %v3448
    %v3450 = vpop.f32.mrf.mxu0
    %3451 = vmatprep.mubr.bf16.mxu0 0
    %3452 = vmatmul.mubr.bf16.gmra.mxu0 %v2397
    %v3453 = vpop.f32.mrf.mxu0
    %v3454 = vadd.f32 %v3357, %v3453
    %v3455 = vpop.f32.mrf.mxu0
    %v3456 = vpop.f32.mrf.mxu0
    %v3457 = vadd.f32 %v3360, %v3456
    %v3458 = vpop.f32.mrf.mxu0
    %3459 = vmatprep.mubr.bf16.mxu0 0
    %3460 = vmatmul.mubr.bf16.gmra.mxu0 %v2406
    %v3461 = vpop.f32.mrf.mxu0
    %v3462 = vadd.f32 %v3365, %v3461
    %v3463 = vpop.f32.mrf.mxu0
    %v3464 = vpop.f32.mrf.mxu0
    %v3465 = vadd.f32 %v3368, %v3464
    %v3466 = vpop.f32.mrf.mxu0
    %3467 = vdwg.mxu0
    %v3468 = vld [vmem:[%s5] sm:$0x1]
    %v3469 = vld [vmem:[%s6] sm:$0x1]
    %v3470 = vadd.f32 %v3406, %v3409
    %v3471 = vadd.f32 %v3470, %v3414
    %v3472 = vadd.f32 %v3471, %v3417
    %v3473 = vadd.f32 %v3472, %v3422
    %v3474 = vadd.f32 %v3473, %v3425
    %v3475 = vadd.f32 %v3474, %v3430
    %v3476 = vadd.f32 %v3475, %v3433
    %v3477 = vadd.f32 %v3476, %v3438
    %v3478 = vadd.f32 %v3477, %v3441
    %v3479 = vadd.f32 %v3478, %v3446
    %v3480 = vadd.f32 %v3479, %v3449
    %v3481 = vadd.f32 %v3480, %v3454
    %v3482 = vadd.f32 %v3481, %v3457
    %v3483 = vadd.f32 %v3482, %v3462
    %v3484 = vadd.f32 %v3483, %v3465
    %v3485 = vrot.slane %v3484, 4
    %v3486 = vadd.f32 %v3484, %v3485
    %v3487 = vrot.slane %v3486, 2
    %v3488 = vadd.f32 %v3486, %v3487
    %v3489 = vrot.slane %v3488, 1
    %v3490 = vadd.f32 %v3488, %v3489
    %v3491 = vmul.f32 %v3406, %v3406
    %v3492 = vmul.f32 %v3409, %v3409
    %v3493 = vmul.f32 %v3414, %v3414
    %v3494 = vmul.f32 %v3417, %v3417
    %v3495 = vmul.f32 %v3422, %v3422
    %v3496 = vmul.f32 %v3425, %v3425
    %v3497 = vmul.f32 %v3430, %v3430
    %v3498 = vmul.f32 %v3433, %v3433
    %v3499 = vmul.f32 %v3438, %v3438
    %v3500 = vmul.f32 %v3441, %v3441
    %v3501 = vmul.f32 %v3446, %v3446
    %v3502 = vmul.f32 %v3449, %v3449
    %v3503 = vmul.f32 %v3454, %v3454
    %v3504 = vmul.f32 %v3457, %v3457
    %v3505 = vmul.f32 %v3462, %v3462
    %v3506 = vmul.f32 %v3465, %v3465
    %v3507 = vadd.f32 %v3491, %v3492
    %v3508 = vadd.f32 %v3507, %v3493
    %v3509 = vadd.f32 %v3508, %v3494
    %v3510 = vadd.f32 %v3509, %v3495
    %v3511 = vadd.f32 %v3510, %v3496
    %v3512 = vadd.f32 %v3511, %v3497
    %v3513 = vadd.f32 %v3512, %v3498
    %v3514 = vadd.f32 %v3513, %v3499
    %v3515 = vadd.f32 %v3514, %v3500
    %v3516 = vadd.f32 %v3515, %v3501
    %v3517 = vadd.f32 %v3516, %v3502
    %v3518 = vadd.f32 %v3517, %v3503
    %v3519 = vadd.f32 %v3518, %v3504
    %v3520 = vadd.f32 %v3519, %v3505
    %v3521 = vadd.f32 %v3520, %v3506
    %v3522 = vrot.slane %v3521, 4
    %v3523 = vadd.f32 %v3521, %v3522
    %v3524 = vrot.slane %v3523, 2
    %v3525 = vadd.f32 %v3523, %v3524
    %v3526 = vrot.slane %v3525, 1
    %v3527 = vadd.f32 %v3525, %v3526
    %v3528 = vmul.f32 %v3490, 0.0078125
    %v3529 = vmul.f32 %v3527, 0.0078125
    %v3530 = vmul.f32 %v3528, %v3528
    %v3531 = vsub.f32 %v3529, %v3530
    %v3532 = vadd.f32 %v3531, 1e-05
    %v3533 = vrsqrt.pop %v3532
    %v3534 = vmul.f32 %v3468, %v3533
    %v3535 = vmul.f32 %v3528, %v3534
    %v3536 = vsub.f32 %v3469, %v3535
    %v3538 = vlaneseq
    %v3539 = vshrl.u32 %v3538, 7
    %v3540 = vsub.s32 0, %v3539
    %v3541 = vrot.slane %v3534, %v3540
    %v3543 = vmul.f32 %v3406, %v3541
    %v3544 = vmul.f32 %v3409, %v3541
    %v3545 = vmul.f32 %v3414, %v3541
    %v3546 = vmul.f32 %v3417, %v3541
    %v3547 = vmul.f32 %v3422, %v3541
    %v3548 = vmul.f32 %v3425, %v3541
    %v3549 = vmul.f32 %v3430, %v3541
    %v3550 = vmul.f32 %v3433, %v3541
    %v3551 = vmul.f32 %v3438, %v3541
    %v3552 = vmul.f32 %v3441, %v3541
    %v3553 = vmul.f32 %v3446, %v3541
    %v3554 = vmul.f32 %v3449, %v3541
    %v3555 = vmul.f32 %v3454, %v3541
    %v3556 = vmul.f32 %v3457, %v3541
    %v3557 = vmul.f32 %v3462, %v3541
    %v3558 = vmul.f32 %v3465, %v3541
    %v3560 = vlaneseq
    %v3561 = vshrl.u32 %v3560, 7
    %v3562 = vsub.s32 0, %v3561
    %v3563 = vrot.slane %v3536, %v3562
    %v3565 = vadd.f32 %v3543, %v3563
    %v3566 = vadd.f32 %v3544, %v3563
    %v3567 = vadd.f32 %v3545, %v3563
    %v3568 = vadd.f32 %v3546, %v3563
    %v3569 = vadd.f32 %v3547, %v3563
    %v3570 = vadd.f32 %v3548, %v3563
    %v3571 = vadd.f32 %v3549, %v3563
    %v3572 = vadd.f32 %v3550, %v3563
    %v3573 = vadd.f32 %v3551, %v3563
    %v3574 = vadd.f32 %v3552, %v3563
    %v3575 = vadd.f32 %v3553, %v3563
    %v3576 = vadd.f32 %v3554, %v3563
    %v3577 = vadd.f32 %v3555, %v3563
    %v3578 = vadd.f32 %v3556, %v3563
    %v3579 = vadd.f32 %v3557, %v3563
    %v3580 = vadd.f32 %v3558, %v3563
    %v3581 = vmax.f32 %v3565, 0.0
    %v3582 = vmax.f32 %v3566, 0.0
    %v3583 = vmax.f32 %v3567, 0.0
    %v3584 = vmax.f32 %v3568, 0.0
    %v3585 = vmax.f32 %v3569, 0.0
    %v3586 = vmax.f32 %v3570, 0.0
    %v3587 = vmax.f32 %v3571, 0.0
    %v3588 = vmax.f32 %v3572, 0.0
    %v3589 = vmax.f32 %v3573, 0.0
    %v3590 = vmax.f32 %v3574, 0.0
    %v3591 = vmax.f32 %v3575, 0.0
    %v3592 = vmax.f32 %v3576, 0.0
    %v3593 = vmax.f32 %v3577, 0.0
    %v3594 = vmax.f32 %v3578, 0.0
    %v3595 = vmax.f32 %v3579, 0.0
    %v3596 = vmax.f32 %v3580, 0.0
    %3597 = vst [vmem:[#allocation4] sm:$0xff] %v3581
    %3598 = vst [vmem:[#allocation4 + $0x8] sm:$0xff] %v3582
    %3599 = vst [vmem:[#allocation4 + $0x10] sm:$0xff] %v3583
    %3600 = vst [vmem:[#allocation4 + $0x18] sm:$0xff] %v3584
    %3601 = vst [vmem:[#allocation4 + $0x20] sm:$0xff] %v3585
    %3602 = vst [vmem:[#allocation4 + $0x28] sm:$0xff] %v3586
    %3603 = vst [vmem:[#allocation4 + $0x30] sm:$0xff] %v3587
    %3604 = vst [vmem:[#allocation4 + $0x38] sm:$0xff] %v3588
    %3605 = vst [vmem:[#allocation4 + $0x40] sm:$0xff] %v3589
    %3606 = vst [vmem:[#allocation4 + $0x48] sm:$0xff] %v3590
    %3607 = vst [vmem:[#allocation4 + $0x50] sm:$0xff] %v3591
    %3608 = vst [vmem:[#allocation4 + $0x58] sm:$0xff] %v3592
    %3609 = vst [vmem:[#allocation4 + $0x60] sm:$0xff] %v3593
    %3610 = vst [vmem:[#allocation4 + $0x68] sm:$0xff] %v3594
    %3611 = vst [vmem:[#allocation4 + $0x70] sm:$0xff] %v3595
    %3612 = vst [vmem:[#allocation4 + $0x78] sm:$0xff] %v3596
    // Predicated region
    $region30: #{down_forward.1} parent=1 // pred_check
      _
    $region31: #{down_forward.1} parent=1 // pred_check_branch
      %3614 = sbr.rel (0) target = $region33
    $region32: #{down_forward.1} parent=1 // pred_region
      %s3616 = ssub.s32 2048, 2048
      %3617 = vsyncadd [#allocation5], %s3616
      %s3618 = sshll.u32 [#allocation4], 4
      %s3619 = int_to_ptr.vmem [resolvable:$true] %s3618
      %3624 = dma.vmem_to_hbm [thread:$0]  %s3619, 2048, %s7, [#allocation5], 128, 128, 8
    $region33: #{down_forward.1} parent=1 // pred_fallthru
      _
    // Predicated region
    $region34: #{down_forward.1} parent=1 // pred_check
      _
    $region35: #{down_forward.1} parent=1 // pred_check_branch
      %3626 = sbr.rel (0) target = $region37
    $region36: #{down_forward.1} parent=1 // pred_region
      %3627 = dma.done [#allocation5], 2048
    $region37: #{down_forward.1} parent=1 // pred_fallthru
      _
    %3628 = vsyncpa [#allocation5], 1

</llo_original>
